<compile_context>
chip_gen: v5e
topology: v5e:2x2
jax: 0.10.0
libtpu: 0.0.40
codegen_flags: <defaults>
</compile_context>

<pallas_src>
import jax
import jax.numpy as jnp
from jax import lax
from jax.experimental import pallas as pl
from jax.experimental.pallas import tpu as pltpu


# ---------------------------------------------------------------------------
# The fused kernel: Bt samples per grid step, batch on the sublane axis.
# ---------------------------------------------------------------------------

def _convnet_kernel(x_ref, t1_ref, b1_ref, s1e_ref, s1o_ref, w2_ref, b2_ref,
                    s2e_ref, s2o_ref, w1k_ref, b1f_ref, w2k_ref, b2f_ref,
                    w3k_ref, b3f_ref, o_ref):
    f32, bf16 = jnp.float32, jnp.bfloat16
    Bt = x_ref.shape[1]                                   # batch tile (multiple of 8)

    # ---- conv1 (1->6, 5x5, valid): ONE K=140 banded matmul ------------------
    # LHS[(oh,b), di*28+wi] = x[b, oh+di, wi]
    xb = x_ref[...].astype(bf16)                          # (28, Bt, 28), load+cast once
    lhs1 = jnp.concatenate([xb[di:di + 24] for di in range(5)], axis=-1)   # (24,Bt,140)
    lhs1 = lhs1.reshape(24 * Bt, 140)                     # layout no-op (Bt % 8 == 0)
    a1 = jnp.dot(lhs1, t1_ref[...], preferred_element_type=f32) + b1_ref[...]
    a1 = jnp.maximum(a1, 0.0).astype(bf16)                # (24*Bt, 144), ReLU

    # ---- pool1 (2x2 max): width via bf16 0/1-selection matmuls, height on VPU
    p1w = jnp.maximum(
        jnp.dot(a1, s1e_ref[...], preferred_element_type=f32),
        jnp.dot(a1, s1o_ref[...], preferred_element_type=f32))             # (24*Bt, 72)
    p1 = jnp.max(p1w.reshape(12, 2, Bt, 72), axis=1).astype(bf16)          # (12, Bt, 72)

    # ---- conv2 (6->16, 5x5, valid): ONE K=360 banded matmul -----------------
    lhs2 = jnp.concatenate([p1[di:di + 8] for di in range(5)], axis=-1)    # (8,Bt,360)
    lhs2 = lhs2.reshape(8 * Bt, 360)                      # layout no-op
    a2 = jnp.dot(lhs2, w2_ref[...], preferred_element_type=f32) + b2_ref[...]
    a2 = jnp.maximum(a2, 0.0).astype(bf16)                # (8*Bt, 128), ReLU

    # ---- pool2 (2x2 max) + flatten (lane-concat, no scratch, no M=1 matmuls)
    p2w = jnp.maximum(
        jnp.dot(a2, s2e_ref[...], preferred_element_type=f32),
        jnp.dot(a2, s2o_ref[...], preferred_element_type=f32))             # (8*Bt, 64)
    p2 = jnp.max(p2w.reshape(4, 2, Bt, 64), axis=1)       # (4, Bt, 64)
    feat = jnp.concatenate([p2[p] for p in range(4)], axis=-1).astype(bf16)  # (Bt, 256)

    # ---- fc1 -> ReLU -> fc2 -> ReLU -> fc3 (lane-padded to 128) -> softmax --
    h1 = jnp.maximum(
        jnp.dot(feat, w1k_ref[...], preferred_element_type=f32) + b1f_ref[...], 0.0)
    h2 = jnp.maximum(
        jnp.dot(h1.astype(bf16), w2k_ref[...], preferred_element_type=f32)
        + b2f_ref[...], 0.0)
    logits = jnp.dot(h2.astype(bf16), w3k_ref[...],
                     preferred_element_type=f32) + b3f_ref[...]            # (Bt, 128)

    lane = lax.broadcasted_iota(jnp.int32, logits.shape, 1)
    masked = jnp.where(lane < 10, logits, -1e30)          # kill the padded lanes
    m = jnp.max(masked, axis=-1, keepdims=True)
    e = jnp.exp(masked - m)
    o_ref[...] = e / jnp.sum(e, axis=-1, keepdims=True)   # exact divide; pads -> 0


# ---------------------------------------------------------------------------
# One-time parameter preparation (banded / selection matrices, transposes).
# Torch layouts in, kernel layouts out.  Nothing here runs per forward.
# ---------------------------------------------------------------------------

def prepare_params(p):
    f32, bf16 = jnp.float32, jnp.bfloat16
    w1, b1 = p["conv1_w"].astype(f32), p["conv1_b"].astype(f32)
    w2, b2 = p["conv2_w"].astype(f32), p["conv2_b"].astype(f32)

    # conv1 banded weight (K-merged): T1[di*28+wi, oc*24+ow] = w1[oc,0,di,wi-ow]
    ow = jnp.arange(24)
    wi = jnp.arange(28)
    dj = wi[None, :] - ow[:, None]                        # (24, 28)
    valid = (dj >= 0) & (dj < 5)
    gath = w1[:, 0][:, :, jnp.clip(dj, 0, 4)]             # (oc, di, ow, wi)
    band = jnp.where(valid[None, None], gath, 0.0)
    T1 = band.transpose(1, 3, 0, 2).reshape(140, 144).astype(bf16)
    b1row = jnp.repeat(b1, 24).reshape(1, 144)

    # conv2 banded weight: W2[di*72+ic*12+wi, oc2*8+ow] = w2[oc2,ic,di,wi-ow]
    ow2 = jnp.arange(8)
    wi2 = jnp.arange(12)
    dj2 = wi2[None, :] - ow2[:, None]                     # (8, 12)
    valid2 = (dj2 >= 0) & (dj2 < 5)
    gath2 = w2[:, :, :, jnp.clip(dj2, 0, 4)]              # (oc2, ic, di, ow, wi)
    band2 = jnp.where(valid2[None, None, None], gath2, 0.0)
    W2 = band2.transpose(2, 1, 4, 0, 3).reshape(360, 128).astype(bf16)
    b2row = jnp.repeat(b2, 8).reshape(1, 128)

    # exact 0/1 width-pool selectors (0/1 are exact in bf16)
    def width_select(C, W):
        Wo = W // 2
        cols = jnp.arange(C * Wo)
        c, q = cols // Wo, cols % Wo
        z = jnp.zeros((C * W, C * Wo), f32)
        even = z.at[c * W + 2 * q, cols].set(1.0)
        odd = z.at[c * W + 2 * q + 1, cols].set(1.0)
        return even.astype(bf16), odd.astype(bf16)

    S1e, S1o = width_select(6, 24)                        # (144, 72) each
    S2e, S2o = width_select(16, 8)                        # (128, 64) each

    # fc weights: pre-transposed; fc1 rows permuted from torch (oc2, p, q)
    # flatten order to the kernel's (p, oc2, q) feature order.
    W1k = jnp.transpose(p["fc1_w"].reshape(120, 16, 4, 4),
                        (2, 1, 3, 0)).reshape(256, 120).astype(bf16)
    W2k = p["fc2_w"].T.astype(bf16)
    W3p = jnp.zeros((84, 128), f32).at[:, :10].set(p["fc3_w"].T).astype(bf16)
    b3p = jnp.zeros((1, 128), f32).at[:, :10].set(p["fc3_b"].reshape(1, 10))

    return dict(T1=T1, b1row=b1row, S1e=S1e, S1o=S1o, W2=W2, b2row=b2row,
                S2e=S2e, S2o=S2o,
                W1k=W1k, b1f=p["fc1_b"].reshape(1, 120).astype(f32),
                W2k=W2k, b2f=p["fc2_b"].reshape(1, 84).astype(f32),
                W3p=W3p, b3p=b3p)


# ---------------------------------------------------------------------------
# Forward pass: one fused pallas_call, grid over batch tiles ("parallel").
# ---------------------------------------------------------------------------

def convnet_forward(x, kp, block_batch=8):
    B = x.shape[0]
    Bt = block_batch
    Bp = ((B + Bt - 1) // Bt) * Bt                        # pad batch to a tile multiple
    x3 = x.reshape(B, 28, 28)
    if Bp != B:
        x3 = jnp.pad(x3, ((0, Bp - B), (0, 0), (0, 0)))
    xT = jnp.transpose(x3, (1, 0, 2))                     # (28, Bp, 28): batch -> sublanes

    consts = (kp["T1"], kp["b1row"], kp["S1e"], kp["S1o"], kp["W2"], kp["b2row"],
              kp["S2e"], kp["S2o"], kp["W1k"], kp["b1f"], kp["W2k"], kp["b2f"],
              kp["W3p"], kp["b3p"])

    def cspec(a):
        zeros = (0,) * a.ndim
        return pl.BlockSpec(a.shape, lambda i, _z=zeros: _z)

    out = pl.pallas_call(
        _convnet_kernel,
        out_shape=jax.ShapeDtypeStruct((Bp, 128), jnp.float32),   # lane-dense output
        grid=(Bp // Bt,),
        in_specs=[pl.BlockSpec((28, Bt, 28), lambda i: (0, i, 0))]
                 + [cspec(c) for c in consts],
        out_specs=pl.BlockSpec((Bt, 128), lambda i: (i, 0)),
        compiler_params=pltpu.CompilerParams(dimension_semantics=("parallel",)),
    )(xT, *consts)
    return out[:B, :10]


# ---------------------------------------------------------------------------
# Deterministic params (PyTorch default init) + pure-JAX reference.
# ---------------------------------------------------------------------------

def init_params(key):
    ks = jax.random.split(key, 10)

    def u(k, shape, fan_in):
        bound = 1.0 / (fan_in ** 0.5)
        return jax.random.uniform(k, shape, jnp.float32, -bound, bound)

    return {
        "conv1_w": u(ks[0], (6, 1, 5, 5), 1 * 5 * 5),
        "conv1_b": u(ks[1], (6,), 1 * 5 * 5),
        "conv2_w": u(ks[2], (16, 6, 5, 5), 6 * 5 * 5),
        "conv2_b": u(ks[3], (16,), 6 * 5 * 5),
        "fc1_w": u(ks[4], (120, 256), 256),
        "fc1_b": u(ks[5], (120,), 256),
        "fc2_w": u(ks[6], (84, 120), 120),
        "fc2_b": u(ks[7], (84,), 120),
        "fc3_w": u(ks[8], (10, 84), 84),
        "fc3_b": u(ks[9], (10,), 84),
    }


def reference_forward(x, p):
    def conv_relu(x, w, b):
        y = lax.conv_general_dilated(x, w, (1, 1), "VALID",
                                     dimension_numbers=("NCHW", "OIHW", "NCHW"))
        return jnp.maximum(y + b.reshape(1, -1, 1, 1), 0.0)

    def pool(x):
        B, C, H, W = x.shape
        return x.reshape(B, C, H // 2, 2, W // 2, 2).max(axis=(3, 5))

    y = pool(conv_relu(x, p["conv1_w"], p["conv1_b"]))
    y = pool(conv_relu(y, p["conv2_w"], p["conv2_b"]))
    f = y.reshape(y.shape[0], -1)
    h1 = jnp.maximum(f @ p["fc1_w"].T + p["fc1_b"], 0.0)
    h2 = jnp.maximum(h1 @ p["fc2_w"].T + p["fc2_b"], 0.0)
    logits = h2 @ p["fc3_w"].T + p["fc3_b"]
    return jax.nn.softmax(logits, axis=1)


if __name__ == "__main__":
    root = jax.random.PRNGKey(0)
    pkey, xkey = jax.random.split(root)
    params = init_params(pkey)
    kparams = prepare_params(params)     # one-time layout prep (not per forward)

    # B=16 with Bt=8 -> grid=(2,): both v7x TensorCores get a batch tile.
    x = jax.random.normal(xkey, (16, 1, 28, 28), jnp.float32)

    fwd = jax.jit(convnet_forward)
    out = jax.block_until_ready(fwd(x, kparams))
    ref = reference_forward(x, params)

    assert out.shape == (16, 10)
    # bf16 MXU operands => small numerical diffs vs the f32 reference.
    assert bool(jnp.allclose(out, ref, atol=2e-2)), (out, ref)
    print("KERNEL_OK")
</pallas_src>

<mosaic_0001>
module attributes {stable_mosaic.version = 11 : i64} {
  func.func @_convnet_kernel(%arg0: i32, %arg1: memref<28x8x28xf32, #tpu.memory_space<vmem>>, %arg2: memref<140x144xbf16, #tpu.memory_space<vmem>>, %arg3: memref<1x144xf32, #tpu.memory_space<vmem>>, %arg4: memref<144x72xbf16, #tpu.memory_space<vmem>>, %arg5: memref<144x72xbf16, #tpu.memory_space<vmem>>, %arg6: memref<360x128xbf16, #tpu.memory_space<vmem>>, %arg7: memref<1x128xf32, #tpu.memory_space<vmem>>, %arg8: memref<128x64xbf16, #tpu.memory_space<vmem>>, %arg9: memref<128x64xbf16, #tpu.memory_space<vmem>>, %arg10: memref<256x120xbf16, #tpu.memory_space<vmem>>, %arg11: memref<1x120xf32, #tpu.memory_space<vmem>>, %arg12: memref<120x84xbf16, #tpu.memory_space<vmem>>, %arg13: memref<1x84xf32, #tpu.memory_space<vmem>>, %arg14: memref<84x128xbf16, #tpu.memory_space<vmem>>, %arg15: memref<1x128xf32, #tpu.memory_space<vmem>>, %arg16: memref<8x128xf32, #tpu.memory_space<vmem>>) attributes {dimension_semantics = [#tpu.dimension_semantics<parallel>], iteration_bounds = array<i64: 2>, scalar_prefetch = 0 : i64, scratch_operands = 0 : i64, tpu.core_type = #tpu.core_type<tc>, window_params = [{transform_indices = @transform_0, window_bounds = array<i64: 28, 8, 28>}, {pipeline_mode = #tpu.pipeline_mode<synchronous>, transform_indices = @transform_1, window_bounds = array<i64: 140, 144>}, {pipeline_mode = #tpu.pipeline_mode<synchronous>, transform_indices = @transform_2, window_bounds = array<i64: 1, 144>}, {pipeline_mode = #tpu.pipeline_mode<synchronous>, transform_indices = @transform_3, window_bounds = array<i64: 144, 72>}, {pipeline_mode = #tpu.pipeline_mode<synchronous>, transform_indices = @transform_4, window_bounds = array<i64: 144, 72>}, {pipeline_mode = #tpu.pipeline_mode<synchronous>, transform_indices = @transform_5, window_bounds = array<i64: 360, 128>}, {pipeline_mode = #tpu.pipeline_mode<synchronous>, transform_indices = @transform_6, window_bounds = array<i64: 1, 128>}, {pipeline_mode = #tpu.pipeline_mode<synchronous>, transform_indices = @transform_7, window_bounds = array<i64: 128, 64>}, {pipeline_mode = #tpu.pipeline_mode<synchronous>, transform_indices = @transform_8, window_bounds = array<i64: 128, 64>}, {pipeline_mode = #tpu.pipeline_mode<synchronous>, transform_indices = @transform_9, window_bounds = array<i64: 256, 120>}, {pipeline_mode = #tpu.pipeline_mode<synchronous>, transform_indices = @transform_10, window_bounds = array<i64: 1, 120>}, {pipeline_mode = #tpu.pipeline_mode<synchronous>, transform_indices = @transform_11, window_bounds = array<i64: 120, 84>}, {pipeline_mode = #tpu.pipeline_mode<synchronous>, transform_indices = @transform_12, window_bounds = array<i64: 1, 84>}, {pipeline_mode = #tpu.pipeline_mode<synchronous>, transform_indices = @transform_13, window_bounds = array<i64: 84, 128>}, {pipeline_mode = #tpu.pipeline_mode<synchronous>, transform_indices = @transform_14, window_bounds = array<i64: 1, 128>}, {transform_indices = @transform_15, window_bounds = array<i64: 8, 128>}]} {
    %c0 = arith.constant 0 : index
    %c0_0 = arith.constant 0 : index
    %c0_1 = arith.constant 0 : index
    %0 = vector.load %arg1[%c0, %c0_0, %c0_1] : memref<28x8x28xf32, #tpu.memory_space<vmem>>, vector<28x8x28xf32>
    %1 = arith.truncf %0 : vector<28x8x28xf32> to vector<28x8x28xbf16>
    %2 = vector.extract_strided_slice %1 {offsets = [0, 0, 0], sizes = [24, 8, 28], strides = [1, 1, 1]} : vector<28x8x28xbf16> to vector<24x8x28xbf16>
    %3 = vector.extract_strided_slice %1 {offsets = [1, 0, 0], sizes = [24, 8, 28], strides = [1, 1, 1]} : vector<28x8x28xbf16> to vector<24x8x28xbf16>
    %4 = vector.extract_strided_slice %1 {offsets = [2, 0, 0], sizes = [24, 8, 28], strides = [1, 1, 1]} : vector<28x8x28xbf16> to vector<24x8x28xbf16>
    %5 = vector.extract_strided_slice %1 {offsets = [3, 0, 0], sizes = [24, 8, 28], strides = [1, 1, 1]} : vector<28x8x28xbf16> to vector<24x8x28xbf16>
    %6 = vector.extract_strided_slice %1 {offsets = [4, 0, 0], sizes = [24, 8, 28], strides = [1, 1, 1]} : vector<28x8x28xbf16> to vector<24x8x28xbf16>
    %7 = tpu.concatenate %2, %3, %4, %5, %6 in 2 : vector<24x8x28xbf16>, vector<24x8x28xbf16>, vector<24x8x28xbf16>, vector<24x8x28xbf16>, vector<24x8x28xbf16> -> vector<24x8x140xbf16>
    %8 = vector.shape_cast %7 : vector<24x8x140xbf16> to vector<192x140xbf16>
    %c0_2 = arith.constant 0 : index
    %c0_3 = arith.constant 0 : index
    %9 = vector.load %arg2[%c0_2, %c0_3] : memref<140x144xbf16, #tpu.memory_space<vmem>>, vector<140x144xbf16>
    %cst = arith.constant dense<0.000000e+00> : vector<192x144xf32>
    %10 = tpu.matmul %8, %9, %cst {dimension_numbers = #tpu.dot_dimension_numbers<[1], [0], [0], [1], [0, 0, 1, 1], [], []>} : vector<192x140xbf16>, vector<140x144xbf16>, vector<192x144xf32> -> vector<192x144xf32>
    %c0_4 = arith.constant 0 : index
    %c0_5 = arith.constant 0 : index
    %11 = vector.load %arg3[%c0_4, %c0_5] : memref<1x144xf32, #tpu.memory_space<vmem>>, vector<1x144xf32>
    %12 = vector.broadcast %11 : vector<1x144xf32> to vector<192x144xf32>
    %13 = arith.addf %10, %12 : vector<192x144xf32>
    %cst_6 = arith.constant 0.000000e+00 : f32
    %14 = vector.broadcast %cst_6 : f32 to vector<192x144xf32>
    %15 = arith.maximumf %13, %14 : vector<192x144xf32>
    %16 = arith.truncf %15 : vector<192x144xf32> to vector<192x144xbf16>
    %c0_7 = arith.constant 0 : index
    %c0_8 = arith.constant 0 : index
    %17 = vector.load %arg4[%c0_7, %c0_8] : memref<144x72xbf16, #tpu.memory_space<vmem>>, vector<144x72xbf16>
    %cst_9 = arith.constant dense<0.000000e+00> : vector<192x72xf32>
    %18 = tpu.matmul %16, %17, %cst_9 {dimension_numbers = #tpu.dot_dimension_numbers<[1], [0], [0], [1], [0, 0, 1, 1], [], []>} : vector<192x144xbf16>, vector<144x72xbf16>, vector<192x72xf32> -> vector<192x72xf32>
    %c0_10 = arith.constant 0 : index
    %c0_11 = arith.constant 0 : index
    %19 = vector.load %arg5[%c0_10, %c0_11] : memref<144x72xbf16, #tpu.memory_space<vmem>>, vector<144x72xbf16>
    %cst_12 = arith.constant dense<0.000000e+00> : vector<192x72xf32>
    %20 = tpu.matmul %16, %19, %cst_12 {dimension_numbers = #tpu.dot_dimension_numbers<[1], [0], [0], [1], [0, 0, 1, 1], [], []>} : vector<192x144xbf16>, vector<144x72xbf16>, vector<192x72xf32> -> vector<192x72xf32>
    %21 = arith.maximumf %18, %20 : vector<192x72xf32>
    %22 = vector.shape_cast %21 : vector<192x72xf32> to vector<12x2x8x72xf32>
    %cst_13 = arith.constant dense<0xFF800000> : vector<12x8x72xf32>
    %23 = vector.multi_reduction <maximumf>, %22, %cst_13 [1] : vector<12x2x8x72xf32> to vector<12x8x72xf32>
    %24 = arith.truncf %23 : vector<12x8x72xf32> to vector<12x8x72xbf16>
    %25 = vector.extract_strided_slice %24 {offsets = [0, 0, 0], sizes = [8, 8, 72], strides = [1, 1, 1]} : vector<12x8x72xbf16> to vector<8x8x72xbf16>
    %26 = vector.extract_strided_slice %24 {offsets = [1, 0, 0], sizes = [8, 8, 72], strides = [1, 1, 1]} : vector<12x8x72xbf16> to vector<8x8x72xbf16>
    %27 = vector.extract_strided_slice %24 {offsets = [2, 0, 0], sizes = [8, 8, 72], strides = [1, 1, 1]} : vector<12x8x72xbf16> to vector<8x8x72xbf16>
    %28 = vector.extract_strided_slice %24 {offsets = [3, 0, 0], sizes = [8, 8, 72], strides = [1, 1, 1]} : vector<12x8x72xbf16> to vector<8x8x72xbf16>
    %29 = vector.extract_strided_slice %24 {offsets = [4, 0, 0], sizes = [8, 8, 72], strides = [1, 1, 1]} : vector<12x8x72xbf16> to vector<8x8x72xbf16>
    %30 = tpu.concatenate %25, %26, %27, %28, %29 in 2 : vector<8x8x72xbf16>, vector<8x8x72xbf16>, vector<8x8x72xbf16>, vector<8x8x72xbf16>, vector<8x8x72xbf16> -> vector<8x8x360xbf16>
    %31 = vector.shape_cast %30 : vector<8x8x360xbf16> to vector<64x360xbf16>
    %c0_14 = arith.constant 0 : index
    %c0_15 = arith.constant 0 : index
    %32 = vector.load %arg6[%c0_14, %c0_15] : memref<360x128xbf16, #tpu.memory_space<vmem>>, vector<360x128xbf16>
    %cst_16 = arith.constant dense<0.000000e+00> : vector<64x128xf32>
    %33 = tpu.matmul %31, %32, %cst_16 {dimension_numbers = #tpu.dot_dimension_numbers<[1], [0], [0], [1], [0, 0, 1, 1], [], []>} : vector<64x360xbf16>, vector<360x128xbf16>, vector<64x128xf32> -> vector<64x128xf32>
    %c0_17 = arith.constant 0 : index
    %c0_18 = arith.constant 0 : index
    %34 = vector.load %arg7[%c0_17, %c0_18] : memref<1x128xf32, #tpu.memory_space<vmem>>, vector<1x128xf32>
    %35 = vector.broadcast %34 : vector<1x128xf32> to vector<64x128xf32>
    %36 = arith.addf %33, %35 : vector<64x128xf32>
    %cst_19 = arith.constant 0.000000e+00 : f32
    %37 = vector.broadcast %cst_19 : f32 to vector<64x128xf32>
    %38 = arith.maximumf %36, %37 : vector<64x128xf32>
    %39 = arith.truncf %38 : vector<64x128xf32> to vector<64x128xbf16>
    %c0_20 = arith.constant 0 : index
    %c0_21 = arith.constant 0 : index
    %40 = vector.load %arg8[%c0_20, %c0_21] : memref<128x64xbf16, #tpu.memory_space<vmem>>, vector<128x64xbf16>
    %cst_22 = arith.constant dense<0.000000e+00> : vector<64x64xf32>
    %41 = tpu.matmul %39, %40, %cst_22 {dimension_numbers = #tpu.dot_dimension_numbers<[1], [0], [0], [1], [0, 0, 1, 1], [], []>} : vector<64x128xbf16>, vector<128x64xbf16>, vector<64x64xf32> -> vector<64x64xf32>
    %c0_23 = arith.constant 0 : index
    %c0_24 = arith.constant 0 : index
    %42 = vector.load %arg9[%c0_23, %c0_24] : memref<128x64xbf16, #tpu.memory_space<vmem>>, vector<128x64xbf16>
    %cst_25 = arith.constant dense<0.000000e+00> : vector<64x64xf32>
    %43 = tpu.matmul %39, %42, %cst_25 {dimension_numbers = #tpu.dot_dimension_numbers<[1], [0], [0], [1], [0, 0, 1, 1], [], []>} : vector<64x128xbf16>, vector<128x64xbf16>, vector<64x64xf32> -> vector<64x64xf32>
    %44 = arith.maximumf %41, %43 : vector<64x64xf32>
    %45 = vector.shape_cast %44 : vector<64x64xf32> to vector<4x2x8x64xf32>
    %cst_26 = arith.constant dense<0xFF800000> : vector<4x8x64xf32>
    %46 = vector.multi_reduction <maximumf>, %45, %cst_26 [1] : vector<4x2x8x64xf32> to vector<4x8x64xf32>
    %47 = vector.extract_strided_slice %46 {offsets = [0, 0, 0], sizes = [1, 8, 64], strides = [1, 1, 1]} : vector<4x8x64xf32> to vector<1x8x64xf32>
    %48 = vector.shape_cast %47 : vector<1x8x64xf32> to vector<8x64xf32>
    %49 = vector.extract_strided_slice %46 {offsets = [1, 0, 0], sizes = [1, 8, 64], strides = [1, 1, 1]} : vector<4x8x64xf32> to vector<1x8x64xf32>
    %50 = vector.shape_cast %49 : vector<1x8x64xf32> to vector<8x64xf32>
    %51 = vector.extract_strided_slice %46 {offsets = [2, 0, 0], sizes = [1, 8, 64], strides = [1, 1, 1]} : vector<4x8x64xf32> to vector<1x8x64xf32>
    %52 = vector.shape_cast %51 : vector<1x8x64xf32> to vector<8x64xf32>
    %53 = vector.extract_strided_slice %46 {offsets = [3, 0, 0], sizes = [1, 8, 64], strides = [1, 1, 1]} : vector<4x8x64xf32> to vector<1x8x64xf32>
    %54 = vector.shape_cast %53 : vector<1x8x64xf32> to vector<8x64xf32>
    %55 = tpu.concatenate %48, %50, %52, %54 in 1 : vector<8x64xf32>, vector<8x64xf32>, vector<8x64xf32>, vector<8x64xf32> -> vector<8x256xf32>
    %56 = arith.truncf %55 : vector<8x256xf32> to vector<8x256xbf16>
    %c0_27 = arith.constant 0 : index
    %c0_28 = arith.constant 0 : index
    %57 = vector.load %arg10[%c0_27, %c0_28] : memref<256x120xbf16, #tpu.memory_space<vmem>>, vector<256x120xbf16>
    %cst_29 = arith.constant dense<0.000000e+00> : vector<8x120xf32>
    %58 = tpu.matmul %56, %57, %cst_29 {dimension_numbers = #tpu.dot_dimension_numbers<[1], [0], [0], [1], [0, 0, 1, 1], [], []>} : vector<8x256xbf16>, vector<256x120xbf16>, vector<8x120xf32> -> vector<8x120xf32>
    %c0_30 = arith.constant 0 : index
    %c0_31 = arith.constant 0 : index
    %59 = vector.load %arg11[%c0_30, %c0_31] : memref<1x120xf32, #tpu.memory_space<vmem>>, vector<1x120xf32>
    %60 = vector.broadcast %59 : vector<1x120xf32> to vector<8x120xf32>
    %61 = arith.addf %58, %60 : vector<8x120xf32>
    %cst_32 = arith.constant 0.000000e+00 : f32
    %62 = vector.broadcast %cst_32 : f32 to vector<8x120xf32>
    %63 = arith.maximumf %61, %62 : vector<8x120xf32>
    %64 = arith.truncf %63 : vector<8x120xf32> to vector<8x120xbf16>
    %c0_33 = arith.constant 0 : index
    %c0_34 = arith.constant 0 : index
    %65 = vector.load %arg12[%c0_33, %c0_34] : memref<120x84xbf16, #tpu.memory_space<vmem>>, vector<120x84xbf16>
    %cst_35 = arith.constant dense<0.000000e+00> : vector<8x84xf32>
    %66 = tpu.matmul %64, %65, %cst_35 {dimension_numbers = #tpu.dot_dimension_numbers<[1], [0], [0], [1], [0, 0, 1, 1], [], []>} : vector<8x120xbf16>, vector<120x84xbf16>, vector<8x84xf32> -> vector<8x84xf32>
    %c0_36 = arith.constant 0 : index
    %c0_37 = arith.constant 0 : index
    %67 = vector.load %arg13[%c0_36, %c0_37] : memref<1x84xf32, #tpu.memory_space<vmem>>, vector<1x84xf32>
    %68 = vector.broadcast %67 : vector<1x84xf32> to vector<8x84xf32>
    %69 = arith.addf %66, %68 : vector<8x84xf32>
    %cst_38 = arith.constant 0.000000e+00 : f32
    %70 = vector.broadcast %cst_38 : f32 to vector<8x84xf32>
    %71 = arith.maximumf %69, %70 : vector<8x84xf32>
    %72 = arith.truncf %71 : vector<8x84xf32> to vector<8x84xbf16>
    %c0_39 = arith.constant 0 : index
    %c0_40 = arith.constant 0 : index
    %73 = vector.load %arg14[%c0_39, %c0_40] : memref<84x128xbf16, #tpu.memory_space<vmem>>, vector<84x128xbf16>
    %cst_41 = arith.constant dense<0.000000e+00> : vector<8x128xf32>
    %74 = tpu.matmul %72, %73, %cst_41 {dimension_numbers = #tpu.dot_dimension_numbers<[1], [0], [0], [1], [0, 0, 1, 1], [], []>} : vector<8x84xbf16>, vector<84x128xbf16>, vector<8x128xf32> -> vector<8x128xf32>
    %c0_42 = arith.constant 0 : index
    %c0_43 = arith.constant 0 : index
    %75 = vector.load %arg15[%c0_42, %c0_43] : memref<1x128xf32, #tpu.memory_space<vmem>>, vector<1x128xf32>
    %76 = vector.broadcast %75 : vector<1x128xf32> to vector<8x128xf32>
    %77 = arith.addf %74, %76 : vector<8x128xf32>
    %78 = tpu.iota {dimensions = array<i32: 1>} : vector<8x128xi32>
    %c10_i32 = arith.constant 10 : i32
    %79 = vector.broadcast %c10_i32 : i32 to vector<8x128xi32>
    %80 = arith.cmpi slt, %78, %79 : vector<8x128xi32>
    %cst_44 = arith.constant -1.000000e+30 : f32
    %81 = vector.broadcast %cst_44 : f32 to vector<8x128xf32>
    %82 = arith.select %80, %77, %81 : vector<8x128xi1>, vector<8x128xf32>
    %cst_45 = arith.constant dense<0xFF800000> : vector<8xf32>
    %83 = vector.multi_reduction <maximumf>, %82, %cst_45 [1] : vector<8x128xf32> to vector<8xf32>
    %84 = vector.shape_cast %83 : vector<8xf32> to vector<8x1xf32>
    %85 = vector.broadcast %84 : vector<8x1xf32> to vector<8x128xf32>
    %86 = arith.subf %82, %85 : vector<8x128xf32>
    %87 = math.exp %86 : vector<8x128xf32>
    %cst_46 = arith.constant dense<0.000000e+00> : vector<8xf32>
    %88 = vector.multi_reduction <add>, %87, %cst_46 [1] : vector<8x128xf32> to vector<8xf32>
    %89 = vector.shape_cast %88 : vector<8xf32> to vector<8x1xf32>
    %90 = vector.broadcast %89 : vector<8x1xf32> to vector<8x128xf32>
    %91 = arith.divf %87, %90 : vector<8x128xf32>
    %c0_47 = arith.constant 0 : index
    %c0_48 = arith.constant 0 : index
    %92 = vector.load %arg16[%c0_47, %c0_48] : memref<8x128xf32, #tpu.memory_space<vmem>>, vector<8x128xf32>
    tpu.vector_store %arg16[%c0_47, %c0_48], %91 {strides = array<i32>} : memref<8x128xf32, #tpu.memory_space<vmem>>, vector<8x128xf32>,
    return
  }
  func.func @transform_0(%arg0: i32) -> (i32, i32, i32) {
    %c0_i32 = arith.constant 0 : i32
    %c0_i32_0 = arith.constant 0 : i32
    %c0_i32_1 = arith.constant 0 : i32
    return %c0_i32, %arg0, %c0_i32_0 : i32, i32, i32
  }
  func.func @transform_1(%arg0: i32) -> (i32, i32) {
    %c0_i32 = arith.constant 0 : i32
    %c0_i32_0 = arith.constant 0 : i32
    %c0_i32_1 = arith.constant 0 : i32
    return %c0_i32, %c0_i32_0 : i32, i32
  }
  func.func @transform_2(%arg0: i32) -> (i32, i32) {
    %c0_i32 = arith.constant 0 : i32
    %c0_i32_0 = arith.constant 0 : i32
    %c0_i32_1 = arith.constant 0 : i32
    return %c0_i32, %c0_i32_0 : i32, i32
  }
  func.func @transform_3(%arg0: i32) -> (i32, i32) {
    %c0_i32 = arith.constant 0 : i32
    %c0_i32_0 = arith.constant 0 : i32
    %c0_i32_1 = arith.constant 0 : i32
    return %c0_i32, %c0_i32_0 : i32, i32
  }
  func.func @transform_4(%arg0: i32) -> (i32, i32) {
    %c0_i32 = arith.constant 0 : i32
    %c0_i32_0 = arith.constant 0 : i32
    %c0_i32_1 = arith.constant 0 : i32
    return %c0_i32, %c0_i32_0 : i32, i32
  }
  func.func @transform_5(%arg0: i32) -> (i32, i32) {
    %c0_i32 = arith.constant 0 : i32
    %c0_i32_0 = arith.constant 0 : i32
    %c0_i32_1 = arith.constant 0 : i32
    return %c0_i32, %c0_i32_0 : i32, i32
  }
  func.func @transform_6(%arg0: i32) -> (i32, i32) {
    %c0_i32 = arith.constant 0 : i32
    %c0_i32_0 = arith.constant 0 : i32
    %c0_i32_1 = arith.constant 0 : i32
    return %c0_i32, %c0_i32_0 : i32, i32
  }
  func.func @transform_7(%arg0: i32) -> (i32, i32) {
    %c0_i32 = arith.constant 0 : i32
    %c0_i32_0 = arith.constant 0 : i32
    %c0_i32_1 = arith.constant 0 : i32
    return %c0_i32, %c0_i32_0 : i32, i32
  }
  func.func @transform_8(%arg0: i32) -> (i32, i32) {
    %c0_i32 = arith.constant 0 : i32
    %c0_i32_0 = arith.constant 0 : i32
    %c0_i32_1 = arith.constant 0 : i32
    return %c0_i32, %c0_i32_0 : i32, i32
  }
  func.func @transform_9(%arg0: i32) -> (i32, i32) {
    %c0_i32 = arith.constant 0 : i32
    %c0_i32_0 = arith.constant 0 : i32
    %c0_i32_1 = arith.constant 0 : i32
    return %c0_i32, %c0_i32_0 : i32, i32
  }
  func.func @transform_10(%arg0: i32) -> (i32, i32) {
    %c0_i32 = arith.constant 0 : i32
    %c0_i32_0 = arith.constant 0 : i32
    %c0_i32_1 = arith.constant 0 : i32
    return %c0_i32, %c0_i32_0 : i32, i32
  }
  func.func @transform_11(%arg0: i32) -> (i32, i32) {
    %c0_i32 = arith.constant 0 : i32
    %c0_i32_0 = arith.constant 0 : i32
    %c0_i32_1 = arith.constant 0 : i32
    return %c0_i32, %c0_i32_0 : i32, i32
  }
  func.func @transform_12(%arg0: i32) -> (i32, i32) {
    %c0_i32 = arith.constant 0 : i32
    %c0_i32_0 = arith.constant 0 : i32
    %c0_i32_1 = arith.constant 0 : i32
    return %c0_i32, %c0_i32_0 : i32, i32
  }
  func.func @transform_13(%arg0: i32) -> (i32, i32) {
    %c0_i32 = arith.constant 0 : i32
    %c0_i32_0 = arith.constant 0 : i32
    %c0_i32_1 = arith.constant 0 : i32
    return %c0_i32, %c0_i32_0 : i32, i32
  }
  func.func @transform_14(%arg0: i32) -> (i32, i32) {
    %c0_i32 = arith.constant 0 : i32
    %c0_i32_0 = arith.constant 0 : i32
    %c0_i32_1 = arith.constant 0 : i32
    return %c0_i32, %c0_i32_0 : i32, i32
  }
  func.func @transform_15(%arg0: i32) -> (i32, i32) {
    %c0_i32 = arith.constant 0 : i32
    %c0_i32_0 = arith.constant 0 : i32
    return %arg0, %c0_i32 : i32, i32
  }
}

</mosaic_0001>

<llo_original>
// kernel: convnet_forward.1
$region0: #{convnet_forward.1}
  #allocation0 [shape = 'u32[]', space=smem, size = 0x4, offset = 0x4, fixed_abs, tag = 'smem constant byte address 0x4 - core index']
  #allocation1 [shape = 'u32[72,128]{1,0:T(1,128)}', space=vmem, size = 0x9000, scoped, tag = 'internal scratch']
  %s0 = inlined_call_operand.vmem [shape: f32[28,16,28], index: 0, kind: input, shape index: {}]
  %s1 = inlined_call_operand.vmem [shape: bf16[140,144], index: 1, kind: input, shape index: {}]
  %s2 = inlined_call_operand.vmem [shape: f32[1,144], index: 2, kind: input, shape index: {}]
  %s3 = inlined_call_operand.vmem [shape: bf16[144,72], index: 3, kind: input, shape index: {}]
  %s4 = inlined_call_operand.vmem [shape: bf16[144,72], index: 4, kind: input, shape index: {}]
  %s5 = inlined_call_operand.vmem [shape: bf16[360,128], index: 5, kind: input, shape index: {}]
  %s6 = inlined_call_operand.vmem [shape: f32[1,128], index: 6, kind: input, shape index: {}]
  %s7 = inlined_call_operand.vmem [shape: bf16[128,64], index: 7, kind: input, shape index: {}]
  %s8 = inlined_call_operand.vmem [shape: bf16[128,64], index: 8, kind: input, shape index: {}]
  %s9 = inlined_call_operand.vmem [shape: bf16[256,120], index: 9, kind: input, shape index: {}]
  %s10 = inlined_call_operand.vmem [shape: f32[1,120], index: 10, kind: input, shape index: {}]
  %s11 = inlined_call_operand.vmem [shape: bf16[120,84], index: 11, kind: input, shape index: {}]
  %s12 = inlined_call_operand.vmem [shape: f32[1,84], index: 12, kind: input, shape index: {}]
  %s13 = inlined_call_operand.vmem [shape: bf16[84,128], index: 13, kind: input, shape index: {}]
  %s14 = inlined_call_operand.vmem [shape: f32[1,128], index: 14, kind: input, shape index: {}]
  %s15 = inlined_call_operand.hbm [shape: f32[16,128], index: 15, kind: output, shape index: {}]
  %s16 = sld [smem:[#allocation0]]
  $region131: #{convnet_forward.1} parent=0
    _
  %s18 = ssub.s32 1, %s16
  %s19 = scalar_select 0, %s18, %s16
  $region1: #{convnet_forward.1} parent=0
    #allocation2 [shape = 'u8[229376]{0}', space=vmem, size = 0x38000, scoped, tag = 'input window, operand 0']
    #allocation3 [shape = 'u8[8192]{0}', space=vmem, size = 0x2000, scoped, tag = 'output window, operand 0']
    #allocation4 [shape = 's32[2]{0}', space=sflag, size = 0x8, scoped, tag = 'scoped memory for convnet_forward.1']
    %20 = vsyncpa [#allocation4], 0
    %s21 = scalar_lea.sflag [#allocation4], 1
    %22 = vsyncpa %s21, 0
    loop: start=0, step=1, limit=4
    $region2: #{convnet_forward.1} parent=1 // loop_pre_header
      _
    $region3: #{convnet_forward.1} parent=1 // loop_header
      %s24 = sphi 0, %s28
      %p25 = scmp.ge.s32.totalorder %s24, 4
      %s34 = sphi 0, %s36
      %s37 = sphi 0, %s34
      %s38 = sphi 0, %s37
      %s54 = sphi 0, %s38
      %s58 = sphi 0, %s58
      %s60 = sphi 0, %s58
      %s61 = sphi 0, %s60
      %s75 = sphi 0, %s61
      %s79 = sphi 0, %s79
      %s81 = sphi 0, %s79
      %s82 = sphi 0, %s81
      %s96 = sphi 0, %s82
      %s100 = sphi 0, %s100
      %s102 = sphi 0, %s100
      %s103 = sphi 0, %s102
      %s117 = sphi 0, %s103
      %s121 = sphi 0, %s121
      %s123 = sphi 0, %s121
      %s124 = sphi 0, %s123
      %s138 = sphi 0, %s124
      %s142 = sphi 0, %s142
      %s144 = sphi 0, %s142
      %s145 = sphi 0, %s144
      %s159 = sphi 0, %s145
      %s163 = sphi 0, %s163
      %s165 = sphi 0, %s163
      %s166 = sphi 0, %s165
      %s180 = sphi 0, %s166
      %s184 = sphi 0, %s184
      %s186 = sphi 0, %s184
      %s187 = sphi 0, %s186
      %s201 = sphi 0, %s187
      %s205 = sphi 0, %s205
      %s207 = sphi 0, %s205
      %s208 = sphi 0, %s207
      %s222 = sphi 0, %s208
      %s226 = sphi 0, %s226
      %s228 = sphi 0, %s226
      %s229 = sphi 0, %s228
      %s243 = sphi 0, %s229
      %s247 = sphi 0, %s247
      %s249 = sphi 0, %s247
      %s250 = sphi 0, %s249
      %s264 = sphi 0, %s250
      %s268 = sphi 0, %s268
      %s270 = sphi 0, %s268
      %s271 = sphi 0, %s270
      %s285 = sphi 0, %s271
      %s289 = sphi 0, %s289
      %s291 = sphi 0, %s289
      %s292 = sphi 0, %s291
      %s306 = sphi 0, %s292
      %s310 = sphi 0, %s310
      %s312 = sphi 0, %s310
      %s313 = sphi 0, %s312
      %s327 = sphi 0, %s313
      %s331 = sphi 0, %s331
      %s333 = sphi 0, %s331
      %s334 = sphi 0, %s333
      %s348 = sphi 0, %s334
      %s354 = sphi 0, %s356
      %s357 = sphi 0, %s354
      %s358 = sphi 0, %s357
      %s374 = sphi 0, %s358
    $region4: #{convnet_forward.1} parent=1 // loop_header_branch
      %27 = sbr.rel (%p25) target = $region8
    $region5: #{convnet_forward.1} parent=1 // loop_body
      %s29 = ssub.s32 %s24, 1
      %s30 = ssub.s32 %s24, 2
      %s31 = sadd.s32 %s24, 1
      %s32 = ssub.s32 %s24, %s31
      %p33 = scmp.eq.s32.totalorder %s32, 0
      %s35 = sadd.s32 %s34, 1
      %s36 = scalar_select %p33, %s34, %s35
      %p39 = pneg %p33
      %p40 = scmp.eq.s32.totalorder %s24, 1
      %p41 = por %p39, %p40
      %p42 = scmp.ne.s32.totalorder %s34, %s37
      %p43 = scmp.eq.s32.totalorder %s24, 0
      %p44 = por %p42, %p43
      %p45 = scmp.ne.s32.totalorder %s34, %s37
      %p46 = scmp.eq.s32.totalorder %s29, 1
      %p47 = por %p45, %p46
      %p48 = scmp.ne.s32.totalorder %s37, %s38
      %p49 = scmp.eq.s32.totalorder %s29, 0
      %p50 = por %p48, %p49
      %p51 = scmp.ne.s32.totalorder %s37, %s38
      %p52 = scmp.eq.s32.totalorder %s30, 1
      %p53 = por %p51, %p52
      %p55 = scmp.ne.s32.totalorder %s38, %s54
      %p56 = scmp.eq.s32.totalorder %s30, 0
      %p57 = por %p55, %p56
      %s59 = sadd.s32 %s58, 1
      %p62 = scmp.eq.s32.totalorder %s24, 1
      %p63 = scmp.ne.s32.totalorder %s58, %s60
      %p64 = scmp.eq.s32.totalorder %s24, 0
      %p65 = por %p63, %p64
      %p66 = scmp.ne.s32.totalorder %s58, %s60
      %p67 = scmp.eq.s32.totalorder %s29, 1
      %p68 = por %p66, %p67
      %p69 = scmp.ne.s32.totalorder %s60, %s61
      %p70 = scmp.eq.s32.totalorder %s29, 0
      %p71 = por %p69, %p70
      %p72 = scmp.ne.s32.totalorder %s60, %s61
      %p73 = scmp.eq.s32.totalorder %s30, 1
      %p74 = por %p72, %p73
      %p76 = scmp.ne.s32.totalorder %s61, %s75
      %p77 = scmp.eq.s32.totalorder %s30, 0
      %p78 = por %p76, %p77
      %s80 = sadd.s32 %s79, 1
      %p83 = scmp.eq.s32.totalorder %s24, 1
      %p84 = scmp.ne.s32.totalorder %s79, %s81
      %p85 = scmp.eq.s32.totalorder %s24, 0
      %p86 = por %p84, %p85
      %p87 = scmp.ne.s32.totalorder %s79, %s81
      %p88 = scmp.eq.s32.totalorder %s29, 1
      %p89 = por %p87, %p88
      %p90 = scmp.ne.s32.totalorder %s81, %s82
      %p91 = scmp.eq.s32.totalorder %s29, 0
      %p92 = por %p90, %p91
      %p93 = scmp.ne.s32.totalorder %s81, %s82
      %p94 = scmp.eq.s32.totalorder %s30, 1
      %p95 = por %p93, %p94
      %p97 = scmp.ne.s32.totalorder %s82, %s96
      %p98 = scmp.eq.s32.totalorder %s30, 0
      %p99 = por %p97, %p98
      %s101 = sadd.s32 %s100, 1
      %p104 = scmp.eq.s32.totalorder %s24, 1
      %p105 = scmp.ne.s32.totalorder %s100, %s102
      %p106 = scmp.eq.s32.totalorder %s24, 0
      %p107 = por %p105, %p106
      %p108 = scmp.ne.s32.totalorder %s100, %s102
      %p109 = scmp.eq.s32.totalorder %s29, 1
      %p110 = por %p108, %p109
      %p111 = scmp.ne.s32.totalorder %s102, %s103
      %p112 = scmp.eq.s32.totalorder %s29, 0
      %p113 = por %p111, %p112
      %p114 = scmp.ne.s32.totalorder %s102, %s103
      %p115 = scmp.eq.s32.totalorder %s30, 1
      %p116 = por %p114, %p115
      %p118 = scmp.ne.s32.totalorder %s103, %s117
      %p119 = scmp.eq.s32.totalorder %s30, 0
      %p120 = por %p118, %p119
      %s122 = sadd.s32 %s121, 1
      %p125 = scmp.eq.s32.totalorder %s24, 1
      %p126 = scmp.ne.s32.totalorder %s121, %s123
      %p127 = scmp.eq.s32.totalorder %s24, 0
      %p128 = por %p126, %p127
      %p129 = scmp.ne.s32.totalorder %s121, %s123
      %p130 = scmp.eq.s32.totalorder %s29, 1
      %p131 = por %p129, %p130
      %p132 = scmp.ne.s32.totalorder %s123, %s124
      %p133 = scmp.eq.s32.totalorder %s29, 0
      %p134 = por %p132, %p133
      %p135 = scmp.ne.s32.totalorder %s123, %s124
      %p136 = scmp.eq.s32.totalorder %s30, 1
      %p137 = por %p135, %p136
      %p139 = scmp.ne.s32.totalorder %s124, %s138
      %p140 = scmp.eq.s32.totalorder %s30, 0
      %p141 = por %p139, %p140
      %s143 = sadd.s32 %s142, 1
      %p146 = scmp.eq.s32.totalorder %s24, 1
      %p147 = scmp.ne.s32.totalorder %s142, %s144
      %p148 = scmp.eq.s32.totalorder %s24, 0
      %p149 = por %p147, %p148
      %p150 = scmp.ne.s32.totalorder %s142, %s144
      %p151 = scmp.eq.s32.totalorder %s29, 1
      %p152 = por %p150, %p151
      %p153 = scmp.ne.s32.totalorder %s144, %s145
      %p154 = scmp.eq.s32.totalorder %s29, 0
      %p155 = por %p153, %p154
      %p156 = scmp.ne.s32.totalorder %s144, %s145
      %p157 = scmp.eq.s32.totalorder %s30, 1
      %p158 = por %p156, %p157
      %p160 = scmp.ne.s32.totalorder %s145, %s159
      %p161 = scmp.eq.s32.totalorder %s30, 0
      %p162 = por %p160, %p161
      %s164 = sadd.s32 %s163, 1
      %p167 = scmp.eq.s32.totalorder %s24, 1
      %p168 = scmp.ne.s32.totalorder %s163, %s165
      %p169 = scmp.eq.s32.totalorder %s24, 0
      %p170 = por %p168, %p169
      %p171 = scmp.ne.s32.totalorder %s163, %s165
      %p172 = scmp.eq.s32.totalorder %s29, 1
      %p173 = por %p171, %p172
      %p174 = scmp.ne.s32.totalorder %s165, %s166
      %p175 = scmp.eq.s32.totalorder %s29, 0
      %p176 = por %p174, %p175
      %p177 = scmp.ne.s32.totalorder %s165, %s166
      %p178 = scmp.eq.s32.totalorder %s30, 1
      %p179 = por %p177, %p178
      %p181 = scmp.ne.s32.totalorder %s166, %s180
      %p182 = scmp.eq.s32.totalorder %s30, 0
      %p183 = por %p181, %p182
      %s185 = sadd.s32 %s184, 1
      %p188 = scmp.eq.s32.totalorder %s24, 1
      %p189 = scmp.ne.s32.totalorder %s184, %s186
      %p190 = scmp.eq.s32.totalorder %s24, 0
      %p191 = por %p189, %p190
      %p192 = scmp.ne.s32.totalorder %s184, %s186
      %p193 = scmp.eq.s32.totalorder %s29, 1
      %p194 = por %p192, %p193
      %p195 = scmp.ne.s32.totalorder %s186, %s187
      %p196 = scmp.eq.s32.totalorder %s29, 0
      %p197 = por %p195, %p196
      %p198 = scmp.ne.s32.totalorder %s186, %s187
      %p199 = scmp.eq.s32.totalorder %s30, 1
      %p200 = por %p198, %p199
      %p202 = scmp.ne.s32.totalorder %s187, %s201
      %p203 = scmp.eq.s32.totalorder %s30, 0
      %p204 = por %p202, %p203
      %s206 = sadd.s32 %s205, 1
      %p209 = scmp.eq.s32.totalorder %s24, 1
      %p210 = scmp.ne.s32.totalorder %s205, %s207
      %p211 = scmp.eq.s32.totalorder %s24, 0
      %p212 = por %p210, %p211
      %p213 = scmp.ne.s32.totalorder %s205, %s207
      %p214 = scmp.eq.s32.totalorder %s29, 1
      %p215 = por %p213, %p214
      %p216 = scmp.ne.s32.totalorder %s207, %s208
      %p217 = scmp.eq.s32.totalorder %s29, 0
      %p218 = por %p216, %p217
      %p219 = scmp.ne.s32.totalorder %s207, %s208
      %p220 = scmp.eq.s32.totalorder %s30, 1
      %p221 = por %p219, %p220
      %p223 = scmp.ne.s32.totalorder %s208, %s222
      %p224 = scmp.eq.s32.totalorder %s30, 0
      %p225 = por %p223, %p224
      %s227 = sadd.s32 %s226, 1
      %p230 = scmp.eq.s32.totalorder %s24, 1
      %p231 = scmp.ne.s32.totalorder %s226, %s228
      %p232 = scmp.eq.s32.totalorder %s24, 0
      %p233 = por %p231, %p232
      %p234 = scmp.ne.s32.totalorder %s226, %s228
      %p235 = scmp.eq.s32.totalorder %s29, 1
      %p236 = por %p234, %p235
      %p237 = scmp.ne.s32.totalorder %s228, %s229
      %p238 = scmp.eq.s32.totalorder %s29, 0
      %p239 = por %p237, %p238
      %p240 = scmp.ne.s32.totalorder %s228, %s229
      %p241 = scmp.eq.s32.totalorder %s30, 1
      %p242 = por %p240, %p241
      %p244 = scmp.ne.s32.totalorder %s229, %s243
      %p245 = scmp.eq.s32.totalorder %s30, 0
      %p246 = por %p244, %p245
      %s248 = sadd.s32 %s247, 1
      %p251 = scmp.eq.s32.totalorder %s24, 1
      %p252 = scmp.ne.s32.totalorder %s247, %s249
      %p253 = scmp.eq.s32.totalorder %s24, 0
      %p254 = por %p252, %p253
      %p255 = scmp.ne.s32.totalorder %s247, %s249
      %p256 = scmp.eq.s32.totalorder %s29, 1
      %p257 = por %p255, %p256
      %p258 = scmp.ne.s32.totalorder %s249, %s250
      %p259 = scmp.eq.s32.totalorder %s29, 0
      %p260 = por %p258, %p259
      %p261 = scmp.ne.s32.totalorder %s249, %s250
      %p262 = scmp.eq.s32.totalorder %s30, 1
      %p263 = por %p261, %p262
      %p265 = scmp.ne.s32.totalorder %s250, %s264
      %p266 = scmp.eq.s32.totalorder %s30, 0
      %p267 = por %p265, %p266
      %s269 = sadd.s32 %s268, 1
      %p272 = scmp.eq.s32.totalorder %s24, 1
      %p273 = scmp.ne.s32.totalorder %s268, %s270
      %p274 = scmp.eq.s32.totalorder %s24, 0
      %p275 = por %p273, %p274
      %p276 = scmp.ne.s32.totalorder %s268, %s270
      %p277 = scmp.eq.s32.totalorder %s29, 1
      %p278 = por %p276, %p277
      %p279 = scmp.ne.s32.totalorder %s270, %s271
      %p280 = scmp.eq.s32.totalorder %s29, 0
      %p281 = por %p279, %p280
      %p282 = scmp.ne.s32.totalorder %s270, %s271
      %p283 = scmp.eq.s32.totalorder %s30, 1
      %p284 = por %p282, %p283
      %p286 = scmp.ne.s32.totalorder %s271, %s285
      %p287 = scmp.eq.s32.totalorder %s30, 0
      %p288 = por %p286, %p287
      %s290 = sadd.s32 %s289, 1
      %p293 = scmp.eq.s32.totalorder %s24, 1
      %p294 = scmp.ne.s32.totalorder %s289, %s291
      %p295 = scmp.eq.s32.totalorder %s24, 0
      %p296 = por %p294, %p295
      %p297 = scmp.ne.s32.totalorder %s289, %s291
      %p298 = scmp.eq.s32.totalorder %s29, 1
      %p299 = por %p297, %p298
      %p300 = scmp.ne.s32.totalorder %s291, %s292
      %p301 = scmp.eq.s32.totalorder %s29, 0
      %p302 = por %p300, %p301
      %p303 = scmp.ne.s32.totalorder %s291, %s292
      %p304 = scmp.eq.s32.totalorder %s30, 1
      %p305 = por %p303, %p304
      %p307 = scmp.ne.s32.totalorder %s292, %s306
      %p308 = scmp.eq.s32.totalorder %s30, 0
      %p309 = por %p307, %p308
      %s311 = sadd.s32 %s310, 1
      %p314 = scmp.eq.s32.totalorder %s24, 1
      %p315 = scmp.ne.s32.totalorder %s310, %s312
      %p316 = scmp.eq.s32.totalorder %s24, 0
      %p317 = por %p315, %p316
      %p318 = scmp.ne.s32.totalorder %s310, %s312
      %p319 = scmp.eq.s32.totalorder %s29, 1
      %p320 = por %p318, %p319
      %p321 = scmp.ne.s32.totalorder %s312, %s313
      %p322 = scmp.eq.s32.totalorder %s29, 0
      %p323 = por %p321, %p322
      %p324 = scmp.ne.s32.totalorder %s312, %s313
      %p325 = scmp.eq.s32.totalorder %s30, 1
      %p326 = por %p324, %p325
      %p328 = scmp.ne.s32.totalorder %s313, %s327
      %p329 = scmp.eq.s32.totalorder %s30, 0
      %p330 = por %p328, %p329
      %s332 = sadd.s32 %s331, 1
      %p335 = scmp.eq.s32.totalorder %s24, 1
      %p336 = scmp.ne.s32.totalorder %s331, %s333
      %p337 = scmp.eq.s32.totalorder %s24, 0
      %p338 = por %p336, %p337
      %p339 = scmp.ne.s32.totalorder %s331, %s333
      %p340 = scmp.eq.s32.totalorder %s29, 1
      %p341 = por %p339, %p340
      %p342 = scmp.ne.s32.totalorder %s333, %s334
      %p343 = scmp.eq.s32.totalorder %s29, 0
      %p344 = por %p342, %p343
      %p345 = scmp.ne.s32.totalorder %s333, %s334
      %p346 = scmp.eq.s32.totalorder %s30, 1
      %p347 = por %p345, %p346
      %p349 = scmp.ne.s32.totalorder %s334, %s348
      %p350 = scmp.eq.s32.totalorder %s30, 0
      %p351 = por %p349, %p350
      %s352 = ssub.s32 %s24, %s31
      %p353 = scmp.eq.s32.totalorder %s352, 0
      %s355 = sadd.s32 %s354, 1
      %s356 = scalar_select %p353, %s354, %s355
      %p359 = pneg %p353
      %p360 = scmp.eq.s32.totalorder %s24, 1
      %p361 = por %p359, %p360
      %p362 = scmp.ne.s32.totalorder %s354, %s357
      %p363 = scmp.eq.s32.totalorder %s24, 0
      %p364 = por %p362, %p363
      %p365 = scmp.ne.s32.totalorder %s354, %s357
      %p366 = scmp.eq.s32.totalorder %s29, 1
      %p367 = por %p365, %p366
      %p368 = scmp.ne.s32.totalorder %s357, %s358
      %p369 = scmp.eq.s32.totalorder %s29, 0
      %p370 = por %p368, %p369
      %p371 = scmp.ne.s32.totalorder %s357, %s358
      %p372 = scmp.eq.s32.totalorder %s30, 1
      %p373 = por %p371, %p372
      %p375 = scmp.ne.s32.totalorder %s358, %s374
      %p376 = scmp.eq.s32.totalorder %s30, 0
      %p377 = por %p375, %p376
      %p378 = scmp.le.s32.totalorder 1, %s24
      %p379 = scmp.lt.s32.totalorder %s24, 3
      %p380 = pnand %p378, %p379
      %p381 = pneg %p380
      // Predicated region
      $region9: #{convnet_forward.1} parent=5 // pred_check
        _
      $region10: #{convnet_forward.1} parent=5 // pred_check_branch
        %383 = sbr.rel (%p380) target = $region12
      $region11: #{convnet_forward.1} parent=5 // pred_region
        %s384 = ssub.s32 %s24, 1
        // Predicated region
        $region13: #{convnet_forward.1} parent=11 // pred_check
          %p385 = pneg %p71
        $region14: #{convnet_forward.1} parent=11 // pred_check_branch
          %387 = sbr.rel (%p385) target = $region16
        $region15: #{convnet_forward.1} parent=11 // pred_region
          _
        $region16: #{convnet_forward.1} parent=11 // pred_fallthru
          _
        // Predicated region
        $region17: #{convnet_forward.1} parent=11 // pred_check
          %p388 = pneg %p92
        $region18: #{convnet_forward.1} parent=11 // pred_check_branch
          %390 = sbr.rel (%p388) target = $region20
        $region19: #{convnet_forward.1} parent=11 // pred_region
          _
        $region20: #{convnet_forward.1} parent=11 // pred_fallthru
          _
        // Predicated region
        $region21: #{convnet_forward.1} parent=11 // pred_check
          %p391 = pneg %p113
        $region22: #{convnet_forward.1} parent=11 // pred_check_branch
          %393 = sbr.rel (%p391) target = $region24
        $region23: #{convnet_forward.1} parent=11 // pred_region
          _
        $region24: #{convnet_forward.1} parent=11 // pred_fallthru
          _
        // Predicated region
        $region25: #{convnet_forward.1} parent=11 // pred_check
          %p394 = pneg %p134
        $region26: #{convnet_forward.1} parent=11 // pred_check_branch
          %396 = sbr.rel (%p394) target = $region28
        $region27: #{convnet_forward.1} parent=11 // pred_region
          _
        $region28: #{convnet_forward.1} parent=11 // pred_fallthru
          _
        // Predicated region
        $region29: #{convnet_forward.1} parent=11 // pred_check
          %p397 = pneg %p155
        $region30: #{convnet_forward.1} parent=11 // pred_check_branch
          %399 = sbr.rel (%p397) target = $region32
        $region31: #{convnet_forward.1} parent=11 // pred_region
          _
        $region32: #{convnet_forward.1} parent=11 // pred_fallthru
          _
        // Predicated region
        $region33: #{convnet_forward.1} parent=11 // pred_check
          %p400 = pneg %p176
        $region34: #{convnet_forward.1} parent=11 // pred_check_branch
          %402 = sbr.rel (%p400) target = $region36
        $region35: #{convnet_forward.1} parent=11 // pred_region
          _
        $region36: #{convnet_forward.1} parent=11 // pred_fallthru
          _
        // Predicated region
        $region37: #{convnet_forward.1} parent=11 // pred_check
          %p403 = pneg %p197
        $region38: #{convnet_forward.1} parent=11 // pred_check_branch
          %405 = sbr.rel (%p403) target = $region40
        $region39: #{convnet_forward.1} parent=11 // pred_region
          _
        $region40: #{convnet_forward.1} parent=11 // pred_fallthru
          _
        // Predicated region
        $region41: #{convnet_forward.1} parent=11 // pred_check
          %p406 = pneg %p218
        $region42: #{convnet_forward.1} parent=11 // pred_check_branch
          %408 = sbr.rel (%p406) target = $region44
        $region43: #{convnet_forward.1} parent=11 // pred_region
          _
        $region44: #{convnet_forward.1} parent=11 // pred_fallthru
          _
        // Predicated region
        $region45: #{convnet_forward.1} parent=11 // pred_check
          %p409 = pneg %p239
        $region46: #{convnet_forward.1} parent=11 // pred_check_branch
          %411 = sbr.rel (%p409) target = $region48
        $region47: #{convnet_forward.1} parent=11 // pred_region
          _
        $region48: #{convnet_forward.1} parent=11 // pred_fallthru
          _
        // Predicated region
        $region49: #{convnet_forward.1} parent=11 // pred_check
          %p412 = pneg %p260
        $region50: #{convnet_forward.1} parent=11 // pred_check_branch
          %414 = sbr.rel (%p412) target = $region52
        $region51: #{convnet_forward.1} parent=11 // pred_region
          _
        $region52: #{convnet_forward.1} parent=11 // pred_fallthru
          _
        // Predicated region
        $region53: #{convnet_forward.1} parent=11 // pred_check
          %p415 = pneg %p281
        $region54: #{convnet_forward.1} parent=11 // pred_check_branch
          %417 = sbr.rel (%p415) target = $region56
        $region55: #{convnet_forward.1} parent=11 // pred_region
          _
        $region56: #{convnet_forward.1} parent=11 // pred_fallthru
          _
        // Predicated region
        $region57: #{convnet_forward.1} parent=11 // pred_check
          %p418 = pneg %p302
        $region58: #{convnet_forward.1} parent=11 // pred_check_branch
          %420 = sbr.rel (%p418) target = $region60
        $region59: #{convnet_forward.1} parent=11 // pred_region
          _
        $region60: #{convnet_forward.1} parent=11 // pred_fallthru
          _
        // Predicated region
        $region61: #{convnet_forward.1} parent=11 // pred_check
          %p421 = pneg %p323
        $region62: #{convnet_forward.1} parent=11 // pred_check_branch
          %423 = sbr.rel (%p421) target = $region64
        $region63: #{convnet_forward.1} parent=11 // pred_region
          _
        $region64: #{convnet_forward.1} parent=11 // pred_fallthru
          _
        // Predicated region
        $region65: #{convnet_forward.1} parent=11 // pred_check
          %p424 = pneg %p344
        $region66: #{convnet_forward.1} parent=11 // pred_check_branch
          %426 = sbr.rel (%p424) target = $region68
        $region67: #{convnet_forward.1} parent=11 // pred_region
          _
        $region68: #{convnet_forward.1} parent=11 // pred_fallthru
          _
      $region12: #{convnet_forward.1} parent=5 // pred_fallthru
        _
      %p427 = scmp.lt.s32.totalorder %s24, 2
      // Predicated region
      $region69: #{convnet_forward.1} parent=5 // pred_check
        %p428 = pneg %p427
      $region70: #{convnet_forward.1} parent=5 // pred_check_branch
        %430 = sbr.rel (%p428) target = $region72
      $region71: #{convnet_forward.1} parent=5 // pred_region
        // Predicated region
        $region73: #{convnet_forward.1} parent=71 // pred_check
          %p431 = pneg %p44
        $region74: #{convnet_forward.1} parent=71 // pred_check_branch
          %433 = sbr.rel (%p431) target = $region76
        $region75: #{convnet_forward.1} parent=71 // pred_region
          %s434 = sand.u32 %s34, 1
          %s435 = sand.u32 %s34, 1
          %s436 = smul.addr %s435, 224
          %s437 = scalar_lea.vmem [#allocation2], %s436
          %s438 = smul.addr %s24, 8
          %s439 = scalar_lea.vmem %s0, %s438
          // Predicated region
          $region77: #{convnet_forward.1} parent=75 // pred_check
            _
          $region78: #{convnet_forward.1} parent=75 // pred_check_branch
            %441 = sbr.rel (0) target = $region80
          $region79: #{convnet_forward.1} parent=75 // pred_region
            // Predicated region
            $region81: #{convnet_forward.1} parent=79 // pred_check
              _
            $region82: #{convnet_forward.1} parent=79 // pred_check_branch
              %443 = sbr.rel (0) target = $region84
            $region83: #{convnet_forward.1} parent=79 // pred_region
              // Predicated region
              $region96: #{convnet_forward.1} parent=83 // pred_check
                _
              $region97: #{convnet_forward.1} parent=83 // pred_check_branch
                %513 = sbr.rel (0) target = $region99
              $region98: #{convnet_forward.1} parent=83 // pred_region
                loop: start=0, step=1, limit=1
                $region100: #{convnet_forward.1} parent=98 // loop_pre_header
                  _
                $region101: #{convnet_forward.1} parent=98 // loop_header
                  %s515 = sphi 0, %s519
                  %p516 = scmp.ge.s32.totalorder %s515, 1
                  %s520 = sphi %s439, %s439
                  %s521 = sphi %s437, %s437
                $region102: #{convnet_forward.1} parent=98 // loop_header_branch
                  %518 = sbr.rel (%p516) target = $region106
                $region103: #{convnet_forward.1} parent=98 // loop_body
                  %v522 = vld [vmem:[%s520] sm:$0xff]
                  %523 = vst [vmem:[%s521] sm:$0xff] %v522
                  %v524 = vld [vmem:[%s520 + $0x10] sm:$0xff]
                  %525 = vst [vmem:[%s521 + $0x8] sm:$0xff] %v524
                  %v526 = vld [vmem:[%s520 + $0x20] sm:$0xff]
                  %527 = vst [vmem:[%s521 + $0x10] sm:$0xff] %v526
                  %v528 = vld [vmem:[%s520 + $0x30] sm:$0xff]
                  %529 = vst [vmem:[%s521 + $0x18] sm:$0xff] %v528
                  %v530 = vld [vmem:[%s520 + $0x40] sm:$0xff]
                  %531 = vst [vmem:[%s521 + $0x20] sm:$0xff] %v530
                  %v532 = vld [vmem:[%s520 + $0x50] sm:$0xff]
                  %533 = vst [vmem:[%s521 + $0x28] sm:$0xff] %v532
                  %v534 = vld [vmem:[%s520 + $0x60] sm:$0xff]
                  %535 = vst [vmem:[%s521 + $0x30] sm:$0xff] %v534
                  %v536 = vld [vmem:[%s520 + $0x70] sm:$0xff]
                  %537 = vst [vmem:[%s521 + $0x38] sm:$0xff] %v536
                  %v538 = vld [vmem:[%s520 + $0x80] sm:$0xff]
                  %539 = vst [vmem:[%s521 + $0x40] sm:$0xff] %v538
                  %v540 = vld [vmem:[%s520 + $0x90] sm:$0xff]
                  %541 = vst [vmem:[%s521 + $0x48] sm:$0xff] %v540
                  %v542 = vld [vmem:[%s520 + $0xa0] sm:$0xff]
                  %543 = vst [vmem:[%s521 + $0x50] sm:$0xff] %v542
                  %v544 = vld [vmem:[%s520 + $0xb0] sm:$0xff]
                  %545 = vst [vmem:[%s521 + $0x58] sm:$0xff] %v544
                  %v546 = vld [vmem:[%s520 + $0xc0] sm:$0xff]
                  %547 = vst [vmem:[%s521 + $0x60] sm:$0xff] %v546
                  %v548 = vld [vmem:[%s520 + $0xd0] sm:$0xff]
                  %549 = vst [vmem:[%s521 + $0x68] sm:$0xff] %v548
                  %v550 = vld [vmem:[%s520 + $0xe0] sm:$0xff]
                  %551 = vst [vmem:[%s521 + $0x70] sm:$0xff] %v550
                  %v552 = vld [vmem:[%s520 + $0xf0] sm:$0xff]
                  %553 = vst [vmem:[%s521 + $0x78] sm:$0xff] %v552
                  %v554 = vld [vmem:[%s520 + $0x100] sm:$0xff]
                  %555 = vst [vmem:[%s521 + $0x80] sm:$0xff] %v554
                  %v556 = vld [vmem:[%s520 + $0x110] sm:$0xff]
                  %557 = vst [vmem:[%s521 + $0x88] sm:$0xff] %v556
                  %v558 = vld [vmem:[%s520 + $0x120] sm:$0xff]
                  %559 = vst [vmem:[%s521 + $0x90] sm:$0xff] %v558
                  %v560 = vld [vmem:[%s520 + $0x130] sm:$0xff]
                  %561 = vst [vmem:[%s521 + $0x98] sm:$0xff] %v560
                  %v562 = vld [vmem:[%s520 + $0x140] sm:$0xff]
                  %563 = vst [vmem:[%s521 + $0xa0] sm:$0xff] %v562
                  %v564 = vld [vmem:[%s520 + $0x150] sm:$0xff]
                  %565 = vst [vmem:[%s521 + $0xa8] sm:$0xff] %v564
                  %v566 = vld [vmem:[%s520 + $0x160] sm:$0xff]
                  %567 = vst [vmem:[%s521 + $0xb0] sm:$0xff] %v566
                  %v568 = vld [vmem:[%s520 + $0x170] sm:$0xff]
                  %569 = vst [vmem:[%s521 + $0xb8] sm:$0xff] %v568
                  %v570 = vld [vmem:[%s520 + $0x180] sm:$0xff]
                  %571 = vst [vmem:[%s521 + $0xc0] sm:$0xff] %v570
                  %v572 = vld [vmem:[%s520 + $0x190] sm:$0xff]
                  %573 = vst [vmem:[%s521 + $0xc8] sm:$0xff] %v572
                  %v574 = vld [vmem:[%s520 + $0x1a0] sm:$0xff]
                  %575 = vst [vmem:[%s521 + $0xd0] sm:$0xff] %v574
                  %v576 = vld [vmem:[%s520 + $0x1b0] sm:$0xff]
                  %577 = vst [vmem:[%s521 + $0xd8] sm:$0xff] %v576
                $region104: #{convnet_forward.1} parent=98 // loop_footer
                  %s519 = sadd.s32 1, %s515
                $region105: #{convnet_forward.1} parent=98 // loop_footer_branch
                  %514 = sbr.rel target = $region101
                $region106: #{convnet_forward.1} parent=98 // loop_exit
                  _
              $region99: #{convnet_forward.1} parent=83 // pred_fallthru
                _
              // Predicated region
              $region107: #{convnet_forward.1} parent=83 // pred_check
                _
              $region108: #{convnet_forward.1} parent=83 // pred_check_branch
                %579 = sbr.rel target = $region110
              $region109: #{convnet_forward.1} parent=83 // pred_region
                _
              $region110: #{convnet_forward.1} parent=83 // pred_fallthru
                _
            $region84: #{convnet_forward.1} parent=79 // pred_fallthru
              _
            // Predicated region
            $region85: #{convnet_forward.1} parent=79 // pred_check
              _
            $region86: #{convnet_forward.1} parent=79 // pred_check_branch
              %445 = sbr.rel target = $region88
            $region87: #{convnet_forward.1} parent=79 // pred_region
              %s447 = ssub.s32 256, 1
              loop: start=0, step=1, limit=1
              $region89: #{convnet_forward.1} parent=87 // loop_pre_header
                _
              $region90: #{convnet_forward.1} parent=87 // loop_header
                %s449 = sphi 0, %s453
                %p450 = scmp.ge.s32.totalorder %s449, 1
                %s454 = sphi %s439, %s439
                %s455 = sphi %s437, %s437
              $region91: #{convnet_forward.1} parent=87 // loop_header_branch
                %452 = sbr.rel (%p450) target = $region95
              $region92: #{convnet_forward.1} parent=87 // loop_body
                %v456 = vld [vmem:[%s454] sm:%s447]
                %457 = vst [vmem:[%s455] sm:%s447] %v456
                %v458 = vld [vmem:[%s454 + $0x10] sm:%s447]
                %459 = vst [vmem:[%s455 + $0x8] sm:%s447] %v458
                %v460 = vld [vmem:[%s454 + $0x20] sm:%s447]
                %461 = vst [vmem:[%s455 + $0x10] sm:%s447] %v460
                %v462 = vld [vmem:[%s454 + $0x30] sm:%s447]
                %463 = vst [vmem:[%s455 + $0x18] sm:%s447] %v462
                %v464 = vld [vmem:[%s454 + $0x40] sm:%s447]
                %465 = vst [vmem:[%s455 + $0x20] sm:%s447] %v464
                %v466 = vld [vmem:[%s454 + $0x50] sm:%s447]
                %467 = vst [vmem:[%s455 + $0x28] sm:%s447] %v466
                %v468 = vld [vmem:[%s454 + $0x60] sm:%s447]
                %469 = vst [vmem:[%s455 + $0x30] sm:%s447] %v468
                %v470 = vld [vmem:[%s454 + $0x70] sm:%s447]
                %471 = vst [vmem:[%s455 + $0x38] sm:%s447] %v470
                %v472 = vld [vmem:[%s454 + $0x80] sm:%s447]
                %473 = vst [vmem:[%s455 + $0x40] sm:%s447] %v472
                %v474 = vld [vmem:[%s454 + $0x90] sm:%s447]
                %475 = vst [vmem:[%s455 + $0x48] sm:%s447] %v474
                %v476 = vld [vmem:[%s454 + $0xa0] sm:%s447]
                %477 = vst [vmem:[%s455 + $0x50] sm:%s447] %v476
                %v478 = vld [vmem:[%s454 + $0xb0] sm:%s447]
                %479 = vst [vmem:[%s455 + $0x58] sm:%s447] %v478
                %v480 = vld [vmem:[%s454 + $0xc0] sm:%s447]
                %481 = vst [vmem:[%s455 + $0x60] sm:%s447] %v480
                %v482 = vld [vmem:[%s454 + $0xd0] sm:%s447]
                %483 = vst [vmem:[%s455 + $0x68] sm:%s447] %v482
                %v484 = vld [vmem:[%s454 + $0xe0] sm:%s447]
                %485 = vst [vmem:[%s455 + $0x70] sm:%s447] %v484
                %v486 = vld [vmem:[%s454 + $0xf0] sm:%s447]
                %487 = vst [vmem:[%s455 + $0x78] sm:%s447] %v486
                %v488 = vld [vmem:[%s454 + $0x100] sm:%s447]
                %489 = vst [vmem:[%s455 + $0x80] sm:%s447] %v488
                %v490 = vld [vmem:[%s454 + $0x110] sm:%s447]
                %491 = vst [vmem:[%s455 + $0x88] sm:%s447] %v490
                %v492 = vld [vmem:[%s454 + $0x120] sm:%s447]
                %493 = vst [vmem:[%s455 + $0x90] sm:%s447] %v492
                %v494 = vld [vmem:[%s454 + $0x130] sm:%s447]
                %495 = vst [vmem:[%s455 + $0x98] sm:%s447] %v494
                %v496 = vld [vmem:[%s454 + $0x140] sm:%s447]
                %497 = vst [vmem:[%s455 + $0xa0] sm:%s447] %v496
                %v498 = vld [vmem:[%s454 + $0x150] sm:%s447]
                %499 = vst [vmem:[%s455 + $0xa8] sm:%s447] %v498
                %v500 = vld [vmem:[%s454 + $0x160] sm:%s447]
                %501 = vst [vmem:[%s455 + $0xb0] sm:%s447] %v500
                %v502 = vld [vmem:[%s454 + $0x170] sm:%s447]
                %503 = vst [vmem:[%s455 + $0xb8] sm:%s447] %v502
                %v504 = vld [vmem:[%s454 + $0x180] sm:%s447]
                %505 = vst [vmem:[%s455 + $0xc0] sm:%s447] %v504
                %v506 = vld [vmem:[%s454 + $0x190] sm:%s447]
                %507 = vst [vmem:[%s455 + $0xc8] sm:%s447] %v506
                %v508 = vld [vmem:[%s454 + $0x1a0] sm:%s447]
                %509 = vst [vmem:[%s455 + $0xd0] sm:%s447] %v508
                %v510 = vld [vmem:[%s454 + $0x1b0] sm:%s447]
                %511 = vst [vmem:[%s455 + $0xd8] sm:%s447] %v510
              $region93: #{convnet_forward.1} parent=87 // loop_footer
                %s453 = sadd.s32 1, %s449
              $region94: #{convnet_forward.1} parent=87 // loop_footer_branch
                %448 = sbr.rel target = $region90
              $region95: #{convnet_forward.1} parent=87 // loop_exit
                _
            $region88: #{convnet_forward.1} parent=79 // pred_fallthru
              _
          $region80: #{convnet_forward.1} parent=75 // pred_fallthru
            _
          %580 = vnop
        $region76: #{convnet_forward.1} parent=71 // pred_fallthru
          _
      $region72: #{convnet_forward.1} parent=5 // pred_fallthru
        _
      %p581 = scmp.le.s32.totalorder 1, %s24
      %p582 = scmp.lt.s32.totalorder %s24, 3
      %p583 = pnand %p581, %p582
      %p584 = pneg %p583
      // Predicated region
      $region111: #{convnet_forward.1} parent=5 // pred_check
        _
      $region112: #{convnet_forward.1} parent=5 // pred_check_branch
        %586 = sbr.rel (%p583) target = $region114
      $region113: #{convnet_forward.1} parent=5 // pred_region
        %s587 = ssub.s32 %s24, 1
        %s588 = sand.u32 %s37, 1
        %s589 = sand.u32 %s37, 1
        %s590 = smul.addr %s589, 224
        %s591 = scalar_lea.vmem [#allocation2], %s590
        // Predicated region
        $region115: #{convnet_forward.1} parent=113 // pred_check
          %p592 = pneg %p50
        $region116: #{convnet_forward.1} parent=113 // pred_check_branch
          %594 = sbr.rel (%p592) target = $region118
        $region117: #{convnet_forward.1} parent=113 // pred_region
          _
        $region118: #{convnet_forward.1} parent=113 // pred_fallthru
          _
        %s595 = sand.u32 %s37, 1
        %s596 = sand.u32 %s37, 1
        %s597 = smul.addr %s596, 224
        %s598 = scalar_lea.vmem [#allocation2], %s597
        %p599 = pneg %p50
        %p600 = pneg %p47
        %p601 = pneg %p71
        %p602 = pneg %p68
        %p603 = pneg %p92
        %p604 = pneg %p89
        %p605 = pneg %p113
        %p606 = pneg %p110
        %p607 = pneg %p134
        %p608 = pneg %p131
        %p609 = pneg %p155
        %p610 = pneg %p152
        %p611 = pneg %p176
        %p612 = pneg %p173
        %p613 = pneg %p197
        %p614 = pneg %p194
        %p615 = pneg %p218
        %p616 = pneg %p215
        %p617 = pneg %p239
        %p618 = pneg %p236
        %p619 = pneg %p260
        %p620 = pneg %p257
        %p621 = pneg %p281
        %p622 = pneg %p278
        %p623 = pneg %p302
        %p624 = pneg %p299
        %p625 = pneg %p323
        %p626 = pneg %p320
        %p627 = pneg %p344
        %p628 = pneg %p341
        %p629 = pneg %p370
        %p630 = pneg %p367
        %s631 = sand.u32 %s357, 1
        %s632 = scalar_lea.sflag [#allocation4], %s631
        %s633 = sand.u32 %s357, 1
        %s634 = smul.addr %s633, 8
        %s635 = scalar_lea.vmem [#allocation3], %s634
        %v637 = vld [vmem:[%s591] sm:$0xff]
        %v638 = vld [vmem:[%s591 + $0x8] sm:$0xff]
        %v639 = vld [vmem:[%s591 + $0x10] sm:$0xff]
        %v640 = vld [vmem:[%s591 + $0x18] sm:$0xff]
        %v641 = vld [vmem:[%s591 + $0x20] sm:$0xff]
        %v642 = vld [vmem:[%s591 + $0x28] sm:$0xff]
        %v643 = vld [vmem:[%s591 + $0x30] sm:$0xff]
        %v644 = vld [vmem:[%s591 + $0x38] sm:$0xff]
        %v645 = vld [vmem:[%s591 + $0x40] sm:$0xff]
        %v646 = vld [vmem:[%s591 + $0x48] sm:$0xff]
        %v647 = vld [vmem:[%s591 + $0x50] sm:$0xff]
        %v648 = vld [vmem:[%s591 + $0x58] sm:$0xff]
        %v649 = vld [vmem:[%s591 + $0x60] sm:$0xff]
        %v650 = vld [vmem:[%s591 + $0x68] sm:$0xff]
        %v651 = vld [vmem:[%s591 + $0x70] sm:$0xff]
        %v652 = vld [vmem:[%s591 + $0x78] sm:$0xff]
        %v653 = vld [vmem:[%s591 + $0x80] sm:$0xff]
        %v654 = vld [vmem:[%s591 + $0x88] sm:$0xff]
        %v655 = vld [vmem:[%s591 + $0x90] sm:$0xff]
        %v656 = vld [vmem:[%s591 + $0x98] sm:$0xff]
        %v657 = vld [vmem:[%s591 + $0xa0] sm:$0xff]
        %v658 = vld [vmem:[%s591 + $0xa8] sm:$0xff]
        %v659 = vld [vmem:[%s591 + $0xb0] sm:$0xff]
        %v660 = vld [vmem:[%s591 + $0xb8] sm:$0xff]
        %v661 = vld [vmem:[%s591 + $0xc0] sm:$0xff]
        %v662 = vld [vmem:[%s591 + $0xc8] sm:$0xff]
        %v663 = vld [vmem:[%s591 + $0xd0] sm:$0xff]
        %v664 = vld [vmem:[%s591 + $0xd8] sm:$0xff]
        %v665 = vpack.c.bf16 %v637, %v637
        %v666 = vpack.c.bf16 %v638, %v638
        %v667 = vpack.c.bf16 %v639, %v639
        %v668 = vpack.c.bf16 %v640, %v640
        %v669 = vpack.c.bf16 %v641, %v641
        %v670 = vpack.c.bf16 %v642, %v642
        %v671 = vpack.c.bf16 %v643, %v643
        %v672 = vpack.c.bf16 %v644, %v644
        %v673 = vpack.c.bf16 %v645, %v645
        %v674 = vpack.c.bf16 %v646, %v646
        %v675 = vpack.c.bf16 %v647, %v647
        %v676 = vpack.c.bf16 %v648, %v648
        %v677 = vpack.c.bf16 %v649, %v649
        %v678 = vpack.c.bf16 %v650, %v650
        %v679 = vpack.c.bf16 %v651, %v651
        %v680 = vpack.c.bf16 %v652, %v652
        %v681 = vpack.c.bf16 %v653, %v653
        %v682 = vpack.c.bf16 %v654, %v654
        %v683 = vpack.c.bf16 %v655, %v655
        %v684 = vpack.c.bf16 %v656, %v656
        %v685 = vpack.c.bf16 %v657, %v657
        %v686 = vpack.c.bf16 %v658, %v658
        %v687 = vpack.c.bf16 %v659, %v659
        %v688 = vpack.c.bf16 %v660, %v660
        %v689 = vpack.c.bf16 %v661, %v661
        %v690 = vpack.c.bf16 %v662, %v662
        %v691 = vpack.c.bf16 %v663, %v663
        %v692 = vpack.c.bf16 %v664, %v664
        %v717 = vunpack.c.l.b16 %v666
        %v718 = vunpack.c.l.b16 %v667
        %v719 = vunpack.c.l.b16 %v668
        %v720 = vunpack.c.l.b16 %v669
        %v721 = vunpack.c.l.b16 %v670
        %v722 = vunpack.c.l.b16 %v671
        %v723 = vunpack.c.l.b16 %v672
        %v724 = vunpack.c.l.b16 %v673
        %v725 = vunpack.c.l.b16 %v674
        %v726 = vunpack.c.l.b16 %v675
        %v727 = vunpack.c.l.b16 %v676
        %v728 = vunpack.c.l.b16 %v677
        %v729 = vunpack.c.l.b16 %v678
        %v730 = vunpack.c.l.b16 %v679
        %v731 = vunpack.c.l.b16 %v680
        %v732 = vunpack.c.l.b16 %v681
        %v733 = vunpack.c.l.b16 %v682
        %v734 = vunpack.c.l.b16 %v683
        %v735 = vunpack.c.l.b16 %v684
        %v736 = vunpack.c.l.b16 %v685
        %v737 = vunpack.c.l.b16 %v686
        %v738 = vunpack.c.l.b16 %v687
        %v739 = vunpack.c.l.b16 %v688
        %v740 = vunpack.c.l.b16 %v689
        %v741 = vpack.c.b16 %v717, %v717
        %v742 = vpack.c.b16 %v718, %v718
        %v743 = vpack.c.b16 %v719, %v719
        %v744 = vpack.c.b16 %v720, %v720
        %v745 = vpack.c.b16 %v721, %v721
        %v746 = vpack.c.b16 %v722, %v722
        %v747 = vpack.c.b16 %v723, %v723
        %v748 = vpack.c.b16 %v724, %v724
        %v749 = vpack.c.b16 %v725, %v725
        %v750 = vpack.c.b16 %v726, %v726
        %v751 = vpack.c.b16 %v727, %v727
        %v752 = vpack.c.b16 %v728, %v728
        %v753 = vpack.c.b16 %v729, %v729
        %v754 = vpack.c.b16 %v730, %v730
        %v755 = vpack.c.b16 %v731, %v731
        %v756 = vpack.c.b16 %v732, %v732
        %v757 = vpack.c.b16 %v733, %v733
        %v758 = vpack.c.b16 %v734, %v734
        %v759 = vpack.c.b16 %v735, %v735
        %v760 = vpack.c.b16 %v736, %v736
        %v761 = vpack.c.b16 %v737, %v737
        %v762 = vpack.c.b16 %v738, %v738
        %v763 = vpack.c.b16 %v739, %v739
        %v764 = vpack.c.b16 %v740, %v740
        %765 = vrot.lane.b32.xlu0 %v741, 28
        %v766 = vpop.permute.xlu0 %765
        %767 = vrot.lane.b32.xlu0 %v742, 28
        %v768 = vpop.permute.xlu0 %767
        %769 = vrot.lane.b32.xlu0 %v743, 28
        %v770 = vpop.permute.xlu0 %769
        %771 = vrot.lane.b32.xlu0 %v744, 28
        %v772 = vpop.permute.xlu0 %771
        %773 = vrot.lane.b32.xlu0 %v745, 28
        %v774 = vpop.permute.xlu0 %773
        %775 = vrot.lane.b32.xlu0 %v746, 28
        %v776 = vpop.permute.xlu0 %775
        %777 = vrot.lane.b32.xlu0 %v747, 28
        %v778 = vpop.permute.xlu0 %777
        %779 = vrot.lane.b32.xlu0 %v748, 28
        %v780 = vpop.permute.xlu0 %779
        %781 = vrot.lane.b32.xlu0 %v749, 28
        %v782 = vpop.permute.xlu0 %781
        %783 = vrot.lane.b32.xlu0 %v750, 28
        %v784 = vpop.permute.xlu0 %783
        %785 = vrot.lane.b32.xlu0 %v751, 28
        %v786 = vpop.permute.xlu0 %785
        %787 = vrot.lane.b32.xlu0 %v752, 28
        %v788 = vpop.permute.xlu0 %787
        %789 = vrot.lane.b32.xlu0 %v753, 28
        %v790 = vpop.permute.xlu0 %789
        %791 = vrot.lane.b32.xlu0 %v754, 28
        %v792 = vpop.permute.xlu0 %791
        %793 = vrot.lane.b32.xlu0 %v755, 28
        %v794 = vpop.permute.xlu0 %793
        %795 = vrot.lane.b32.xlu0 %v756, 28
        %v796 = vpop.permute.xlu0 %795
        %797 = vrot.lane.b32.xlu0 %v757, 28
        %v798 = vpop.permute.xlu0 %797
        %799 = vrot.lane.b32.xlu0 %v758, 28
        %v800 = vpop.permute.xlu0 %799
        %801 = vrot.lane.b32.xlu0 %v759, 28
        %v802 = vpop.permute.xlu0 %801
        %803 = vrot.lane.b32.xlu0 %v760, 28
        %v804 = vpop.permute.xlu0 %803
        %805 = vrot.lane.b32.xlu0 %v761, 28
        %v806 = vpop.permute.xlu0 %805
        %807 = vrot.lane.b32.xlu0 %v762, 28
        %v808 = vpop.permute.xlu0 %807
        %809 = vrot.lane.b32.xlu0 %v763, 28
        %v810 = vpop.permute.xlu0 %809
        %811 = vrot.lane.b32.xlu0 %v764, 28
        %v812 = vpop.permute.xlu0 %811
        %v814 = vunpack.c.l.b16 %v690
        %v815 = vpack.c.b16 %v814, %v814
        %816 = vrot.lane.b32.xlu0 %v742, 56
        %v817 = vpop.permute.xlu0 %816
        %818 = vrot.lane.b32.xlu0 %v743, 56
        %v819 = vpop.permute.xlu0 %818
        %820 = vrot.lane.b32.xlu0 %v744, 56
        %v821 = vpop.permute.xlu0 %820
        %822 = vrot.lane.b32.xlu0 %v745, 56
        %v823 = vpop.permute.xlu0 %822
        %824 = vrot.lane.b32.xlu0 %v746, 56
        %v825 = vpop.permute.xlu0 %824
        %826 = vrot.lane.b32.xlu0 %v747, 56
        %v827 = vpop.permute.xlu0 %826
        %828 = vrot.lane.b32.xlu0 %v748, 56
        %v829 = vpop.permute.xlu0 %828
        %830 = vrot.lane.b32.xlu0 %v749, 56
        %v831 = vpop.permute.xlu0 %830
        %832 = vrot.lane.b32.xlu0 %v750, 56
        %v833 = vpop.permute.xlu0 %832
        %834 = vrot.lane.b32.xlu0 %v751, 56
        %v835 = vpop.permute.xlu0 %834
        %836 = vrot.lane.b32.xlu0 %v752, 56
        %v837 = vpop.permute.xlu0 %836
        %838 = vrot.lane.b32.xlu0 %v753, 56
        %v839 = vpop.permute.xlu0 %838
        %840 = vrot.lane.b32.xlu0 %v754, 56
        %v841 = vpop.permute.xlu0 %840
        %842 = vrot.lane.b32.xlu0 %v755, 56
        %v843 = vpop.permute.xlu0 %842
        %844 = vrot.lane.b32.xlu0 %v756, 56
        %v845 = vpop.permute.xlu0 %844
        %846 = vrot.lane.b32.xlu0 %v757, 56
        %v847 = vpop.permute.xlu0 %846
        %848 = vrot.lane.b32.xlu0 %v758, 56
        %v849 = vpop.permute.xlu0 %848
        %850 = vrot.lane.b32.xlu0 %v759, 56
        %v851 = vpop.permute.xlu0 %850
        %852 = vrot.lane.b32.xlu0 %v760, 56
        %v853 = vpop.permute.xlu0 %852
        %854 = vrot.lane.b32.xlu0 %v761, 56
        %v855 = vpop.permute.xlu0 %854
        %856 = vrot.lane.b32.xlu0 %v762, 56
        %v857 = vpop.permute.xlu0 %856
        %858 = vrot.lane.b32.xlu0 %v763, 56
        %v859 = vpop.permute.xlu0 %858
        %860 = vrot.lane.b32.xlu0 %v764, 56
        %v861 = vpop.permute.xlu0 %860
        %862 = vrot.lane.b32.xlu0 %v815, 56
        %v863 = vpop.permute.xlu0 %862
        %v865 = vunpack.c.l.b16 %v691
        %v866 = vpack.c.b16 %v865, %v865
        %867 = vrot.lane.b32.xlu0 %v743, 84
        %v868 = vpop.permute.xlu0 %867
        %869 = vrot.lane.b32.xlu0 %v744, 84
        %v870 = vpop.permute.xlu0 %869
        %871 = vrot.lane.b32.xlu0 %v745, 84
        %v872 = vpop.permute.xlu0 %871
        %873 = vrot.lane.b32.xlu0 %v746, 84
        %v874 = vpop.permute.xlu0 %873
        %875 = vrot.lane.b32.xlu0 %v747, 84
        %v876 = vpop.permute.xlu0 %875
        %877 = vrot.lane.b32.xlu0 %v748, 84
        %v878 = vpop.permute.xlu0 %877
        %879 = vrot.lane.b32.xlu0 %v749, 84
        %v880 = vpop.permute.xlu0 %879
        %881 = vrot.lane.b32.xlu0 %v750, 84
        %v882 = vpop.permute.xlu0 %881
        %883 = vrot.lane.b32.xlu0 %v751, 84
        %v884 = vpop.permute.xlu0 %883
        %885 = vrot.lane.b32.xlu0 %v752, 84
        %v886 = vpop.permute.xlu0 %885
        %887 = vrot.lane.b32.xlu0 %v753, 84
        %v888 = vpop.permute.xlu0 %887
        %889 = vrot.lane.b32.xlu0 %v754, 84
        %v890 = vpop.permute.xlu0 %889
        %891 = vrot.lane.b32.xlu0 %v755, 84
        %v892 = vpop.permute.xlu0 %891
        %893 = vrot.lane.b32.xlu0 %v756, 84
        %v894 = vpop.permute.xlu0 %893
        %895 = vrot.lane.b32.xlu0 %v757, 84
        %v896 = vpop.permute.xlu0 %895
        %897 = vrot.lane.b32.xlu0 %v758, 84
        %v898 = vpop.permute.xlu0 %897
        %899 = vrot.lane.b32.xlu0 %v759, 84
        %v900 = vpop.permute.xlu0 %899
        %901 = vrot.lane.b32.xlu0 %v760, 84
        %v902 = vpop.permute.xlu0 %901
        %903 = vrot.lane.b32.xlu0 %v761, 84
        %v904 = vpop.permute.xlu0 %903
        %905 = vrot.lane.b32.xlu0 %v762, 84
        %v906 = vpop.permute.xlu0 %905
        %907 = vrot.lane.b32.xlu0 %v763, 84
        %v908 = vpop.permute.xlu0 %907
        %909 = vrot.lane.b32.xlu0 %v764, 84
        %v910 = vpop.permute.xlu0 %909
        %911 = vrot.lane.b32.xlu0 %v815, 84
        %v912 = vpop.permute.xlu0 %911
        %913 = vrot.lane.b32.xlu0 %v866, 84
        %v914 = vpop.permute.xlu0 %913
        %v916 = vunpack.c.l.b16 %v692
        %v917 = vpack.c.b16 %v916, %v916
        %918 = vrot.lane.b32.xlu0 %v744, 112
        %v919 = vpop.permute.xlu0 %918
        %920 = vrot.lane.b32.xlu0 %v745, 112
        %v921 = vpop.permute.xlu0 %920
        %922 = vrot.lane.b32.xlu0 %v746, 112
        %v923 = vpop.permute.xlu0 %922
        %924 = vrot.lane.b32.xlu0 %v747, 112
        %v925 = vpop.permute.xlu0 %924
        %926 = vrot.lane.b32.xlu0 %v748, 112
        %v927 = vpop.permute.xlu0 %926
        %928 = vrot.lane.b32.xlu0 %v749, 112
        %v929 = vpop.permute.xlu0 %928
        %930 = vrot.lane.b32.xlu0 %v750, 112
        %v931 = vpop.permute.xlu0 %930
        %932 = vrot.lane.b32.xlu0 %v751, 112
        %v933 = vpop.permute.xlu0 %932
        %934 = vrot.lane.b32.xlu0 %v752, 112
        %v935 = vpop.permute.xlu0 %934
        %936 = vrot.lane.b32.xlu0 %v753, 112
        %v937 = vpop.permute.xlu0 %936
        %938 = vrot.lane.b32.xlu0 %v754, 112
        %v939 = vpop.permute.xlu0 %938
        %940 = vrot.lane.b32.xlu0 %v755, 112
        %v941 = vpop.permute.xlu0 %940
        %942 = vrot.lane.b32.xlu0 %v756, 112
        %v943 = vpop.permute.xlu0 %942
        %944 = vrot.lane.b32.xlu0 %v757, 112
        %v945 = vpop.permute.xlu0 %944
        %946 = vrot.lane.b32.xlu0 %v758, 112
        %v947 = vpop.permute.xlu0 %946
        %948 = vrot.lane.b32.xlu0 %v759, 112
        %v949 = vpop.permute.xlu0 %948
        %950 = vrot.lane.b32.xlu0 %v760, 112
        %v951 = vpop.permute.xlu0 %950
        %952 = vrot.lane.b32.xlu0 %v761, 112
        %v953 = vpop.permute.xlu0 %952
        %954 = vrot.lane.b32.xlu0 %v762, 112
        %v955 = vpop.permute.xlu0 %954
        %956 = vrot.lane.b32.xlu0 %v763, 112
        %v957 = vpop.permute.xlu0 %956
        %958 = vrot.lane.b32.xlu0 %v764, 112
        %v959 = vpop.permute.xlu0 %958
        %960 = vrot.lane.b32.xlu0 %v815, 112
        %v961 = vpop.permute.xlu0 %960
        %962 = vrot.lane.b32.xlu0 %v866, 112
        %v963 = vpop.permute.xlu0 %962
        %964 = vrot.lane.b32.xlu0 %v917, 112
        %v965 = vpop.permute.xlu0 %964
        %vm966 = vcmask 228352
        %v969 = vsel %vm966, %v665, %v766
        %v972 = vsel %vm966, %v666, %v768
        %v975 = vsel %vm966, %v667, %v770
        %v978 = vsel %vm966, %v668, %v772
        %v981 = vsel %vm966, %v669, %v774
        %v984 = vsel %vm966, %v670, %v776
        %v987 = vsel %vm966, %v671, %v778
        %v990 = vsel %vm966, %v672, %v780
        %v993 = vsel %vm966, %v673, %v782
        %v996 = vsel %vm966, %v674, %v784
        %v999 = vsel %vm966, %v675, %v786
        %v1002 = vsel %vm966, %v676, %v788
        %v1005 = vsel %vm966, %v677, %v790
        %v1008 = vsel %vm966, %v678, %v792
        %v1011 = vsel %vm966, %v679, %v794
        %v1014 = vsel %vm966, %v680, %v796
        %v1017 = vsel %vm966, %v681, %v798
        %v1020 = vsel %vm966, %v682, %v800
        %v1023 = vsel %vm966, %v683, %v802
        %v1026 = vsel %vm966, %v684, %v804
        %v1029 = vsel %vm966, %v685, %v806
        %v1032 = vsel %vm966, %v686, %v808
        %v1035 = vsel %vm966, %v687, %v810
        %v1038 = vsel %vm966, %v688, %v812
        %vm1039 = vcmask 457728
        %v1041 = vsel %vm1039, %v969, %v817
        %v1043 = vsel %vm1039, %v972, %v819
        %v1045 = vsel %vm1039, %v975, %v821
        %v1047 = vsel %vm1039, %v978, %v823
        %v1049 = vsel %vm1039, %v981, %v825
        %v1051 = vsel %vm1039, %v984, %v827
        %v1053 = vsel %vm1039, %v987, %v829
        %v1055 = vsel %vm1039, %v990, %v831
        %v1057 = vsel %vm1039, %v993, %v833
        %v1059 = vsel %vm1039, %v996, %v835
        %v1061 = vsel %vm1039, %v999, %v837
        %v1063 = vsel %vm1039, %v1002, %v839
        %v1065 = vsel %vm1039, %v1005, %v841
        %v1067 = vsel %vm1039, %v1008, %v843
        %v1069 = vsel %vm1039, %v1011, %v845
        %v1071 = vsel %vm1039, %v1014, %v847
        %v1073 = vsel %vm1039, %v1017, %v849
        %v1075 = vsel %vm1039, %v1020, %v851
        %v1077 = vsel %vm1039, %v1023, %v853
        %v1079 = vsel %vm1039, %v1026, %v855
        %v1081 = vsel %vm1039, %v1029, %v857
        %v1083 = vsel %vm1039, %v1032, %v859
        %v1085 = vsel %vm1039, %v1035, %v861
        %v1087 = vsel %vm1039, %v1038, %v863
        %vm1088 = vcmask 687104
        %v1090 = vsel %vm1088, %v1041, %v868
        %v1092 = vsel %vm1088, %v1043, %v870
        %v1094 = vsel %vm1088, %v1045, %v872
        %v1096 = vsel %vm1088, %v1047, %v874
        %v1098 = vsel %vm1088, %v1049, %v876
        %v1100 = vsel %vm1088, %v1051, %v878
        %v1102 = vsel %vm1088, %v1053, %v880
        %v1104 = vsel %vm1088, %v1055, %v882
        %v1106 = vsel %vm1088, %v1057, %v884
        %v1108 = vsel %vm1088, %v1059, %v886
        %v1110 = vsel %vm1088, %v1061, %v888
        %v1112 = vsel %vm1088, %v1063, %v890
        %v1114 = vsel %vm1088, %v1065, %v892
        %v1116 = vsel %vm1088, %v1067, %v894
        %v1118 = vsel %vm1088, %v1069, %v896
        %v1120 = vsel %vm1088, %v1071, %v898
        %v1122 = vsel %vm1088, %v1073, %v900
        %v1124 = vsel %vm1088, %v1075, %v902
        %v1126 = vsel %vm1088, %v1077, %v904
        %v1128 = vsel %vm1088, %v1079, %v906
        %v1130 = vsel %vm1088, %v1081, %v908
        %v1132 = vsel %vm1088, %v1083, %v910
        %v1134 = vsel %vm1088, %v1085, %v912
        %v1136 = vsel %vm1088, %v1087, %v914
        %vm1137 = vcmask 916480
        %v1139 = vsel %vm1137, %v1090, %v919
        %v1141 = vsel %vm1137, %v1092, %v921
        %v1143 = vsel %vm1137, %v1094, %v923
        %v1145 = vsel %vm1137, %v1096, %v925
        %v1147 = vsel %vm1137, %v1098, %v927
        %v1149 = vsel %vm1137, %v1100, %v929
        %v1151 = vsel %vm1137, %v1102, %v931
        %v1153 = vsel %vm1137, %v1104, %v933
        %v1155 = vsel %vm1137, %v1106, %v935
        %v1157 = vsel %vm1137, %v1108, %v937
        %v1159 = vsel %vm1137, %v1110, %v939
        %v1161 = vsel %vm1137, %v1112, %v941
        %v1163 = vsel %vm1137, %v1114, %v943
        %v1165 = vsel %vm1137, %v1116, %v945
        %v1167 = vsel %vm1137, %v1118, %v947
        %v1169 = vsel %vm1137, %v1120, %v949
        %v1171 = vsel %vm1137, %v1122, %v951
        %v1173 = vsel %vm1137, %v1124, %v953
        %v1175 = vsel %vm1137, %v1126, %v955
        %v1177 = vsel %vm1137, %v1128, %v957
        %v1179 = vsel %vm1137, %v1130, %v959
        %v1181 = vsel %vm1137, %v1132, %v961
        %v1183 = vsel %vm1137, %v1134, %v963
        %v1185 = vsel %vm1137, %v1136, %v965
        %v1210 = vunpack.c.l.b16 %v1139
        %v1211 = vunpack.c.l.b16 %v919
        %v1212 = vunpack.c.l.b16 %v1141
        %v1213 = vunpack.c.l.b16 %v921
        %v1214 = vunpack.c.l.b16 %v1143
        %v1215 = vunpack.c.l.b16 %v923
        %v1216 = vunpack.c.l.b16 %v1145
        %v1217 = vunpack.c.l.b16 %v925
        %v1218 = vunpack.c.l.b16 %v1147
        %v1219 = vunpack.c.l.b16 %v927
        %v1220 = vunpack.c.l.b16 %v1149
        %v1221 = vunpack.c.l.b16 %v929
        %v1222 = vunpack.c.l.b16 %v1151
        %v1223 = vunpack.c.l.b16 %v931
        %v1224 = vunpack.c.l.b16 %v1153
        %v1225 = vunpack.c.l.b16 %v933
        %v1226 = vunpack.c.l.b16 %v1155
        %v1227 = vunpack.c.l.b16 %v935
        %v1228 = vunpack.c.l.b16 %v1157
        %v1229 = vunpack.c.l.b16 %v937
        %v1230 = vunpack.c.l.b16 %v1159
        %v1231 = vunpack.c.l.b16 %v939
        %v1232 = vunpack.c.l.b16 %v1161
        %v1233 = vunpack.c.l.b16 %v941
        %v1234 = vunpack.c.l.b16 %v1163
        %v1235 = vunpack.c.l.b16 %v943
        %v1236 = vunpack.c.l.b16 %v1165
        %v1237 = vunpack.c.l.b16 %v945
        %v1238 = vunpack.c.l.b16 %v1167
        %v1239 = vunpack.c.l.b16 %v947
        %v1240 = vunpack.c.l.b16 %v1169
        %v1241 = vunpack.c.l.b16 %v949
        %v1242 = vunpack.c.l.b16 %v1171
        %v1243 = vunpack.c.l.b16 %v951
        %v1244 = vunpack.c.l.b16 %v1173
        %v1245 = vunpack.c.l.b16 %v953
        %v1246 = vunpack.c.l.b16 %v1175
        %v1247 = vunpack.c.l.b16 %v955
        %v1248 = vunpack.c.l.b16 %v1177
        %v1249 = vunpack.c.l.b16 %v957
        %v1250 = vunpack.c.l.b16 %v1179
        %v1251 = vunpack.c.l.b16 %v959
        %v1252 = vunpack.c.l.b16 %v1181
        %v1253 = vunpack.c.l.b16 %v961
        %v1254 = vunpack.c.l.b16 %v1183
        %v1255 = vunpack.c.l.b16 %v963
        %v1256 = vunpack.c.l.b16 %v1185
        %v1257 = vunpack.c.l.b16 %v965
        %v1258 = vld [vmem:[%s1] sm:$0xff]
        %v1259 = vld [vmem:[%s1 + $0x8] sm:$0xff]
        %v1260 = vld [vmem:[%s1 + $0x10] sm:$0xff]
        %v1261 = vld [vmem:[%s1 + $0x18] sm:$0xff]
        %v1262 = vld [vmem:[%s1 + $0x20] sm:$0xff]
        %v1263 = vld [vmem:[%s1 + $0x28] sm:$0xff]
        %v1264 = vld [vmem:[%s1 + $0x30] sm:$0xff]
        %v1265 = vld [vmem:[%s1 + $0x38] sm:$0xff]
        %v1266 = vld [vmem:[%s1 + $0x40] sm:$0xff]
        %v1267 = vld [vmem:[%s1 + $0x48] sm:$0xff]
        %v1268 = vld [vmem:[%s1 + $0x50] sm:$0xff]
        %v1269 = vld [vmem:[%s1 + $0x58] sm:$0xff]
        %v1270 = vld [vmem:[%s1 + $0x60] sm:$0xff]
        %v1271 = vld [vmem:[%s1 + $0x68] sm:$0xff]
        %v1272 = vld [vmem:[%s1 + $0x70] sm:$0xff]
        %v1273 = vld [vmem:[%s1 + $0x78] sm:$0xff]
        %v1274 = vld [vmem:[%s1 + $0x80] sm:$0xff]
        %v1275 = vld [vmem:[%s1 + $0x88] sm:$0x33]
        %v1276 = vld [vmem:[%s2] sm:$0x3]
        %v1278 = vperm.slane %v1276, 0
        %v1279 = vperm.slane %v1276, 1
        %v1282 = vpack.c.b16 %v1212, %v1210
        %v1283 = vpack.c.b16 %v1213, %v1211
        %v1284 = vpack.c.b16 %v1216, %v1214
        %v1285 = vpack.c.b16 %v1217, %v1215
        %v1286 = vpack.c.b16 %v1220, %v1218
        %v1287 = vpack.c.b16 %v1221, %v1219
        %v1288 = vpack.c.b16 %v1224, %v1222
        %v1289 = vpack.c.b16 %v1225, %v1223
        %v1290 = vpack.c.b16 %v1228, %v1226
        %v1291 = vpack.c.b16 %v1229, %v1227
        %v1292 = vpack.c.b16 %v1232, %v1230
        %v1293 = vpack.c.b16 %v1233, %v1231
        %v1294 = vpack.c.b16 %v1236, %v1234
        %v1295 = vpack.c.b16 %v1237, %v1235
        %v1296 = vpack.c.b16 %v1240, %v1238
        %v1297 = vpack.c.b16 %v1241, %v1239
        %v1298 = vpack.c.b16 %v1244, %v1242
        %v1299 = vpack.c.b16 %v1245, %v1243
        %v1300 = vpack.c.b16 %v1248, %v1246
        %v1301 = vpack.c.b16 %v1249, %v1247
        %v1302 = vpack.c.b16 %v1252, %v1250
        %v1303 = vpack.c.b16 %v1253, %v1251
        %v1304 = vpack.c.b16 %v1256, %v1254
        %v1305 = vpack.c.b16 %v1257, %v1255
        %v1336 = vunpack.c.l.b16 %v1258
        %v1337 = vunpack.c.h.b16 %v1258
        %v1338 = vunpack.c.l.b16 %v1259
        %v1339 = vunpack.c.h.b16 %v1259
        %v1340 = vunpack.c.l.b16 %v1260
        %v1341 = vunpack.c.h.b16 %v1260
        %v1342 = vunpack.c.l.b16 %v1261
        %v1343 = vunpack.c.h.b16 %v1261
        %v1344 = vunpack.c.l.b16 %v1262
        %v1345 = vunpack.c.h.b16 %v1262
        %v1346 = vunpack.c.l.b16 %v1263
        %v1347 = vunpack.c.h.b16 %v1263
        %v1348 = vunpack.c.l.b16 %v1264
        %v1349 = vunpack.c.h.b16 %v1264
        %v1350 = vunpack.c.l.b16 %v1265
        %v1351 = vunpack.c.h.b16 %v1265
        %v1352 = vunpack.c.l.b16 %v1266
        %v1353 = vunpack.c.h.b16 %v1266
        %v1354 = vunpack.c.l.b16 %v1267
        %v1355 = vunpack.c.h.b16 %v1267
        %v1356 = vunpack.c.l.b16 %v1268
        %v1357 = vunpack.c.h.b16 %v1268
        %v1358 = vunpack.c.l.b16 %v1269
        %v1359 = vunpack.c.h.b16 %v1269
        %v1360 = vunpack.c.l.b16 %v1270
        %v1361 = vunpack.c.h.b16 %v1270
        %v1362 = vunpack.c.l.b16 %v1271
        %v1363 = vunpack.c.h.b16 %v1271
        %v1364 = vunpack.c.l.b16 %v1272
        %v1365 = vunpack.c.h.b16 %v1272
        %v1366 = vunpack.c.l.b16 %v1273
        %v1367 = vunpack.c.h.b16 %v1273
        %v1368 = vunpack.c.l.b16 %v1274
        %v1369 = vunpack.c.h.b16 %v1274
        %v1370 = vunpack.c.l.b16 %v1275
        %v1371 = vunpack.c.h.b16 %v1275
        %v1372 = vpack.c.b16 %v1338, %v1336
        %v1373 = vpack.c.b16 %v1339, %v1337
        %v1374 = vpack.c.b16 %v1342, %v1340
        %v1375 = vpack.c.b16 %v1343, %v1341
        %v1376 = vpack.c.b16 %v1346, %v1344
        %v1377 = vpack.c.b16 %v1347, %v1345
        %v1378 = vpack.c.b16 %v1350, %v1348
        %v1379 = vpack.c.b16 %v1351, %v1349
        %v1380 = vpack.c.b16 %v1354, %v1352
        %v1381 = vpack.c.b16 %v1355, %v1353
        %v1382 = vpack.c.b16 %v1358, %v1356
        %v1383 = vpack.c.b16 %v1359, %v1357
        %v1384 = vpack.c.b16 %v1362, %v1360
        %v1385 = vpack.c.b16 %v1363, %v1361
        %v1386 = vpack.c.b16 %v1366, %v1364
        %v1387 = vpack.c.b16 %v1367, %v1365
        %v1388 = vpack.c.b16 %v1370, %v1368
        %v1389 = vpack.c.b16 %v1371, %v1369
        %vm1406 = vcmask 97280
        %v1408 = vsel %vm1406, %v1283, 0
        %v1411 = vsel %vm1406, %v1285, 0
        %v1414 = vsel %vm1406, %v1287, 0
        %v1417 = vsel %vm1406, %v1289, 0
        %v1420 = vsel %vm1406, %v1291, 0
        %v1423 = vsel %vm1406, %v1293, 0
        %v1426 = vsel %vm1406, %v1295, 0
        %v1429 = vsel %vm1406, %v1297, 0
        %v1432 = vsel %vm1406, %v1299, 0
        %v1435 = vsel %vm1406, %v1301, 0
        %v1438 = vsel %vm1406, %v1303, 0
        %v1441 = vsel %vm1406, %v1305, 0
        %vm1443 = vcmask 1045504
        %v1445 = vsel %vm1443, %v1388, 0
        %v1448 = vsel %vm1443, %v1389, 0
        %1450 = vmatpush.bf16.msra.mxu0 %v1386
        %1451 = vmatpush.bf16.msra.mxu0 %v1384
        %1452 = vmatpush.bf16.msra.mxu0 %v1382
        %1453 = vmatpush.bf16.msra.mxu0 %v1380
        %1454 = vmatpush.bf16.msra.mxu0 %v1378
        %1455 = vmatpush.bf16.msra.mxu0 %v1376
        %1456 = vmatpush.bf16.msra.mxu0 %v1374
        %1457 = vmatpush.bf16.msra.mxu0 %v1372
        %1458 = vmatmul.bf16.gmra.mxu0 %v1282
        %v1459 = vpop.f32.mrf.mxu0
        %v1460 = vadd.f32 %v1278, %v1459
        %v1461 = vpop.f32.mrf.mxu0
        %v1462 = vadd.f32 %v1278, %v1461
        %1463 = vmatmul.bf16.gmra.mxu0 %v1284
        %v1464 = vpop.f32.mrf.mxu0
        %v1465 = vadd.f32 %v1278, %v1464
        %v1466 = vpop.f32.mrf.mxu0
        %v1467 = vadd.f32 %v1278, %v1466
        %1468 = vmatmul.bf16.gmra.mxu0 %v1286
        %v1469 = vpop.f32.mrf.mxu0
        %v1470 = vadd.f32 %v1278, %v1469
        %v1471 = vpop.f32.mrf.mxu0
        %v1472 = vadd.f32 %v1278, %v1471
        %1473 = vmatmul.bf16.gmra.mxu0 %v1288
        %v1474 = vpop.f32.mrf.mxu0
        %v1475 = vadd.f32 %v1278, %v1474
        %v1476 = vpop.f32.mrf.mxu0
        %v1477 = vadd.f32 %v1278, %v1476
        %1478 = vmatmul.bf16.gmra.mxu0 %v1290
        %v1479 = vpop.f32.mrf.mxu0
        %v1480 = vadd.f32 %v1278, %v1479
        %v1481 = vpop.f32.mrf.mxu0
        %v1482 = vadd.f32 %v1278, %v1481
        %1483 = vmatmul.bf16.gmra.mxu0 %v1292
        %v1484 = vpop.f32.mrf.mxu0
        %v1485 = vadd.f32 %v1278, %v1484
        %v1486 = vpop.f32.mrf.mxu0
        %v1487 = vadd.f32 %v1278, %v1486
        %1488 = vmatmul.bf16.gmra.mxu0 %v1294
        %v1489 = vpop.f32.mrf.mxu0
        %v1490 = vadd.f32 %v1278, %v1489
        %v1491 = vpop.f32.mrf.mxu0
        %v1492 = vadd.f32 %v1278, %v1491
        %1493 = vmatmul.bf16.gmra.mxu0 %v1296
        %v1494 = vpop.f32.mrf.mxu0
        %v1495 = vadd.f32 %v1278, %v1494
        %v1496 = vpop.f32.mrf.mxu0
        %v1497 = vadd.f32 %v1278, %v1496
        %1498 = vmatmul.bf16.gmra.mxu0 %v1298
        %v1499 = vpop.f32.mrf.mxu0
        %v1500 = vadd.f32 %v1278, %v1499
        %v1501 = vpop.f32.mrf.mxu0
        %v1502 = vadd.f32 %v1278, %v1501
        %1503 = vmatmul.bf16.gmra.mxu0 %v1300
        %v1504 = vpop.f32.mrf.mxu0
        %v1505 = vadd.f32 %v1278, %v1504
        %v1506 = vpop.f32.mrf.mxu0
        %v1507 = vadd.f32 %v1278, %v1506
        %1508 = vmatmul.bf16.gmra.mxu0 %v1302
        %v1509 = vpop.f32.mrf.mxu0
        %v1510 = vadd.f32 %v1278, %v1509
        %v1511 = vpop.f32.mrf.mxu0
        %v1512 = vadd.f32 %v1278, %v1511
        %1513 = vmatmul.bf16.gmra.mxu0 %v1304
        %v1514 = vpop.f32.mrf.mxu0
        %v1515 = vadd.f32 %v1278, %v1514
        %v1516 = vpop.f32.mrf.mxu0
        %v1517 = vadd.f32 %v1278, %v1516
        %1518 = vdwg.mxu0
        %1519 = vmatpush.bf16.msra.mxu0 0
        %1520 = vmatpush.bf16.msra.mxu0 0
        %1521 = vmatpush.bf16.msra.mxu0 0
        %1522 = vmatpush.bf16.msra.mxu0 0
        %1523 = vmatpush.bf16.msra.mxu0 0
        %1524 = vmatpush.bf16.msra.mxu0 0
        %1525 = vmatpush.bf16.msra.mxu0 0
        %1526 = vmatpush.bf16.msra.mxu0 %v1445
        %1527 = vmatmul.bf16.gmra.mxu0 %v1408
        %v1528 = vpop.f32.mrf.mxu0
        %v1529 = vadd.f32 %v1460, %v1528
        %v1530 = vpop.f32.mrf.mxu0
        %v1531 = vadd.f32 %v1462, %v1530
        %1532 = vmatmul.bf16.gmra.mxu0 %v1411
        %v1533 = vpop.f32.mrf.mxu0
        %v1534 = vadd.f32 %v1465, %v1533
        %v1535 = vpop.f32.mrf.mxu0
        %v1536 = vadd.f32 %v1467, %v1535
        %1537 = vmatmul.bf16.gmra.mxu0 %v1414
        %v1538 = vpop.f32.mrf.mxu0
        %v1539 = vadd.f32 %v1470, %v1538
        %v1540 = vpop.f32.mrf.mxu0
        %v1541 = vadd.f32 %v1472, %v1540
        %1542 = vmatmul.bf16.gmra.mxu0 %v1417
        %v1543 = vpop.f32.mrf.mxu0
        %v1544 = vadd.f32 %v1475, %v1543
        %v1545 = vpop.f32.mrf.mxu0
        %v1546 = vadd.f32 %v1477, %v1545
        %1547 = vmatmul.bf16.gmra.mxu0 %v1420
        %v1548 = vpop.f32.mrf.mxu0
        %v1549 = vadd.f32 %v1480, %v1548
        %v1550 = vpop.f32.mrf.mxu0
        %v1551 = vadd.f32 %v1482, %v1550
        %1552 = vmatmul.bf16.gmra.mxu0 %v1423
        %v1553 = vpop.f32.mrf.mxu0
        %v1554 = vadd.f32 %v1485, %v1553
        %v1555 = vpop.f32.mrf.mxu0
        %v1556 = vadd.f32 %v1487, %v1555
        %1557 = vmatmul.bf16.gmra.mxu0 %v1426
        %v1558 = vpop.f32.mrf.mxu0
        %v1559 = vadd.f32 %v1490, %v1558
        %v1560 = vpop.f32.mrf.mxu0
        %v1561 = vadd.f32 %v1492, %v1560
        %1562 = vmatmul.bf16.gmra.mxu0 %v1429
        %v1563 = vpop.f32.mrf.mxu0
        %v1564 = vadd.f32 %v1495, %v1563
        %v1565 = vpop.f32.mrf.mxu0
        %v1566 = vadd.f32 %v1497, %v1565
        %1567 = vmatmul.bf16.gmra.mxu0 %v1432
        %v1568 = vpop.f32.mrf.mxu0
        %v1569 = vadd.f32 %v1500, %v1568
        %v1570 = vpop.f32.mrf.mxu0
        %v1571 = vadd.f32 %v1502, %v1570
        %1572 = vmatmul.bf16.gmra.mxu0 %v1435
        %v1573 = vpop.f32.mrf.mxu0
        %v1574 = vadd.f32 %v1505, %v1573
        %v1575 = vpop.f32.mrf.mxu0
        %v1576 = vadd.f32 %v1507, %v1575
        %1577 = vmatmul.bf16.gmra.mxu0 %v1438
        %v1578 = vpop.f32.mrf.mxu0
        %v1579 = vadd.f32 %v1510, %v1578
        %v1580 = vpop.f32.mrf.mxu0
        %v1581 = vadd.f32 %v1512, %v1580
        %1582 = vmatmul.bf16.gmra.mxu0 %v1441
        %v1583 = vpop.f32.mrf.mxu0
        %v1584 = vadd.f32 %v1515, %v1583
        %v1585 = vpop.f32.mrf.mxu0
        %v1586 = vadd.f32 %v1517, %v1585
        %1587 = vdwg.mxu0
        %1588 = vmatpush.bf16.msra.mxu0 %v1387
        %1589 = vmatpush.bf16.msra.mxu0 %v1385
        %1590 = vmatpush.bf16.msra.mxu0 %v1383
        %1591 = vmatpush.bf16.msra.mxu0 %v1381
        %1592 = vmatpush.bf16.msra.mxu0 %v1379
        %1593 = vmatpush.bf16.msra.mxu0 %v1377
        %1594 = vmatpush.bf16.msra.mxu0 %v1375
        %1595 = vmatpush.bf16.msra.mxu0 %v1373
        %1596 = vmatmul.bf16.gmra.mxu0 %v1282
        %v1597 = vpop.f32.mrf.mxu0
        %v1598 = vadd.f32 %v1279, %v1597
        %v1599 = vpop.f32.mrf.mxu0
        %v1600 = vadd.f32 %v1279, %v1599
        %1601 = vmatmul.bf16.gmra.mxu0 %v1284
        %v1602 = vpop.f32.mrf.mxu0
        %v1603 = vadd.f32 %v1279, %v1602
        %v1604 = vpop.f32.mrf.mxu0
        %v1605 = vadd.f32 %v1279, %v1604
        %1606 = vmatmul.bf16.gmra.mxu0 %v1286
        %v1607 = vpop.f32.mrf.mxu0
        %v1608 = vadd.f32 %v1279, %v1607
        %v1609 = vpop.f32.mrf.mxu0
        %v1610 = vadd.f32 %v1279, %v1609
        %1611 = vmatmul.bf16.gmra.mxu0 %v1288
        %v1612 = vpop.f32.mrf.mxu0
        %v1613 = vadd.f32 %v1279, %v1612
        %v1614 = vpop.f32.mrf.mxu0
        %v1615 = vadd.f32 %v1279, %v1614
        %1616 = vmatmul.bf16.gmra.mxu0 %v1290
        %v1617 = vpop.f32.mrf.mxu0
        %v1618 = vadd.f32 %v1279, %v1617
        %v1619 = vpop.f32.mrf.mxu0
        %v1620 = vadd.f32 %v1279, %v1619
        %1621 = vmatmul.bf16.gmra.mxu0 %v1292
        %v1622 = vpop.f32.mrf.mxu0
        %v1623 = vadd.f32 %v1279, %v1622
        %v1624 = vpop.f32.mrf.mxu0
        %v1625 = vadd.f32 %v1279, %v1624
        %1626 = vmatmul.bf16.gmra.mxu0 %v1294
        %v1627 = vpop.f32.mrf.mxu0
        %v1628 = vadd.f32 %v1279, %v1627
        %v1629 = vpop.f32.mrf.mxu0
        %v1630 = vadd.f32 %v1279, %v1629
        %1631 = vmatmul.bf16.gmra.mxu0 %v1296
        %v1632 = vpop.f32.mrf.mxu0
        %v1633 = vadd.f32 %v1279, %v1632
        %v1634 = vpop.f32.mrf.mxu0
        %v1635 = vadd.f32 %v1279, %v1634
        %1636 = vmatmul.bf16.gmra.mxu0 %v1298
        %v1637 = vpop.f32.mrf.mxu0
        %v1638 = vadd.f32 %v1279, %v1637
        %v1639 = vpop.f32.mrf.mxu0
        %v1640 = vadd.f32 %v1279, %v1639
        %1641 = vmatmul.bf16.gmra.mxu0 %v1300
        %v1642 = vpop.f32.mrf.mxu0
        %v1643 = vadd.f32 %v1279, %v1642
        %v1644 = vpop.f32.mrf.mxu0
        %v1645 = vadd.f32 %v1279, %v1644
        %1646 = vmatmul.bf16.gmra.mxu0 %v1302
        %v1647 = vpop.f32.mrf.mxu0
        %v1648 = vadd.f32 %v1279, %v1647
        %v1649 = vpop.f32.mrf.mxu0
        %v1650 = vadd.f32 %v1279, %v1649
        %1651 = vmatmul.bf16.gmra.mxu0 %v1304
        %v1652 = vpop.f32.mrf.mxu0
        %v1653 = vadd.f32 %v1279, %v1652
        %v1654 = vpop.f32.mrf.mxu0
        %v1655 = vadd.f32 %v1279, %v1654
        %1656 = vdwg.mxu0
        %1657 = vmatpush.bf16.msra.mxu0 0
        %1658 = vmatpush.bf16.msra.mxu0 0
        %1659 = vmatpush.bf16.msra.mxu0 0
        %1660 = vmatpush.bf16.msra.mxu0 0
        %1661 = vmatpush.bf16.msra.mxu0 0
        %1662 = vmatpush.bf16.msra.mxu0 0
        %1663 = vmatpush.bf16.msra.mxu0 0
        %1664 = vmatpush.bf16.msra.mxu0 %v1448
        %1665 = vmatmul.bf16.gmra.mxu0 %v1408
        %v1666 = vpop.f32.mrf.mxu0
        %v1667 = vadd.f32 %v1598, %v1666
        %v1668 = vpop.f32.mrf.mxu0
        %v1669 = vadd.f32 %v1600, %v1668
        %1670 = vmatmul.bf16.gmra.mxu0 %v1411
        %v1671 = vpop.f32.mrf.mxu0
        %v1672 = vadd.f32 %v1603, %v1671
        %v1673 = vpop.f32.mrf.mxu0
        %v1674 = vadd.f32 %v1605, %v1673
        %1675 = vmatmul.bf16.gmra.mxu0 %v1414
        %v1676 = vpop.f32.mrf.mxu0
        %v1677 = vadd.f32 %v1608, %v1676
        %v1678 = vpop.f32.mrf.mxu0
        %v1679 = vadd.f32 %v1610, %v1678
        %1680 = vmatmul.bf16.gmra.mxu0 %v1417
        %v1681 = vpop.f32.mrf.mxu0
        %v1682 = vadd.f32 %v1613, %v1681
        %v1683 = vpop.f32.mrf.mxu0
        %v1684 = vadd.f32 %v1615, %v1683
        %1685 = vmatmul.bf16.gmra.mxu0 %v1420
        %v1686 = vpop.f32.mrf.mxu0
        %v1687 = vadd.f32 %v1618, %v1686
        %v1688 = vpop.f32.mrf.mxu0
        %v1689 = vadd.f32 %v1620, %v1688
        %1690 = vmatmul.bf16.gmra.mxu0 %v1423
        %v1691 = vpop.f32.mrf.mxu0
        %v1692 = vadd.f32 %v1623, %v1691
        %v1693 = vpop.f32.mrf.mxu0
        %v1694 = vadd.f32 %v1625, %v1693
        %1695 = vmatmul.bf16.gmra.mxu0 %v1426
        %v1696 = vpop.f32.mrf.mxu0
        %v1697 = vadd.f32 %v1628, %v1696
        %v1698 = vpop.f32.mrf.mxu0
        %v1699 = vadd.f32 %v1630, %v1698
        %1700 = vmatmul.bf16.gmra.mxu0 %v1429
        %v1701 = vpop.f32.mrf.mxu0
        %v1702 = vadd.f32 %v1633, %v1701
        %v1703 = vpop.f32.mrf.mxu0
        %v1704 = vadd.f32 %v1635, %v1703
        %1705 = vmatmul.bf16.gmra.mxu0 %v1432
        %v1706 = vpop.f32.mrf.mxu0
        %v1707 = vadd.f32 %v1638, %v1706
        %v1708 = vpop.f32.mrf.mxu0
        %v1709 = vadd.f32 %v1640, %v1708
        %1710 = vmatmul.bf16.gmra.mxu0 %v1435
        %v1711 = vpop.f32.mrf.mxu0
        %v1712 = vadd.f32 %v1643, %v1711
        %v1713 = vpop.f32.mrf.mxu0
        %v1714 = vadd.f32 %v1645, %v1713
        %1715 = vmatmul.bf16.gmra.mxu0 %v1438
        %v1716 = vpop.f32.mrf.mxu0
        %v1717 = vadd.f32 %v1648, %v1716
        %v1718 = vpop.f32.mrf.mxu0
        %v1719 = vadd.f32 %v1650, %v1718
        %1720 = vmatmul.bf16.gmra.mxu0 %v1441
        %v1721 = vpop.f32.mrf.mxu0
        %v1722 = vadd.f32 %v1653, %v1721
        %v1723 = vpop.f32.mrf.mxu0
        %v1724 = vadd.f32 %v1655, %v1723
        %1725 = vdwg.mxu0
        %v1726 = vmax.f32 %v1529, 0.0
        %v1727 = vmax.f32 %v1667, 0.0
        %v1728 = vmax.f32 %v1531, 0.0
        %v1729 = vmax.f32 %v1669, 0.0
        %v1730 = vmax.f32 %v1534, 0.0
        %v1731 = vmax.f32 %v1672, 0.0
        %v1732 = vmax.f32 %v1536, 0.0
        %v1733 = vmax.f32 %v1674, 0.0
        %v1734 = vmax.f32 %v1539, 0.0
        %v1735 = vmax.f32 %v1677, 0.0
        %v1736 = vmax.f32 %v1541, 0.0
        %v1737 = vmax.f32 %v1679, 0.0
        %v1738 = vmax.f32 %v1544, 0.0
        %v1739 = vmax.f32 %v1682, 0.0
        %v1740 = vmax.f32 %v1546, 0.0
        %v1741 = vmax.f32 %v1684, 0.0
        %v1742 = vmax.f32 %v1549, 0.0
        %v1743 = vmax.f32 %v1687, 0.0
        %v1744 = vmax.f32 %v1551, 0.0
        %v1745 = vmax.f32 %v1689, 0.0
        %v1746 = vmax.f32 %v1554, 0.0
        %v1747 = vmax.f32 %v1692, 0.0
        %v1748 = vmax.f32 %v1556, 0.0
        %v1749 = vmax.f32 %v1694, 0.0
        %v1750 = vmax.f32 %v1559, 0.0
        %v1751 = vmax.f32 %v1697, 0.0
        %v1752 = vmax.f32 %v1561, 0.0
        %v1753 = vmax.f32 %v1699, 0.0
        %v1754 = vmax.f32 %v1564, 0.0
        %v1755 = vmax.f32 %v1702, 0.0
        %v1756 = vmax.f32 %v1566, 0.0
        %v1757 = vmax.f32 %v1704, 0.0
        %v1758 = vmax.f32 %v1569, 0.0
        %v1759 = vmax.f32 %v1707, 0.0
        %v1760 = vmax.f32 %v1571, 0.0
        %v1761 = vmax.f32 %v1709, 0.0
        %v1762 = vmax.f32 %v1574, 0.0
        %v1763 = vmax.f32 %v1712, 0.0
        %v1764 = vmax.f32 %v1576, 0.0
        %v1765 = vmax.f32 %v1714, 0.0
        %v1766 = vmax.f32 %v1579, 0.0
        %v1767 = vmax.f32 %v1717, 0.0
        %v1768 = vmax.f32 %v1581, 0.0
        %v1769 = vmax.f32 %v1719, 0.0
        %v1770 = vmax.f32 %v1584, 0.0
        %v1771 = vmax.f32 %v1722, 0.0
        %v1772 = vmax.f32 %v1586, 0.0
        %v1773 = vmax.f32 %v1724, 0.0
        %v1774 = vpack.c.bf16 %v1728, %v1726
        %v1775 = vpack.c.bf16 %v1729, %v1727
        %v1776 = vpack.c.bf16 %v1732, %v1730
        %v1777 = vpack.c.bf16 %v1733, %v1731
        %v1778 = vpack.c.bf16 %v1736, %v1734
        %v1779 = vpack.c.bf16 %v1737, %v1735
        %v1780 = vpack.c.bf16 %v1740, %v1738
        %v1781 = vpack.c.bf16 %v1741, %v1739
        %v1782 = vpack.c.bf16 %v1744, %v1742
        %v1783 = vpack.c.bf16 %v1745, %v1743
        %v1784 = vpack.c.bf16 %v1748, %v1746
        %v1785 = vpack.c.bf16 %v1749, %v1747
        %v1786 = vpack.c.bf16 %v1752, %v1750
        %v1787 = vpack.c.bf16 %v1753, %v1751
        %v1788 = vpack.c.bf16 %v1756, %v1754
        %v1789 = vpack.c.bf16 %v1757, %v1755
        %v1790 = vpack.c.bf16 %v1760, %v1758
        %v1791 = vpack.c.bf16 %v1761, %v1759
        %v1792 = vpack.c.bf16 %v1764, %v1762
        %v1793 = vpack.c.bf16 %v1765, %v1763
        %v1794 = vpack.c.bf16 %v1768, %v1766
        %v1795 = vpack.c.bf16 %v1769, %v1767
        %v1796 = vpack.c.bf16 %v1772, %v1770
        %v1797 = vpack.c.bf16 %v1773, %v1771
        %v1798 = vld [vmem:[%s3] sm:$0xf]
        %v1799 = vld [vmem:[%s3 + $0x4] sm:$0xf]
        %v1800 = vld [vmem:[%s3 + $0x8] sm:$0xf]
        %v1801 = vld [vmem:[%s3 + $0xc] sm:$0xf]
        %v1802 = vld [vmem:[%s3 + $0x10] sm:$0xf]
        %v1803 = vld [vmem:[%s3 + $0x14] sm:$0xf]
        %v1804 = vld [vmem:[%s3 + $0x18] sm:$0xf]
        %v1805 = vld [vmem:[%s3 + $0x1c] sm:$0xf]
        %v1806 = vld [vmem:[%s3 + $0x20] sm:$0xf]
        %v1807 = vld [vmem:[%s3 + $0x24] sm:$0xf]
        %v1808 = vld [vmem:[%s3 + $0x28] sm:$0xf]
        %v1809 = vld [vmem:[%s3 + $0x2c] sm:$0xf]
        %v1810 = vld [vmem:[%s3 + $0x30] sm:$0xf]
        %v1811 = vld [vmem:[%s3 + $0x34] sm:$0xf]
        %v1812 = vld [vmem:[%s3 + $0x38] sm:$0xf]
        %v1813 = vld [vmem:[%s3 + $0x3c] sm:$0xf]
        %v1814 = vld [vmem:[%s3 + $0x40] sm:$0xf]
        %v1815 = vld [vmem:[%s3 + $0x44] sm:$0xf]
        %v1834 = vunpack.c.l.b16 %v1798
        %v1835 = vunpack.c.l.b16 %v1799
        %v1836 = vunpack.c.l.b16 %v1800
        %v1837 = vunpack.c.l.b16 %v1801
        %v1838 = vunpack.c.l.b16 %v1802
        %v1839 = vunpack.c.l.b16 %v1803
        %v1840 = vunpack.c.l.b16 %v1804
        %v1841 = vunpack.c.l.b16 %v1805
        %v1842 = vunpack.c.l.b16 %v1806
        %v1843 = vunpack.c.l.b16 %v1807
        %v1844 = vunpack.c.l.b16 %v1808
        %v1845 = vunpack.c.l.b16 %v1809
        %v1846 = vunpack.c.l.b16 %v1810
        %v1847 = vunpack.c.l.b16 %v1811
        %v1848 = vunpack.c.l.b16 %v1812
        %v1849 = vunpack.c.l.b16 %v1813
        %v1850 = vunpack.c.l.b16 %v1814
        %v1851 = vunpack.c.l.b16 %v1815
        %v1852 = vpack.c.b16 %v1835, %v1834
        %v1853 = vpack.c.b16 %v1837, %v1836
        %v1854 = vpack.c.b16 %v1839, %v1838
        %v1855 = vpack.c.b16 %v1841, %v1840
        %v1856 = vpack.c.b16 %v1843, %v1842
        %v1857 = vpack.c.b16 %v1845, %v1844
        %v1858 = vpack.c.b16 %v1847, %v1846
        %v1859 = vpack.c.b16 %v1849, %v1848
        %v1860 = vpack.c.b16 %v1851, %v1850
        %vm1870 = vcmask 130048
        %v1872 = vsel %vm1870, %v1775, 0
        %v1875 = vsel %vm1870, %v1777, 0
        %v1878 = vsel %vm1870, %v1779, 0
        %v1881 = vsel %vm1870, %v1781, 0
        %v1884 = vsel %vm1870, %v1783, 0
        %v1887 = vsel %vm1870, %v1785, 0
        %v1890 = vsel %vm1870, %v1787, 0
        %v1893 = vsel %vm1870, %v1789, 0
        %v1896 = vsel %vm1870, %v1791, 0
        %v1899 = vsel %vm1870, %v1793, 0
        %v1902 = vsel %vm1870, %v1795, 0
        %v1905 = vsel %vm1870, %v1797, 0
        %1907 = vmatpush.bf16.msra.mxu0 %v1859
        %1908 = vmatpush.bf16.msra.mxu0 %v1858
        %1909 = vmatpush.bf16.msra.mxu0 %v1857
        %1910 = vmatpush.bf16.msra.mxu0 %v1856
        %1911 = vmatpush.bf16.msra.mxu0 %v1855
        %1912 = vmatpush.bf16.msra.mxu0 %v1854
        %1913 = vmatpush.bf16.msra.mxu0 %v1853
        %1914 = vmatpush.bf16.msra.mxu0 %v1852
        %1915 = vmatmul.bf16.gmra.mxu0 %v1774
        %v1916 = vpop.f32.mrf.mxu0
        %v1917 = vadd.f32 0.0, %v1916
        %v1918 = vpop.f32.mrf.mxu0
        %v1919 = vadd.f32 0.0, %v1918
        %1920 = vmatmul.bf16.gmra.mxu0 %v1776
        %v1921 = vpop.f32.mrf.mxu0
        %v1922 = vadd.f32 0.0, %v1921
        %v1923 = vpop.f32.mrf.mxu0
        %v1924 = vadd.f32 0.0, %v1923
        %1925 = vmatmul.bf16.gmra.mxu0 %v1778
        %v1926 = vpop.f32.mrf.mxu0
        %v1927 = vadd.f32 0.0, %v1926
        %v1928 = vpop.f32.mrf.mxu0
        %v1929 = vadd.f32 0.0, %v1928
        %1930 = vmatmul.bf16.gmra.mxu0 %v1780
        %v1931 = vpop.f32.mrf.mxu0
        %v1932 = vadd.f32 0.0, %v1931
        %v1933 = vpop.f32.mrf.mxu0
        %v1934 = vadd.f32 0.0, %v1933
        %1935 = vmatmul.bf16.gmra.mxu0 %v1782
        %v1936 = vpop.f32.mrf.mxu0
        %v1937 = vadd.f32 0.0, %v1936
        %v1938 = vpop.f32.mrf.mxu0
        %v1939 = vadd.f32 0.0, %v1938
        %1940 = vmatmul.bf16.gmra.mxu0 %v1784
        %v1941 = vpop.f32.mrf.mxu0
        %v1942 = vadd.f32 0.0, %v1941
        %v1943 = vpop.f32.mrf.mxu0
        %v1944 = vadd.f32 0.0, %v1943
        %1945 = vmatmul.bf16.gmra.mxu0 %v1786
        %v1946 = vpop.f32.mrf.mxu0
        %v1947 = vadd.f32 0.0, %v1946
        %v1948 = vpop.f32.mrf.mxu0
        %v1949 = vadd.f32 0.0, %v1948
        %1950 = vmatmul.bf16.gmra.mxu0 %v1788
        %v1951 = vpop.f32.mrf.mxu0
        %v1952 = vadd.f32 0.0, %v1951
        %v1953 = vpop.f32.mrf.mxu0
        %v1954 = vadd.f32 0.0, %v1953
        %1955 = vmatmul.bf16.gmra.mxu0 %v1790
        %v1956 = vpop.f32.mrf.mxu0
        %v1957 = vadd.f32 0.0, %v1956
        %v1958 = vpop.f32.mrf.mxu0
        %v1959 = vadd.f32 0.0, %v1958
        %1960 = vmatmul.bf16.gmra.mxu0 %v1792
        %v1961 = vpop.f32.mrf.mxu0
        %v1962 = vadd.f32 0.0, %v1961
        %v1963 = vpop.f32.mrf.mxu0
        %v1964 = vadd.f32 0.0, %v1963
        %1965 = vmatmul.bf16.gmra.mxu0 %v1794
        %v1966 = vpop.f32.mrf.mxu0
        %v1967 = vadd.f32 0.0, %v1966
        %v1968 = vpop.f32.mrf.mxu0
        %v1969 = vadd.f32 0.0, %v1968
        %1970 = vmatmul.bf16.gmra.mxu0 %v1796
        %v1971 = vpop.f32.mrf.mxu0
        %v1972 = vadd.f32 0.0, %v1971
        %v1973 = vpop.f32.mrf.mxu0
        %v1974 = vadd.f32 0.0, %v1973
        %1975 = vdwg.mxu0
        %1976 = vmatpush.bf16.msra.mxu0 0
        %1977 = vmatpush.bf16.msra.mxu0 0
        %1978 = vmatpush.bf16.msra.mxu0 0
        %1979 = vmatpush.bf16.msra.mxu0 0
        %1980 = vmatpush.bf16.msra.mxu0 0
        %1981 = vmatpush.bf16.msra.mxu0 0
        %1982 = vmatpush.bf16.msra.mxu0 0
        %1983 = vmatpush.bf16.msra.mxu0 %v1860
        %1984 = vmatmul.bf16.gmra.mxu0 %v1872
        %v1985 = vpop.f32.mrf.mxu0
        %v1986 = vadd.f32 %v1917, %v1985
        %v1987 = vpop.f32.mrf.mxu0
        %v1988 = vadd.f32 %v1919, %v1987
        %1989 = vmatmul.bf16.gmra.mxu0 %v1875
        %v1990 = vpop.f32.mrf.mxu0
        %v1991 = vadd.f32 %v1922, %v1990
        %v1992 = vpop.f32.mrf.mxu0
        %v1993 = vadd.f32 %v1924, %v1992
        %1994 = vmatmul.bf16.gmra.mxu0 %v1878
        %v1995 = vpop.f32.mrf.mxu0
        %v1996 = vadd.f32 %v1927, %v1995
        %v1997 = vpop.f32.mrf.mxu0
        %v1998 = vadd.f32 %v1929, %v1997
        %1999 = vmatmul.bf16.gmra.mxu0 %v1881
        %v2000 = vpop.f32.mrf.mxu0
        %v2001 = vadd.f32 %v1932, %v2000
        %v2002 = vpop.f32.mrf.mxu0
        %v2003 = vadd.f32 %v1934, %v2002
        %2004 = vmatmul.bf16.gmra.mxu0 %v1884
        %v2005 = vpop.f32.mrf.mxu0
        %v2006 = vadd.f32 %v1937, %v2005
        %v2007 = vpop.f32.mrf.mxu0
        %v2008 = vadd.f32 %v1939, %v2007
        %2009 = vmatmul.bf16.gmra.mxu0 %v1887
        %v2010 = vpop.f32.mrf.mxu0
        %v2011 = vadd.f32 %v1942, %v2010
        %v2012 = vpop.f32.mrf.mxu0
        %v2013 = vadd.f32 %v1944, %v2012
        %2014 = vmatmul.bf16.gmra.mxu0 %v1890
        %v2015 = vpop.f32.mrf.mxu0
        %v2016 = vadd.f32 %v1947, %v2015
        %v2017 = vpop.f32.mrf.mxu0
        %v2018 = vadd.f32 %v1949, %v2017
        %2019 = vmatmul.bf16.gmra.mxu0 %v1893
        %v2020 = vpop.f32.mrf.mxu0
        %v2021 = vadd.f32 %v1952, %v2020
        %v2022 = vpop.f32.mrf.mxu0
        %v2023 = vadd.f32 %v1954, %v2022
        %2024 = vmatmul.bf16.gmra.mxu0 %v1896
        %v2025 = vpop.f32.mrf.mxu0
        %v2026 = vadd.f32 %v1957, %v2025
        %v2027 = vpop.f32.mrf.mxu0
        %v2028 = vadd.f32 %v1959, %v2027
        %2029 = vmatmul.bf16.gmra.mxu0 %v1899
        %v2030 = vpop.f32.mrf.mxu0
        %v2031 = vadd.f32 %v1962, %v2030
        %v2032 = vpop.f32.mrf.mxu0
        %v2033 = vadd.f32 %v1964, %v2032
        %2034 = vmatmul.bf16.gmra.mxu0 %v1902
        %v2035 = vpop.f32.mrf.mxu0
        %v2036 = vadd.f32 %v1967, %v2035
        %v2037 = vpop.f32.mrf.mxu0
        %v2038 = vadd.f32 %v1969, %v2037
        %2039 = vmatmul.bf16.gmra.mxu0 %v1905
        %v2040 = vpop.f32.mrf.mxu0
        %v2041 = vadd.f32 %v1972, %v2040
        %v2042 = vpop.f32.mrf.mxu0
        %v2043 = vadd.f32 %v1974, %v2042
        %2044 = vdwg.mxu0
        %v2045 = vld [vmem:[%s4] sm:$0xf]
        %v2046 = vld [vmem:[%s4 + $0x4] sm:$0xf]
        %v2047 = vld [vmem:[%s4 + $0x8] sm:$0xf]
        %v2048 = vld [vmem:[%s4 + $0xc] sm:$0xf]
        %v2049 = vld [vmem:[%s4 + $0x10] sm:$0xf]
        %v2050 = vld [vmem:[%s4 + $0x14] sm:$0xf]
        %v2051 = vld [vmem:[%s4 + $0x18] sm:$0xf]
        %v2052 = vld [vmem:[%s4 + $0x1c] sm:$0xf]
        %v2053 = vld [vmem:[%s4 + $0x20] sm:$0xf]
        %v2054 = vld [vmem:[%s4 + $0x24] sm:$0xf]
        %v2055 = vld [vmem:[%s4 + $0x28] sm:$0xf]
        %v2056 = vld [vmem:[%s4 + $0x2c] sm:$0xf]
        %v2057 = vld [vmem:[%s4 + $0x30] sm:$0xf]
        %v2058 = vld [vmem:[%s4 + $0x34] sm:$0xf]
        %v2059 = vld [vmem:[%s4 + $0x38] sm:$0xf]
        %v2060 = vld [vmem:[%s4 + $0x3c] sm:$0xf]
        %v2061 = vld [vmem:[%s4 + $0x40] sm:$0xf]
        %v2062 = vld [vmem:[%s4 + $0x44] sm:$0xf]
        %v2081 = vunpack.c.l.b16 %v2045
        %v2082 = vunpack.c.l.b16 %v2046
        %v2083 = vunpack.c.l.b16 %v2047
        %v2084 = vunpack.c.l.b16 %v2048
        %v2085 = vunpack.c.l.b16 %v2049
        %v2086 = vunpack.c.l.b16 %v2050
        %v2087 = vunpack.c.l.b16 %v2051
        %v2088 = vunpack.c.l.b16 %v2052
        %v2089 = vunpack.c.l.b16 %v2053
        %v2090 = vunpack.c.l.b16 %v2054
        %v2091 = vunpack.c.l.b16 %v2055
        %v2092 = vunpack.c.l.b16 %v2056
        %v2093 = vunpack.c.l.b16 %v2057
        %v2094 = vunpack.c.l.b16 %v2058
        %v2095 = vunpack.c.l.b16 %v2059
        %v2096 = vunpack.c.l.b16 %v2060
        %v2097 = vunpack.c.l.b16 %v2061
        %v2098 = vunpack.c.l.b16 %v2062
        %v2099 = vpack.c.b16 %v2082, %v2081
        %v2100 = vpack.c.b16 %v2084, %v2083
        %v2101 = vpack.c.b16 %v2086, %v2085
        %v2102 = vpack.c.b16 %v2088, %v2087
        %v2103 = vpack.c.b16 %v2090, %v2089
        %v2104 = vpack.c.b16 %v2092, %v2091
        %v2105 = vpack.c.b16 %v2094, %v2093
        %v2106 = vpack.c.b16 %v2096, %v2095
        %v2107 = vpack.c.b16 %v2098, %v2097
        %2117 = vmatpush.bf16.msra.mxu0 %v2106
        %2118 = vmatpush.bf16.msra.mxu0 %v2105
        %2119 = vmatpush.bf16.msra.mxu0 %v2104
        %2120 = vmatpush.bf16.msra.mxu0 %v2103
        %2121 = vmatpush.bf16.msra.mxu0 %v2102
        %2122 = vmatpush.bf16.msra.mxu0 %v2101
        %2123 = vmatpush.bf16.msra.mxu0 %v2100
        %2124 = vmatpush.bf16.msra.mxu0 %v2099
        %2125 = vmatmul.bf16.gmra.mxu0 %v1774
        %v2126 = vpop.f32.mrf.mxu0
        %v2127 = vadd.f32 0.0, %v2126
        %v2128 = vpop.f32.mrf.mxu0
        %v2129 = vadd.f32 0.0, %v2128
        %2130 = vmatmul.bf16.gmra.mxu0 %v1776
        %v2131 = vpop.f32.mrf.mxu0
        %v2132 = vadd.f32 0.0, %v2131
        %v2133 = vpop.f32.mrf.mxu0
        %v2134 = vadd.f32 0.0, %v2133
        %2135 = vmatmul.bf16.gmra.mxu0 %v1778
        %v2136 = vpop.f32.mrf.mxu0
        %v2137 = vadd.f32 0.0, %v2136
        %v2138 = vpop.f32.mrf.mxu0
        %v2139 = vadd.f32 0.0, %v2138
        %2140 = vmatmul.bf16.gmra.mxu0 %v1780
        %v2141 = vpop.f32.mrf.mxu0
        %v2142 = vadd.f32 0.0, %v2141
        %v2143 = vpop.f32.mrf.mxu0
        %v2144 = vadd.f32 0.0, %v2143
        %2145 = vmatmul.bf16.gmra.mxu0 %v1782
        %v2146 = vpop.f32.mrf.mxu0
        %v2147 = vadd.f32 0.0, %v2146
        %v2148 = vpop.f32.mrf.mxu0
        %v2149 = vadd.f32 0.0, %v2148
        %2150 = vmatmul.bf16.gmra.mxu0 %v1784
        %v2151 = vpop.f32.mrf.mxu0
        %v2152 = vadd.f32 0.0, %v2151
        %v2153 = vpop.f32.mrf.mxu0
        %v2154 = vadd.f32 0.0, %v2153
        %2155 = vmatmul.bf16.gmra.mxu0 %v1786
        %v2156 = vpop.f32.mrf.mxu0
        %v2157 = vadd.f32 0.0, %v2156
        %v2158 = vpop.f32.mrf.mxu0
        %v2159 = vadd.f32 0.0, %v2158
        %2160 = vmatmul.bf16.gmra.mxu0 %v1788
        %v2161 = vpop.f32.mrf.mxu0
        %v2162 = vadd.f32 0.0, %v2161
        %v2163 = vpop.f32.mrf.mxu0
        %v2164 = vadd.f32 0.0, %v2163
        %2165 = vmatmul.bf16.gmra.mxu0 %v1790
        %v2166 = vpop.f32.mrf.mxu0
        %v2167 = vadd.f32 0.0, %v2166
        %v2168 = vpop.f32.mrf.mxu0
        %v2169 = vadd.f32 0.0, %v2168
        %2170 = vmatmul.bf16.gmra.mxu0 %v1792
        %v2171 = vpop.f32.mrf.mxu0
        %v2172 = vadd.f32 0.0, %v2171
        %v2173 = vpop.f32.mrf.mxu0
        %v2174 = vadd.f32 0.0, %v2173
        %2175 = vmatmul.bf16.gmra.mxu0 %v1794
        %v2176 = vpop.f32.mrf.mxu0
        %v2177 = vadd.f32 0.0, %v2176
        %v2178 = vpop.f32.mrf.mxu0
        %v2179 = vadd.f32 0.0, %v2178
        %2180 = vmatmul.bf16.gmra.mxu0 %v1796
        %v2181 = vpop.f32.mrf.mxu0
        %v2182 = vadd.f32 0.0, %v2181
        %v2183 = vpop.f32.mrf.mxu0
        %v2184 = vadd.f32 0.0, %v2183
        %2185 = vdwg.mxu0
        %2186 = vmatpush.bf16.msra.mxu0 0
        %2187 = vmatpush.bf16.msra.mxu0 0
        %2188 = vmatpush.bf16.msra.mxu0 0
        %2189 = vmatpush.bf16.msra.mxu0 0
        %2190 = vmatpush.bf16.msra.mxu0 0
        %2191 = vmatpush.bf16.msra.mxu0 0
        %2192 = vmatpush.bf16.msra.mxu0 0
        %2193 = vmatpush.bf16.msra.mxu0 %v2107
        %2194 = vmatmul.bf16.gmra.mxu0 %v1872
        %v2195 = vpop.f32.mrf.mxu0
        %v2196 = vadd.f32 %v2127, %v2195
        %v2197 = vpop.f32.mrf.mxu0
        %v2198 = vadd.f32 %v2129, %v2197
        %2199 = vmatmul.bf16.gmra.mxu0 %v1875
        %v2200 = vpop.f32.mrf.mxu0
        %v2201 = vadd.f32 %v2132, %v2200
        %v2202 = vpop.f32.mrf.mxu0
        %v2203 = vadd.f32 %v2134, %v2202
        %2204 = vmatmul.bf16.gmra.mxu0 %v1878
        %v2205 = vpop.f32.mrf.mxu0
        %v2206 = vadd.f32 %v2137, %v2205
        %v2207 = vpop.f32.mrf.mxu0
        %v2208 = vadd.f32 %v2139, %v2207
        %2209 = vmatmul.bf16.gmra.mxu0 %v1881
        %v2210 = vpop.f32.mrf.mxu0
        %v2211 = vadd.f32 %v2142, %v2210
        %v2212 = vpop.f32.mrf.mxu0
        %v2213 = vadd.f32 %v2144, %v2212
        %2214 = vmatmul.bf16.gmra.mxu0 %v1884
        %v2215 = vpop.f32.mrf.mxu0
        %v2216 = vadd.f32 %v2147, %v2215
        %v2217 = vpop.f32.mrf.mxu0
        %v2218 = vadd.f32 %v2149, %v2217
        %2219 = vmatmul.bf16.gmra.mxu0 %v1887
        %v2220 = vpop.f32.mrf.mxu0
        %v2221 = vadd.f32 %v2152, %v2220
        %v2222 = vpop.f32.mrf.mxu0
        %v2223 = vadd.f32 %v2154, %v2222
        %2224 = vmatmul.bf16.gmra.mxu0 %v1890
        %v2225 = vpop.f32.mrf.mxu0
        %v2226 = vadd.f32 %v2157, %v2225
        %v2227 = vpop.f32.mrf.mxu0
        %v2228 = vadd.f32 %v2159, %v2227
        %2229 = vmatmul.bf16.gmra.mxu0 %v1893
        %v2230 = vpop.f32.mrf.mxu0
        %v2231 = vadd.f32 %v2162, %v2230
        %v2232 = vpop.f32.mrf.mxu0
        %v2233 = vadd.f32 %v2164, %v2232
        %2234 = vmatmul.bf16.gmra.mxu0 %v1896
        %v2235 = vpop.f32.mrf.mxu0
        %v2236 = vadd.f32 %v2167, %v2235
        %v2237 = vpop.f32.mrf.mxu0
        %v2238 = vadd.f32 %v2169, %v2237
        %2239 = vmatmul.bf16.gmra.mxu0 %v1899
        %v2240 = vpop.f32.mrf.mxu0
        %v2241 = vadd.f32 %v2172, %v2240
        %v2242 = vpop.f32.mrf.mxu0
        %v2243 = vadd.f32 %v2174, %v2242
        %2244 = vmatmul.bf16.gmra.mxu0 %v1902
        %v2245 = vpop.f32.mrf.mxu0
        %v2246 = vadd.f32 %v2177, %v2245
        %v2247 = vpop.f32.mrf.mxu0
        %v2248 = vadd.f32 %v2179, %v2247
        %2249 = vmatmul.bf16.gmra.mxu0 %v1905
        %v2250 = vpop.f32.mrf.mxu0
        %v2251 = vadd.f32 %v2182, %v2250
        %v2252 = vpop.f32.mrf.mxu0
        %v2253 = vadd.f32 %v2184, %v2252
        %2254 = vdwg.mxu0
        %v2255 = vmax.f32 %v1986, %v2196
        %v2256 = vmax.f32 %v1988, %v2198
        %v2257 = vmax.f32 %v1991, %v2201
        %v2258 = vmax.f32 %v1993, %v2203
        %v2259 = vmax.f32 %v1996, %v2206
        %v2260 = vmax.f32 %v1998, %v2208
        %v2261 = vmax.f32 %v2001, %v2211
        %v2262 = vmax.f32 %v2003, %v2213
        %v2263 = vmax.f32 %v2006, %v2216
        %v2264 = vmax.f32 %v2008, %v2218
        %v2265 = vmax.f32 %v2011, %v2221
        %v2266 = vmax.f32 %v2013, %v2223
        %v2267 = vmax.f32 %v2016, %v2226
        %v2268 = vmax.f32 %v2018, %v2228
        %v2269 = vmax.f32 %v2021, %v2231
        %v2270 = vmax.f32 %v2023, %v2233
        %v2271 = vmax.f32 %v2026, %v2236
        %v2272 = vmax.f32 %v2028, %v2238
        %v2273 = vmax.f32 %v2031, %v2241
        %v2274 = vmax.f32 %v2033, %v2243
        %v2275 = vmax.f32 %v2036, %v2246
        %v2276 = vmax.f32 %v2038, %v2248
        %v2277 = vmax.f32 %v2041, %v2251
        %v2278 = vmax.f32 %v2043, %v2253
        %vm2279 = vcmask 588800
        %v2280 = vsel %vm2279, %v2255, -inf
        %v2281 = vsel %vm2279, %v2256, -inf
        %v2282 = vmax.f32 %v2280, %v2281
        %v2283 = vsel %vm2279, %v2257, -inf
        %v2284 = vsel %vm2279, %v2258, -inf
        %v2285 = vmax.f32 %v2283, %v2284
        %v2286 = vsel %vm2279, %v2259, -inf
        %v2287 = vsel %vm2279, %v2260, -inf
        %v2288 = vmax.f32 %v2286, %v2287
        %v2289 = vsel %vm2279, %v2261, -inf
        %v2290 = vsel %vm2279, %v2262, -inf
        %v2291 = vmax.f32 %v2289, %v2290
        %v2292 = vsel %vm2279, %v2263, -inf
        %v2293 = vsel %vm2279, %v2264, -inf
        %v2294 = vmax.f32 %v2292, %v2293
        %v2295 = vsel %vm2279, %v2265, -inf
        %v2296 = vsel %vm2279, %v2266, -inf
        %v2297 = vmax.f32 %v2295, %v2296
        %v2298 = vsel %vm2279, %v2267, -inf
        %v2299 = vsel %vm2279, %v2268, -inf
        %v2300 = vmax.f32 %v2298, %v2299
        %v2301 = vsel %vm2279, %v2269, -inf
        %v2302 = vsel %vm2279, %v2270, -inf
        %v2303 = vmax.f32 %v2301, %v2302
        %v2304 = vsel %vm2279, %v2271, -inf
        %v2305 = vsel %vm2279, %v2272, -inf
        %v2306 = vmax.f32 %v2304, %v2305
        %v2307 = vsel %vm2279, %v2273, -inf
        %v2308 = vsel %vm2279, %v2274, -inf
        %v2309 = vmax.f32 %v2307, %v2308
        %v2310 = vsel %vm2279, %v2275, -inf
        %v2311 = vsel %vm2279, %v2276, -inf
        %v2312 = vmax.f32 %v2310, %v2311
        %v2313 = vsel %vm2279, %v2277, -inf
        %v2314 = vsel %vm2279, %v2278, -inf
        %v2315 = vmax.f32 %v2313, %v2314
        %v2316 = vpack.c.bf16 %v2282, %v2282
        %v2317 = vpack.c.bf16 %v2285, %v2285
        %v2318 = vpack.c.bf16 %v2288, %v2288
        %v2319 = vpack.c.bf16 %v2291, %v2291
        %v2320 = vpack.c.bf16 %v2294, %v2294
        %v2321 = vpack.c.bf16 %v2297, %v2297
        %v2322 = vpack.c.bf16 %v2300, %v2300
        %v2323 = vpack.c.bf16 %v2303, %v2303
        %v2324 = vpack.c.bf16 %v2306, %v2306
        %v2325 = vpack.c.bf16 %v2309, %v2309
        %v2326 = vpack.c.bf16 %v2312, %v2312
        %v2327 = vpack.c.bf16 %v2315, %v2315
        %v2336 = vunpack.c.l.b16 %v2317
        %v2337 = vunpack.c.l.b16 %v2318
        %v2338 = vunpack.c.l.b16 %v2319
        %v2339 = vunpack.c.l.b16 %v2320
        %v2340 = vunpack.c.l.b16 %v2321
        %v2341 = vunpack.c.l.b16 %v2322
        %v2342 = vunpack.c.l.b16 %v2323
        %v2343 = vunpack.c.l.b16 %v2324
        %v2344 = vpack.c.b16 %v2336, %v2336
        %v2345 = vpack.c.b16 %v2337, %v2337
        %v2346 = vpack.c.b16 %v2338, %v2338
        %v2347 = vpack.c.b16 %v2339, %v2339
        %v2348 = vpack.c.b16 %v2340, %v2340
        %v2349 = vpack.c.b16 %v2341, %v2341
        %v2350 = vpack.c.b16 %v2342, %v2342
        %v2351 = vpack.c.b16 %v2343, %v2343
        %2352 = vrot.lane.b32.xlu0 %v2344, 72
        %v2353 = vpop.permute.xlu0 %2352
        %2354 = vrot.lane.b32.xlu0 %v2345, 72
        %v2355 = vpop.permute.xlu0 %2354
        %2356 = vrot.lane.b32.xlu0 %v2346, 72
        %v2357 = vpop.permute.xlu0 %2356
        %2358 = vrot.lane.b32.xlu0 %v2347, 72
        %v2359 = vpop.permute.xlu0 %2358
        %2360 = vrot.lane.b32.xlu0 %v2348, 72
        %v2361 = vpop.permute.xlu0 %2360
        %2362 = vrot.lane.b32.xlu0 %v2349, 72
        %v2363 = vpop.permute.xlu0 %2362
        %2364 = vrot.lane.b32.xlu0 %v2350, 72
        %v2365 = vpop.permute.xlu0 %2364
        %2366 = vrot.lane.b32.xlu0 %v2351, 72
        %v2367 = vpop.permute.xlu0 %2366
        %v2369 = vunpack.c.l.b16 %v2325
        %v2370 = vpack.c.b16 %v2369, %v2369
        %2371 = vrot.lane.b32.xlu0 %v2345, 16
        %v2372 = vpop.permute.xlu0 %2371
        %2373 = vrot.lane.b32.xlu0 %v2346, 16
        %v2374 = vpop.permute.xlu0 %2373
        %2375 = vrot.lane.b32.xlu0 %v2347, 16
        %v2376 = vpop.permute.xlu0 %2375
        %2377 = vrot.lane.b32.xlu0 %v2348, 16
        %v2378 = vpop.permute.xlu0 %2377
        %2379 = vrot.lane.b32.xlu0 %v2349, 16
        %v2380 = vpop.permute.xlu0 %2379
        %2381 = vrot.lane.b32.xlu0 %v2350, 16
        %v2382 = vpop.permute.xlu0 %2381
        %2383 = vrot.lane.b32.xlu0 %v2351, 16
        %v2384 = vpop.permute.xlu0 %2383
        %2385 = vrot.lane.b32.xlu0 %v2370, 16
        %v2386 = vpop.permute.xlu0 %2385
        %v2388 = vunpack.c.l.b16 %v2326
        %v2389 = vpack.c.b16 %v2388, %v2388
        %2390 = vrot.lane.b32.xlu0 %v2346, 88
        %v2391 = vpop.permute.xlu0 %2390
        %2392 = vrot.lane.b32.xlu0 %v2347, 88
        %v2393 = vpop.permute.xlu0 %2392
        %2394 = vrot.lane.b32.xlu0 %v2348, 88
        %v2395 = vpop.permute.xlu0 %2394
        %2396 = vrot.lane.b32.xlu0 %v2349, 88
        %v2397 = vpop.permute.xlu0 %2396
        %2398 = vrot.lane.b32.xlu0 %v2350, 88
        %v2399 = vpop.permute.xlu0 %2398
        %2400 = vrot.lane.b32.xlu0 %v2351, 88
        %v2401 = vpop.permute.xlu0 %2400
        %2402 = vrot.lane.b32.xlu0 %v2370, 88
        %v2403 = vpop.permute.xlu0 %2402
        %2404 = vrot.lane.b32.xlu0 %v2389, 88
        %v2405 = vpop.permute.xlu0 %2404
        %v2407 = vunpack.c.l.b16 %v2327
        %v2408 = vpack.c.b16 %v2407, %v2407
        %2409 = vrot.lane.b32.xlu0 %v2347, 32
        %v2410 = vpop.permute.xlu0 %2409
        %2411 = vrot.lane.b32.xlu0 %v2348, 32
        %v2412 = vpop.permute.xlu0 %2411
        %2413 = vrot.lane.b32.xlu0 %v2349, 32
        %v2414 = vpop.permute.xlu0 %2413
        %2415 = vrot.lane.b32.xlu0 %v2350, 32
        %v2416 = vpop.permute.xlu0 %2415
        %2417 = vrot.lane.b32.xlu0 %v2351, 32
        %v2418 = vpop.permute.xlu0 %2417
        %2419 = vrot.lane.b32.xlu0 %v2370, 32
        %v2420 = vpop.permute.xlu0 %2419
        %2421 = vrot.lane.b32.xlu0 %v2389, 32
        %v2422 = vpop.permute.xlu0 %2421
        %2423 = vrot.lane.b32.xlu0 %v2408, 32
        %v2424 = vpop.permute.xlu0 %2423
        %v2427 = vsel %vm2279, %v2316, %v2353
        %v2430 = vsel %vm2279, %v2317, %v2355
        %v2433 = vsel %vm2279, %v2318, %v2357
        %v2436 = vsel %vm2279, %v2319, %v2359
        %v2439 = vsel %vm2279, %v2320, %v2361
        %v2442 = vsel %vm2279, %v2321, %v2363
        %v2445 = vsel %vm2279, %v2322, %v2365
        %v2448 = vsel %vm2279, %v2323, %v2367
        %v2450 = vsel %vm1870, %v2353, %v2372
        %v2452 = vsel %vm1870, %v2355, %v2374
        %v2454 = vsel %vm1870, %v2357, %v2376
        %v2456 = vsel %vm1870, %v2359, %v2378
        %v2458 = vsel %vm1870, %v2361, %v2380
        %v2460 = vsel %vm1870, %v2363, %v2382
        %v2462 = vsel %vm1870, %v2365, %v2384
        %v2464 = vsel %vm1870, %v2367, %v2386
        %vm2465 = vcmask 719872
        %v2467 = vsel %vm2465, %v2450, %v2391
        %v2469 = vsel %vm2465, %v2452, %v2393
        %v2471 = vsel %vm2465, %v2454, %v2395
        %v2473 = vsel %vm2465, %v2456, %v2397
        %v2475 = vsel %vm2465, %v2458, %v2399
        %v2477 = vsel %vm2465, %v2460, %v2401
        %v2479 = vsel %vm2465, %v2462, %v2403
        %v2481 = vsel %vm2465, %v2464, %v2405
        %vm2482 = vcmask 261120
        %v2484 = vsel %vm2482, %v2391, %v2410
        %v2486 = vsel %vm2482, %v2393, %v2412
        %v2488 = vsel %vm2482, %v2395, %v2414
        %v2490 = vsel %vm2482, %v2397, %v2416
        %v2492 = vsel %vm2482, %v2399, %v2418
        %v2494 = vsel %vm2482, %v2401, %v2420
        %v2496 = vsel %vm2482, %v2403, %v2422
        %v2498 = vsel %vm2482, %v2405, %v2424
        %v2523 = vunpack.c.l.b16 %v2427
        %v2524 = vunpack.c.l.b16 %v2467
        %v2525 = vunpack.c.l.b16 %v2484
        %v2526 = vunpack.c.l.b16 %v2430
        %v2527 = vunpack.c.l.b16 %v2469
        %v2528 = vunpack.c.l.b16 %v2486
        %v2529 = vunpack.c.l.b16 %v2433
        %v2530 = vunpack.c.l.b16 %v2471
        %v2531 = vunpack.c.l.b16 %v2488
        %v2532 = vunpack.c.l.b16 %v2436
        %v2533 = vunpack.c.l.b16 %v2473
        %v2534 = vunpack.c.l.b16 %v2490
        %v2535 = vunpack.c.l.b16 %v2439
        %v2536 = vunpack.c.l.b16 %v2475
        %v2537 = vunpack.c.l.b16 %v2492
        %v2538 = vunpack.c.l.b16 %v2442
        %v2539 = vunpack.c.l.b16 %v2477
        %v2540 = vunpack.c.l.b16 %v2494
        %v2541 = vunpack.c.l.b16 %v2445
        %v2542 = vunpack.c.l.b16 %v2479
        %v2543 = vunpack.c.l.b16 %v2496
        %v2544 = vunpack.c.l.b16 %v2448
        %v2545 = vunpack.c.l.b16 %v2481
        %v2546 = vunpack.c.l.b16 %v2498
        %v2547 = vld [vmem:[%s5] sm:$0xf]
        %v2548 = vld [vmem:[%s5 + $0x4] sm:$0xf]
        %v2549 = vld [vmem:[%s5 + $0x8] sm:$0xf]
        %v2550 = vld [vmem:[%s5 + $0xc] sm:$0xf]
        %v2551 = vld [vmem:[%s5 + $0x10] sm:$0xf]
        %v2552 = vld [vmem:[%s5 + $0x14] sm:$0xf]
        %v2553 = vld [vmem:[%s5 + $0x18] sm:$0xf]
        %v2554 = vld [vmem:[%s5 + $0x1c] sm:$0xf]
        %v2555 = vld [vmem:[%s5 + $0x20] sm:$0xf]
        %v2556 = vld [vmem:[%s5 + $0x24] sm:$0xf]
        %v2557 = vld [vmem:[%s5 + $0x28] sm:$0xf]
        %v2558 = vld [vmem:[%s5 + $0x2c] sm:$0xf]
        %v2559 = vld [vmem:[%s5 + $0x30] sm:$0xf]
        %v2560 = vld [vmem:[%s5 + $0x34] sm:$0xf]
        %v2561 = vld [vmem:[%s5 + $0x38] sm:$0xf]
        %v2562 = vld [vmem:[%s5 + $0x3c] sm:$0xf]
        %v2563 = vld [vmem:[%s5 + $0x40] sm:$0xf]
        %v2564 = vld [vmem:[%s5 + $0x44] sm:$0xf]
        %v2565 = vld [vmem:[%s5 + $0x48] sm:$0xf]
        %v2566 = vld [vmem:[%s5 + $0x4c] sm:$0xf]
        %v2567 = vld [vmem:[%s5 + $0x50] sm:$0xf]
        %v2568 = vld [vmem:[%s5 + $0x54] sm:$0xf]
        %v2569 = vld [vmem:[%s5 + $0x58] sm:$0xf]
        %v2570 = vld [vmem:[%s5 + $0x5c] sm:$0xf]
        %v2571 = vld [vmem:[%s5 + $0x60] sm:$0xf]
        %v2572 = vld [vmem:[%s5 + $0x64] sm:$0xf]
        %v2573 = vld [vmem:[%s5 + $0x68] sm:$0xf]
        %v2574 = vld [vmem:[%s5 + $0x6c] sm:$0xf]
        %v2575 = vld [vmem:[%s5 + $0x70] sm:$0xf]
        %v2576 = vld [vmem:[%s5 + $0x74] sm:$0xf]
        %v2577 = vld [vmem:[%s5 + $0x78] sm:$0xf]
        %v2578 = vld [vmem:[%s5 + $0x7c] sm:$0xf]
        %v2579 = vld [vmem:[%s5 + $0x80] sm:$0xf]
        %v2580 = vld [vmem:[%s5 + $0x84] sm:$0xf]
        %v2581 = vld [vmem:[%s5 + $0x88] sm:$0xf]
        %v2582 = vld [vmem:[%s5 + $0x8c] sm:$0xf]
        %v2583 = vld [vmem:[%s5 + $0x90] sm:$0xf]
        %v2584 = vld [vmem:[%s5 + $0x94] sm:$0xf]
        %v2585 = vld [vmem:[%s5 + $0x98] sm:$0xf]
        %v2586 = vld [vmem:[%s5 + $0x9c] sm:$0xf]
        %v2587 = vld [vmem:[%s5 + $0xa0] sm:$0xf]
        %v2588 = vld [vmem:[%s5 + $0xa4] sm:$0xf]
        %v2589 = vld [vmem:[%s5 + $0xa8] sm:$0xf]
        %v2590 = vld [vmem:[%s5 + $0xac] sm:$0xf]
        %v2591 = vld [vmem:[%s5 + $0xb0] sm:$0xf]
        %v2592 = vld [vmem:[%s6] sm:$0x1]
        %v2594 = vperm.slane %v2592, 0
        %v2596 = vpack.c.b16 %v2526, %v2523
        %v2597 = vpack.c.b16 %v2527, %v2524
        %v2598 = vpack.c.b16 %v2528, %v2525
        %v2599 = vpack.c.b16 %v2532, %v2529
        %v2600 = vpack.c.b16 %v2533, %v2530
        %v2601 = vpack.c.b16 %v2534, %v2531
        %v2602 = vpack.c.b16 %v2538, %v2535
        %v2603 = vpack.c.b16 %v2539, %v2536
        %v2604 = vpack.c.b16 %v2540, %v2537
        %v2605 = vpack.c.b16 %v2544, %v2541
        %v2606 = vpack.c.b16 %v2545, %v2542
        %v2607 = vpack.c.b16 %v2546, %v2543
        %v2661 = vunpack.c.l.b16 %v2547
        %v2662 = vunpack.c.l.b16 %v2548
        %v2663 = vunpack.c.l.b16 %v2549
        %v2664 = vunpack.c.l.b16 %v2550
        %v2665 = vunpack.c.l.b16 %v2551
        %v2666 = vunpack.c.l.b16 %v2552
        %v2667 = vunpack.c.l.b16 %v2553
        %v2668 = vunpack.c.l.b16 %v2554
        %v2669 = vunpack.c.l.b16 %v2555
        %v2670 = vunpack.c.l.b16 %v2556
        %v2671 = vunpack.c.l.b16 %v2557
        %v2672 = vunpack.c.l.b16 %v2558
        %v2673 = vunpack.c.l.b16 %v2559
        %v2674 = vunpack.c.l.b16 %v2560
        %v2675 = vunpack.c.l.b16 %v2561
        %v2676 = vunpack.c.l.b16 %v2562
        %v2677 = vunpack.c.l.b16 %v2563
        %v2678 = vunpack.c.l.b16 %v2564
        %v2679 = vunpack.c.l.b16 %v2565
        %v2680 = vunpack.c.l.b16 %v2566
        %v2681 = vunpack.c.l.b16 %v2567
        %v2682 = vunpack.c.l.b16 %v2568
        %v2683 = vunpack.c.l.b16 %v2569
        %v2684 = vunpack.c.l.b16 %v2570
        %v2685 = vunpack.c.l.b16 %v2571
        %v2686 = vunpack.c.l.b16 %v2572
        %v2687 = vunpack.c.l.b16 %v2573
        %v2688 = vunpack.c.l.b16 %v2574
        %v2689 = vunpack.c.l.b16 %v2575
        %v2690 = vunpack.c.l.b16 %v2576
        %v2691 = vunpack.c.l.b16 %v2577
        %v2692 = vunpack.c.l.b16 %v2578
        %v2693 = vunpack.c.l.b16 %v2579
        %v2694 = vunpack.c.l.b16 %v2580
        %v2695 = vunpack.c.l.b16 %v2581
        %v2696 = vunpack.c.l.b16 %v2582
        %v2697 = vunpack.c.l.b16 %v2583
        %v2698 = vunpack.c.l.b16 %v2584
        %v2699 = vunpack.c.l.b16 %v2585
        %v2700 = vunpack.c.l.b16 %v2586
        %v2701 = vunpack.c.l.b16 %v2587
        %v2702 = vunpack.c.l.b16 %v2588
        %v2703 = vunpack.c.l.b16 %v2589
        %v2704 = vunpack.c.l.b16 %v2590
        %v2705 = vunpack.c.l.b16 %v2591
        %v2706 = vpack.c.b16 %v2662, %v2661
        %v2707 = vpack.c.b16 %v2664, %v2663
        %v2708 = vpack.c.b16 %v2666, %v2665
        %v2709 = vpack.c.b16 %v2668, %v2667
        %v2710 = vpack.c.b16 %v2670, %v2669
        %v2711 = vpack.c.b16 %v2672, %v2671
        %v2712 = vpack.c.b16 %v2674, %v2673
        %v2713 = vpack.c.b16 %v2676, %v2675
        %v2714 = vpack.c.b16 %v2678, %v2677
        %v2715 = vpack.c.b16 %v2680, %v2679
        %v2716 = vpack.c.b16 %v2682, %v2681
        %v2717 = vpack.c.b16 %v2684, %v2683
        %v2718 = vpack.c.b16 %v2686, %v2685
        %v2719 = vpack.c.b16 %v2688, %v2687
        %v2720 = vpack.c.b16 %v2690, %v2689
        %v2721 = vpack.c.b16 %v2692, %v2691
        %v2722 = vpack.c.b16 %v2694, %v2693
        %v2723 = vpack.c.b16 %v2696, %v2695
        %v2724 = vpack.c.b16 %v2698, %v2697
        %v2725 = vpack.c.b16 %v2700, %v2699
        %v2726 = vpack.c.b16 %v2702, %v2701
        %v2727 = vpack.c.b16 %v2704, %v2703
        %v2728 = vpack.c.b16 %v2705, %v2705
        %vm2751 = vcmask 850944
        %v2753 = vsel %vm2751, %v2598, 0
        %v2756 = vsel %vm2751, %v2601, 0
        %v2759 = vsel %vm2751, %v2604, 0
        %v2762 = vsel %vm2751, %v2607, 0
        %vm2764 = vcmask 1043456
        %v2766 = vsel %vm2764, %v2728, 0
        %2768 = vmatpush.bf16.msra.mxu0 %v2713
        %2769 = vmatpush.bf16.msra.mxu0 %v2712
        %2770 = vmatpush.bf16.msra.mxu0 %v2711
        %2771 = vmatpush.bf16.msra.mxu0 %v2710
        %2772 = vmatpush.bf16.msra.mxu0 %v2709
        %2773 = vmatpush.bf16.msra.mxu0 %v2708
        %2774 = vmatpush.bf16.msra.mxu0 %v2707
        %2775 = vmatpush.bf16.msra.mxu0 %v2706
        %2776 = vmatmul.bf16.gmra.mxu0 %v2596
        %v2777 = vpop.f32.mrf.mxu0
        %v2778 = vadd.f32 %v2594, %v2777
        %v2779 = vpop.f32.mrf.mxu0
        %v2780 = vadd.f32 %v2594, %v2779
        %2781 = vmatmul.bf16.gmra.mxu0 %v2599
        %v2782 = vpop.f32.mrf.mxu0
        %v2783 = vadd.f32 %v2594, %v2782
        %v2784 = vpop.f32.mrf.mxu0
        %v2785 = vadd.f32 %v2594, %v2784
        %2786 = vmatmul.bf16.gmra.mxu0 %v2602
        %v2787 = vpop.f32.mrf.mxu0
        %v2788 = vadd.f32 %v2594, %v2787
        %v2789 = vpop.f32.mrf.mxu0
        %v2790 = vadd.f32 %v2594, %v2789
        %2791 = vmatmul.bf16.gmra.mxu0 %v2605
        %v2792 = vpop.f32.mrf.mxu0
        %v2793 = vadd.f32 %v2594, %v2792
        %v2794 = vpop.f32.mrf.mxu0
        %v2795 = vadd.f32 %v2594, %v2794
        %2796 = vdwg.mxu0
        %2797 = vmatpush.bf16.msra.mxu0 %v2721
        %2798 = vmatpush.bf16.msra.mxu0 %v2720
        %2799 = vmatpush.bf16.msra.mxu0 %v2719
        %2800 = vmatpush.bf16.msra.mxu0 %v2718
        %2801 = vmatpush.bf16.msra.mxu0 %v2717
        %2802 = vmatpush.bf16.msra.mxu0 %v2716
        %2803 = vmatpush.bf16.msra.mxu0 %v2715
        %2804 = vmatpush.bf16.msra.mxu0 %v2714
        %2805 = vmatmul.bf16.gmra.mxu0 %v2597
        %v2806 = vpop.f32.mrf.mxu0
        %v2807 = vadd.f32 %v2778, %v2806
        %v2808 = vpop.f32.mrf.mxu0
        %v2809 = vadd.f32 %v2780, %v2808
        %2810 = vmatmul.bf16.gmra.mxu0 %v2600
        %v2811 = vpop.f32.mrf.mxu0
        %v2812 = vadd.f32 %v2783, %v2811
        %v2813 = vpop.f32.mrf.mxu0
        %v2814 = vadd.f32 %v2785, %v2813
        %2815 = vmatmul.bf16.gmra.mxu0 %v2603
        %v2816 = vpop.f32.mrf.mxu0
        %v2817 = vadd.f32 %v2788, %v2816
        %v2818 = vpop.f32.mrf.mxu0
        %v2819 = vadd.f32 %v2790, %v2818
        %2820 = vmatmul.bf16.gmra.mxu0 %v2606
        %v2821 = vpop.f32.mrf.mxu0
        %v2822 = vadd.f32 %v2793, %v2821
        %v2823 = vpop.f32.mrf.mxu0
        %v2824 = vadd.f32 %v2795, %v2823
        %2825 = vdwg.mxu0
        %2826 = vmatpush.bf16.msra.mxu0 0
        %2827 = vmatpush.bf16.msra.mxu0 %v2766
        %2828 = vmatpush.bf16.msra.mxu0 %v2727
        %2829 = vmatpush.bf16.msra.mxu0 %v2726
        %2830 = vmatpush.bf16.msra.mxu0 %v2725
        %2831 = vmatpush.bf16.msra.mxu0 %v2724
        %2832 = vmatpush.bf16.msra.mxu0 %v2723
        %2833 = vmatpush.bf16.msra.mxu0 %v2722
        %2834 = vmatmul.bf16.gmra.mxu0 %v2753
        %v2835 = vpop.f32.mrf.mxu0
        %v2836 = vadd.f32 %v2807, %v2835
        %v2837 = vpop.f32.mrf.mxu0
        %v2838 = vadd.f32 %v2809, %v2837
        %2839 = vmatmul.bf16.gmra.mxu0 %v2756
        %v2840 = vpop.f32.mrf.mxu0
        %v2841 = vadd.f32 %v2812, %v2840
        %v2842 = vpop.f32.mrf.mxu0
        %v2843 = vadd.f32 %v2814, %v2842
        %2844 = vmatmul.bf16.gmra.mxu0 %v2759
        %v2845 = vpop.f32.mrf.mxu0
        %v2846 = vadd.f32 %v2817, %v2845
        %v2847 = vpop.f32.mrf.mxu0
        %v2848 = vadd.f32 %v2819, %v2847
        %2849 = vmatmul.bf16.gmra.mxu0 %v2762
        %v2850 = vpop.f32.mrf.mxu0
        %v2851 = vadd.f32 %v2822, %v2850
        %v2852 = vpop.f32.mrf.mxu0
        %v2853 = vadd.f32 %v2824, %v2852
        %2854 = vdwg.mxu0
        %v2855 = vmax.f32 %v2836, 0.0
        %v2856 = vmax.f32 %v2838, 0.0
        %v2857 = vmax.f32 %v2841, 0.0
        %v2858 = vmax.f32 %v2843, 0.0
        %v2859 = vmax.f32 %v2846, 0.0
        %v2860 = vmax.f32 %v2848, 0.0
        %v2861 = vmax.f32 %v2851, 0.0
        %v2862 = vmax.f32 %v2853, 0.0
        %v2863 = vpack.c.bf16 %v2856, %v2855
        %v2864 = vpack.c.bf16 %v2858, %v2857
        %v2865 = vpack.c.bf16 %v2860, %v2859
        %v2866 = vpack.c.bf16 %v2862, %v2861
        %v2867 = vld [vmem:[%s7] sm:$0xf]
        %v2868 = vld [vmem:[%s7 + $0x4] sm:$0xf]
        %v2869 = vld [vmem:[%s7 + $0x8] sm:$0xf]
        %v2870 = vld [vmem:[%s7 + $0xc] sm:$0xf]
        %v2871 = vld [vmem:[%s7 + $0x10] sm:$0xf]
        %v2872 = vld [vmem:[%s7 + $0x14] sm:$0xf]
        %v2873 = vld [vmem:[%s7 + $0x18] sm:$0xf]
        %v2874 = vld [vmem:[%s7 + $0x1c] sm:$0xf]
        %v2875 = vld [vmem:[%s7 + $0x20] sm:$0xf]
        %v2876 = vld [vmem:[%s7 + $0x24] sm:$0xf]
        %v2877 = vld [vmem:[%s7 + $0x28] sm:$0xf]
        %v2878 = vld [vmem:[%s7 + $0x2c] sm:$0xf]
        %v2879 = vld [vmem:[%s7 + $0x30] sm:$0xf]
        %v2880 = vld [vmem:[%s7 + $0x34] sm:$0xf]
        %v2881 = vld [vmem:[%s7 + $0x38] sm:$0xf]
        %v2882 = vld [vmem:[%s7 + $0x3c] sm:$0xf]
        %v2899 = vunpack.c.l.b16 %v2867
        %v2900 = vunpack.c.l.b16 %v2868
        %v2901 = vunpack.c.l.b16 %v2869
        %v2902 = vunpack.c.l.b16 %v2870
        %v2903 = vunpack.c.l.b16 %v2871
        %v2904 = vunpack.c.l.b16 %v2872
        %v2905 = vunpack.c.l.b16 %v2873
        %v2906 = vunpack.c.l.b16 %v2874
        %v2907 = vunpack.c.l.b16 %v2875
        %v2908 = vunpack.c.l.b16 %v2876
        %v2909 = vunpack.c.l.b16 %v2877
        %v2910 = vunpack.c.l.b16 %v2878
        %v2911 = vunpack.c.l.b16 %v2879
        %v2912 = vunpack.c.l.b16 %v2880
        %v2913 = vunpack.c.l.b16 %v2881
        %v2914 = vunpack.c.l.b16 %v2882
        %v2915 = vpack.c.b16 %v2900, %v2899
        %v2916 = vpack.c.b16 %v2902, %v2901
        %v2917 = vpack.c.b16 %v2904, %v2903
        %v2918 = vpack.c.b16 %v2906, %v2905
        %v2919 = vpack.c.b16 %v2908, %v2907
        %v2920 = vpack.c.b16 %v2910, %v2909
        %v2921 = vpack.c.b16 %v2912, %v2911
        %v2922 = vpack.c.b16 %v2914, %v2913
        %2931 = vmatpush.bf16.msra.mxu0 %v2922
        %2932 = vmatpush.bf16.msra.mxu0 %v2921
        %2933 = vmatpush.bf16.msra.mxu0 %v2920
        %2934 = vmatpush.bf16.msra.mxu0 %v2919
        %2935 = vmatpush.bf16.msra.mxu0 %v2918
        %2936 = vmatpush.bf16.msra.mxu0 %v2917
        %2937 = vmatpush.bf16.msra.mxu0 %v2916
        %2938 = vmatpush.bf16.msra.mxu0 %v2915
        %2939 = vmatmul.bf16.gmra.mxu0 %v2863
        %v2940 = vpop.f32.mrf.mxu0
        %v2941 = vadd.f32 0.0, %v2940
        %v2942 = vpop.f32.mrf.mxu0
        %v2943 = vadd.f32 0.0, %v2942
        %2944 = vmatmul.bf16.gmra.mxu0 %v2864
        %v2945 = vpop.f32.mrf.mxu0
        %v2946 = vadd.f32 0.0, %v2945
        %v2947 = vpop.f32.mrf.mxu0
        %v2948 = vadd.f32 0.0, %v2947
        %2949 = vmatmul.bf16.gmra.mxu0 %v2865
        %v2950 = vpop.f32.mrf.mxu0
        %v2951 = vadd.f32 0.0, %v2950
        %v2952 = vpop.f32.mrf.mxu0
        %v2953 = vadd.f32 0.0, %v2952
        %2954 = vmatmul.bf16.gmra.mxu0 %v2866
        %v2955 = vpop.f32.mrf.mxu0
        %v2956 = vadd.f32 0.0, %v2955
        %v2957 = vpop.f32.mrf.mxu0
        %v2958 = vadd.f32 0.0, %v2957
        %2959 = vdwg.mxu0
        %v2960 = vld [vmem:[%s8] sm:$0xf]
        %v2961 = vld [vmem:[%s8 + $0x4] sm:$0xf]
        %v2962 = vld [vmem:[%s8 + $0x8] sm:$0xf]
        %v2963 = vld [vmem:[%s8 + $0xc] sm:$0xf]
        %v2964 = vld [vmem:[%s8 + $0x10] sm:$0xf]
        %v2965 = vld [vmem:[%s8 + $0x14] sm:$0xf]
        %v2966 = vld [vmem:[%s8 + $0x18] sm:$0xf]
        %v2967 = vld [vmem:[%s8 + $0x1c] sm:$0xf]
        %v2968 = vld [vmem:[%s8 + $0x20] sm:$0xf]
        %v2969 = vld [vmem:[%s8 + $0x24] sm:$0xf]
        %v2970 = vld [vmem:[%s8 + $0x28] sm:$0xf]
        %v2971 = vld [vmem:[%s8 + $0x2c] sm:$0xf]
        %v2972 = vld [vmem:[%s8 + $0x30] sm:$0xf]
        %v2973 = vld [vmem:[%s8 + $0x34] sm:$0xf]
        %v2974 = vld [vmem:[%s8 + $0x38] sm:$0xf]
        %v2975 = vld [vmem:[%s8 + $0x3c] sm:$0xf]
        %v2992 = vunpack.c.l.b16 %v2960
        %v2993 = vunpack.c.l.b16 %v2961
        %v2994 = vunpack.c.l.b16 %v2962
        %v2995 = vunpack.c.l.b16 %v2963
        %v2996 = vunpack.c.l.b16 %v2964
        %v2997 = vunpack.c.l.b16 %v2965
        %v2998 = vunpack.c.l.b16 %v2966
        %v2999 = vunpack.c.l.b16 %v2967
        %v3000 = vunpack.c.l.b16 %v2968
        %v3001 = vunpack.c.l.b16 %v2969
        %v3002 = vunpack.c.l.b16 %v2970
        %v3003 = vunpack.c.l.b16 %v2971
        %v3004 = vunpack.c.l.b16 %v2972
        %v3005 = vunpack.c.l.b16 %v2973
        %v3006 = vunpack.c.l.b16 %v2974
        %v3007 = vunpack.c.l.b16 %v2975
        %v3008 = vpack.c.b16 %v2993, %v2992
        %v3009 = vpack.c.b16 %v2995, %v2994
        %v3010 = vpack.c.b16 %v2997, %v2996
        %v3011 = vpack.c.b16 %v2999, %v2998
        %v3012 = vpack.c.b16 %v3001, %v3000
        %v3013 = vpack.c.b16 %v3003, %v3002
        %v3014 = vpack.c.b16 %v3005, %v3004
        %v3015 = vpack.c.b16 %v3007, %v3006
        %3024 = vmatpush.bf16.msra.mxu0 %v3015
        %3025 = vmatpush.bf16.msra.mxu0 %v3014
        %3026 = vmatpush.bf16.msra.mxu0 %v3013
        %3027 = vmatpush.bf16.msra.mxu0 %v3012
        %3028 = vmatpush.bf16.msra.mxu0 %v3011
        %3029 = vmatpush.bf16.msra.mxu0 %v3010
        %3030 = vmatpush.bf16.msra.mxu0 %v3009
        %3031 = vmatpush.bf16.msra.mxu0 %v3008
        %3032 = vmatmul.bf16.gmra.mxu0 %v2863
        %v3033 = vpop.f32.mrf.mxu0
        %v3034 = vadd.f32 0.0, %v3033
        %v3035 = vpop.f32.mrf.mxu0
        %v3036 = vadd.f32 0.0, %v3035
        %3037 = vmatmul.bf16.gmra.mxu0 %v2864
        %v3038 = vpop.f32.mrf.mxu0
        %v3039 = vadd.f32 0.0, %v3038
        %v3040 = vpop.f32.mrf.mxu0
        %v3041 = vadd.f32 0.0, %v3040
        %3042 = vmatmul.bf16.gmra.mxu0 %v2865
        %v3043 = vpop.f32.mrf.mxu0
        %v3044 = vadd.f32 0.0, %v3043
        %v3045 = vpop.f32.mrf.mxu0
        %v3046 = vadd.f32 0.0, %v3045
        %3047 = vmatmul.bf16.gmra.mxu0 %v2866
        %v3048 = vpop.f32.mrf.mxu0
        %v3049 = vadd.f32 0.0, %v3048
        %v3050 = vpop.f32.mrf.mxu0
        %v3051 = vadd.f32 0.0, %v3050
        %3052 = vdwg.mxu0
        %v3053 = vmax.f32 %v2941, %v3034
        %v3054 = vmax.f32 %v2943, %v3036
        %v3055 = vmax.f32 %v2946, %v3039
        %v3056 = vmax.f32 %v2948, %v3041
        %v3057 = vmax.f32 %v2951, %v3044
        %v3058 = vmax.f32 %v2953, %v3046
        %v3059 = vmax.f32 %v2956, %v3049
        %v3060 = vmax.f32 %v2958, %v3051
        %vm3061 = vcmask 523264
        %v3062 = vsel %vm3061, %v3053, -inf
        %v3063 = vsel %vm3061, %v3054, -inf
        %v3064 = vmax.f32 %v3062, %v3063
        %v3065 = vsel %vm3061, %v3055, -inf
        %v3066 = vsel %vm3061, %v3056, -inf
        %v3067 = vmax.f32 %v3065, %v3066
        %v3068 = vsel %vm3061, %v3057, -inf
        %v3069 = vsel %vm3061, %v3058, -inf
        %v3070 = vmax.f32 %v3068, %v3069
        %v3071 = vsel %vm3061, %v3059, -inf
        %v3072 = vsel %vm3061, %v3060, -inf
        %v3073 = vmax.f32 %v3071, %v3072
        %3075 = vrot.lane.b32.xlu0 %v3067, 64
        %v3076 = vpop.permute.xlu0 %3075
        %3079 = vrot.lane.b32.xlu0 %v3073, 64
        %v3080 = vpop.permute.xlu0 %3079
        %v3082 = vsel %vm3061, %v3064, %v3076
        %v3083 = vsel %vm3061, %v3070, %v3080
        %v3084 = vpack.c.bf16 %v3082, %v3082
        %v3085 = vpack.c.bf16 %v3083, %v3083
        %v3086 = vld [vmem:[%s9] sm:$0xf]
        %v3087 = vld [vmem:[%s9 + $0x4] sm:$0xf]
        %v3088 = vld [vmem:[%s9 + $0x8] sm:$0xf]
        %v3089 = vld [vmem:[%s9 + $0xc] sm:$0xf]
        %v3090 = vld [vmem:[%s9 + $0x10] sm:$0xf]
        %v3091 = vld [vmem:[%s9 + $0x14] sm:$0xf]
        %v3092 = vld [vmem:[%s9 + $0x18] sm:$0xf]
        %v3093 = vld [vmem:[%s9 + $0x1c] sm:$0xf]
        %v3094 = vld [vmem:[%s9 + $0x20] sm:$0xf]
        %v3095 = vld [vmem:[%s9 + $0x24] sm:$0xf]
        %v3096 = vld [vmem:[%s9 + $0x28] sm:$0xf]
        %v3097 = vld [vmem:[%s9 + $0x2c] sm:$0xf]
        %v3098 = vld [vmem:[%s9 + $0x30] sm:$0xf]
        %v3099 = vld [vmem:[%s9 + $0x34] sm:$0xf]
        %v3100 = vld [vmem:[%s9 + $0x38] sm:$0xf]
        %v3101 = vld [vmem:[%s9 + $0x3c] sm:$0xf]
        %v3102 = vld [vmem:[%s9 + $0x40] sm:$0xf]
        %v3103 = vld [vmem:[%s9 + $0x44] sm:$0xf]
        %v3104 = vld [vmem:[%s9 + $0x48] sm:$0xf]
        %v3105 = vld [vmem:[%s9 + $0x4c] sm:$0xf]
        %v3106 = vld [vmem:[%s9 + $0x50] sm:$0xf]
        %v3107 = vld [vmem:[%s9 + $0x54] sm:$0xf]
        %v3108 = vld [vmem:[%s9 + $0x58] sm:$0xf]
        %v3109 = vld [vmem:[%s9 + $0x5c] sm:$0xf]
        %v3110 = vld [vmem:[%s9 + $0x60] sm:$0xf]
        %v3111 = vld [vmem:[%s9 + $0x64] sm:$0xf]
        %v3112 = vld [vmem:[%s9 + $0x68] sm:$0xf]
        %v3113 = vld [vmem:[%s9 + $0x6c] sm:$0xf]
        %v3114 = vld [vmem:[%s9 + $0x70] sm:$0xf]
        %v3115 = vld [vmem:[%s9 + $0x74] sm:$0xf]
        %v3116 = vld [vmem:[%s9 + $0x78] sm:$0xf]
        %v3117 = vld [vmem:[%s9 + $0x7c] sm:$0xf]
        %v3118 = vld [vmem:[%s10] sm:$0x1]
        %v3120 = vperm.slane %v3118, 0
        %v3154 = vunpack.c.l.b16 %v3086
        %v3155 = vunpack.c.l.b16 %v3087
        %v3156 = vunpack.c.l.b16 %v3088
        %v3157 = vunpack.c.l.b16 %v3089
        %v3158 = vunpack.c.l.b16 %v3090
        %v3159 = vunpack.c.l.b16 %v3091
        %v3160 = vunpack.c.l.b16 %v3092
        %v3161 = vunpack.c.l.b16 %v3093
        %v3162 = vunpack.c.l.b16 %v3094
        %v3163 = vunpack.c.l.b16 %v3095
        %v3164 = vunpack.c.l.b16 %v3096
        %v3165 = vunpack.c.l.b16 %v3097
        %v3166 = vunpack.c.l.b16 %v3098
        %v3167 = vunpack.c.l.b16 %v3099
        %v3168 = vunpack.c.l.b16 %v3100
        %v3169 = vunpack.c.l.b16 %v3101
        %v3170 = vunpack.c.l.b16 %v3102
        %v3171 = vunpack.c.l.b16 %v3103
        %v3172 = vunpack.c.l.b16 %v3104
        %v3173 = vunpack.c.l.b16 %v3105
        %v3174 = vunpack.c.l.b16 %v3106
        %v3175 = vunpack.c.l.b16 %v3107
        %v3176 = vunpack.c.l.b16 %v3108
        %v3177 = vunpack.c.l.b16 %v3109
        %v3178 = vunpack.c.l.b16 %v3110
        %v3179 = vunpack.c.l.b16 %v3111
        %v3180 = vunpack.c.l.b16 %v3112
        %v3181 = vunpack.c.l.b16 %v3113
        %v3182 = vunpack.c.l.b16 %v3114
        %v3183 = vunpack.c.l.b16 %v3115
        %v3184 = vunpack.c.l.b16 %v3116
        %v3185 = vunpack.c.l.b16 %v3117
        %v3186 = vpack.c.b16 %v3155, %v3154
        %v3187 = vpack.c.b16 %v3157, %v3156
        %v3188 = vpack.c.b16 %v3159, %v3158
        %v3189 = vpack.c.b16 %v3161, %v3160
        %v3190 = vpack.c.b16 %v3163, %v3162
        %v3191 = vpack.c.b16 %v3165, %v3164
        %v3192 = vpack.c.b16 %v3167, %v3166
        %v3193 = vpack.c.b16 %v3169, %v3168
        %v3194 = vpack.c.b16 %v3171, %v3170
        %v3195 = vpack.c.b16 %v3173, %v3172
        %v3196 = vpack.c.b16 %v3175, %v3174
        %v3197 = vpack.c.b16 %v3177, %v3176
        %v3198 = vpack.c.b16 %v3179, %v3178
        %v3199 = vpack.c.b16 %v3181, %v3180
        %v3200 = vpack.c.b16 %v3183, %v3182
        %v3201 = vpack.c.b16 %v3185, %v3184
        %3218 = vmatpush.bf16.msra.mxu0 %v3193
        %3219 = vmatpush.bf16.msra.mxu0 %v3192
        %3220 = vmatpush.bf16.msra.mxu0 %v3191
        %3221 = vmatpush.bf16.msra.mxu0 %v3190
        %3222 = vmatpush.bf16.msra.mxu0 %v3189
        %3223 = vmatpush.bf16.msra.mxu0 %v3188
        %3224 = vmatpush.bf16.msra.mxu0 %v3187
        %3225 = vmatpush.bf16.msra.mxu0 %v3186
        %3226 = vmatmul.bf16.gmra.mxu0 %v3084
        %v3227 = vpop.f32.mrf.mxu0
        %v3228 = vadd.f32 %v3120, %v3227
        %v3229 = vpop.f32.mrf.mxu0
        %3230 = vdwg.mxu0
        %3231 = vmatpush.bf16.msra.mxu0 %v3201
        %3232 = vmatpush.bf16.msra.mxu0 %v3200
        %3233 = vmatpush.bf16.msra.mxu0 %v3199
        %3234 = vmatpush.bf16.msra.mxu0 %v3198
        %3235 = vmatpush.bf16.msra.mxu0 %v3197
        %3236 = vmatpush.bf16.msra.mxu0 %v3196
        %3237 = vmatpush.bf16.msra.mxu0 %v3195
        %3238 = vmatpush.bf16.msra.mxu0 %v3194
        %3239 = vmatmul.bf16.gmra.mxu0 %v3085
        %v3240 = vpop.f32.mrf.mxu0
        %v3241 = vadd.f32 %v3228, %v3240
        %v3242 = vpop.f32.mrf.mxu0
        %3243 = vdwg.mxu0
        %v3244 = vmax.f32 %v3241, 0.0
        %v3245 = vpack.c.bf16 %v3244, %v3244
        %v3246 = vld [vmem:[%s11] sm:$0xf]
        %v3247 = vld [vmem:[%s11 + $0x4] sm:$0xf]
        %v3248 = vld [vmem:[%s11 + $0x8] sm:$0xf]
        %v3249 = vld [vmem:[%s11 + $0xc] sm:$0xf]
        %v3250 = vld [vmem:[%s11 + $0x10] sm:$0xf]
        %v3251 = vld [vmem:[%s11 + $0x14] sm:$0xf]
        %v3252 = vld [vmem:[%s11 + $0x18] sm:$0xf]
        %v3253 = vld [vmem:[%s11 + $0x1c] sm:$0xf]
        %v3254 = vld [vmem:[%s11 + $0x20] sm:$0xf]
        %v3255 = vld [vmem:[%s11 + $0x24] sm:$0xf]
        %v3256 = vld [vmem:[%s11 + $0x28] sm:$0xf]
        %v3257 = vld [vmem:[%s11 + $0x2c] sm:$0xf]
        %v3258 = vld [vmem:[%s11 + $0x30] sm:$0xf]
        %v3259 = vld [vmem:[%s11 + $0x34] sm:$0xf]
        %v3260 = vld [vmem:[%s11 + $0x38] sm:$0xf]
        %v3261 = vld [vmem:[%s12] sm:$0x1]
        %v3263 = vperm.slane %v3261, 0
        %v3280 = vunpack.c.l.b16 %v3246
        %v3281 = vunpack.c.l.b16 %v3247
        %v3282 = vunpack.c.l.b16 %v3248
        %v3283 = vunpack.c.l.b16 %v3249
        %v3284 = vunpack.c.l.b16 %v3250
        %v3285 = vunpack.c.l.b16 %v3251
        %v3286 = vunpack.c.l.b16 %v3252
        %v3287 = vunpack.c.l.b16 %v3253
        %v3288 = vunpack.c.l.b16 %v3254
        %v3289 = vunpack.c.l.b16 %v3255
        %v3290 = vunpack.c.l.b16 %v3256
        %v3291 = vunpack.c.l.b16 %v3257
        %v3292 = vunpack.c.l.b16 %v3258
        %v3293 = vunpack.c.l.b16 %v3259
        %v3294 = vunpack.c.l.b16 %v3260
        %v3295 = vpack.c.b16 %v3281, %v3280
        %v3296 = vpack.c.b16 %v3283, %v3282
        %v3297 = vpack.c.b16 %v3285, %v3284
        %v3298 = vpack.c.b16 %v3287, %v3286
        %v3299 = vpack.c.b16 %v3289, %v3288
        %v3300 = vpack.c.b16 %v3291, %v3290
        %v3301 = vpack.c.b16 %v3293, %v3292
        %v3302 = vpack.c.b16 %v3294, %v3294
        %vm3310 = vcmask 982016
        %v3312 = vsel %vm3310, %v3245, 0
        %v3315 = vsel %vm2764, %v3302, 0
        %3317 = vmatpush.bf16.msra.mxu0 %v3315
        %3318 = vmatpush.bf16.msra.mxu0 %v3301
        %3319 = vmatpush.bf16.msra.mxu0 %v3300
        %3320 = vmatpush.bf16.msra.mxu0 %v3299
        %3321 = vmatpush.bf16.msra.mxu0 %v3298
        %3322 = vmatpush.bf16.msra.mxu0 %v3297
        %3323 = vmatpush.bf16.msra.mxu0 %v3296
        %3324 = vmatpush.bf16.msra.mxu0 %v3295
        %3325 = vmatmul.bf16.gmra.mxu0 %v3312
        %v3326 = vpop.f32.mrf.mxu0
        %v3327 = vadd.f32 %v3263, %v3326
        %v3328 = vpop.f32.mrf.mxu0
        %3329 = vdwg.mxu0
        %v3330 = vmax.f32 %v3327, 0.0
        %v3331 = vpack.c.bf16 %v3330, %v3330
        %v3332 = vld [vmem:[%s13] sm:$0xf]
        %v3333 = vld [vmem:[%s13 + $0x4] sm:$0xf]
        %v3334 = vld [vmem:[%s13 + $0x8] sm:$0xf]
        %v3335 = vld [vmem:[%s13 + $0xc] sm:$0xf]
        %v3336 = vld [vmem:[%s13 + $0x10] sm:$0xf]
        %v3337 = vld [vmem:[%s13 + $0x14] sm:$0xf]
        %v3338 = vld [vmem:[%s13 + $0x18] sm:$0xf]
        %v3339 = vld [vmem:[%s13 + $0x1c] sm:$0xf]
        %v3340 = vld [vmem:[%s13 + $0x20] sm:$0xf]
        %v3341 = vld [vmem:[%s13 + $0x24] sm:$0xf]
        %v3342 = vld [vmem:[%s13 + $0x28] sm:$0x3]
        %v3343 = vld [vmem:[%s14] sm:$0x1]
        %v3345 = vperm.slane %v3343, 0
        %v3358 = vunpack.c.l.b16 %v3332
        %v3359 = vunpack.c.l.b16 %v3333
        %v3360 = vunpack.c.l.b16 %v3334
        %v3361 = vunpack.c.l.b16 %v3335
        %v3362 = vunpack.c.l.b16 %v3336
        %v3363 = vunpack.c.l.b16 %v3337
        %v3364 = vunpack.c.l.b16 %v3338
        %v3365 = vunpack.c.l.b16 %v3339
        %v3366 = vunpack.c.l.b16 %v3340
        %v3367 = vunpack.c.l.b16 %v3341
        %v3368 = vunpack.c.l.b16 %v3342
        %v3369 = vpack.c.b16 %v3359, %v3358
        %v3370 = vpack.c.b16 %v3361, %v3360
        %v3371 = vpack.c.b16 %v3363, %v3362
        %v3372 = vpack.c.b16 %v3365, %v3364
        %v3373 = vpack.c.b16 %v3367, %v3366
        %v3374 = vpack.c.b16 %v3368, %v3368
        %v3381 = vsel %vm1088, %v3331, 0
        %vm3383 = vcmask 1041408
        %v3385 = vsel %vm3383, %v3374, 0
        %3387 = vmatpush.bf16.msra.mxu0 0
        %3388 = vmatpush.bf16.msra.mxu0 0
        %3389 = vmatpush.bf16.msra.mxu0 %v3385
        %3390 = vmatpush.bf16.msra.mxu0 %v3373
        %3391 = vmatpush.bf16.msra.mxu0 %v3372
        %3392 = vmatpush.bf16.msra.mxu0 %v3371
        %3393 = vmatpush.bf16.msra.mxu0 %v3370
        %3394 = vmatpush.bf16.msra.mxu0 %v3369
        %3395 = vmatmul.bf16.gmra.mxu0 %v3381
        %v3396 = vpop.f32.mrf.mxu0
        %v3397 = vadd.f32 %v3345, %v3396
        %v3398 = vpop.f32.mrf.mxu0
        %3399 = vdwg.mxu0
        %v3400 = vlaneseq
        %v3401 = vand.u32 %v3400, 127
        %vm3402 = vcmp.lt.s32.totalorder %v3401, 10
        %v3403 = vsel %vm3402, %v3397, -1e+30
        %3404 = vmax.xlane.f32.xlu0 %v3403
        %v3405 = vpop.xlane.xlu0 %3404
        %v3406 = vsub.f32 %v3403, %v3405
        %v3407 = vmul.f32 %v3406, 1.442695
        %v3408 = vpow.pop %v3407
        %3409 = vadd.xlane.f32.xlu0 %v3408
        %v3410 = vpop.xlane.xlu0 %3409
        %v3411 = vrcp.pop %v3410
        %v3412 = vmul.f32 %v3410, %v3411
        %v3413 = vsub.f32 1.0, %v3412
        %v3414 = vmul.f32 %v3411, %v3413
        %v3415 = vadd.f32 %v3411, %v3414
        %vm3416 = vweird.f32 %v3410
        %vm3417 = vweird.f32 %v3411
        %vm3418 = vmor %vm3416, %vm3417
        %v3419 = vsel %vm3418, %v3411, %v3415
        %v3420 = vand.u32 2147483647, %v3410
        %vm3421 = vcmp.eq.f32.partialorder %v3420, 8.507059e+37
        %v3422 = vand.u32 %v3410, 2147483648
        %v3423 = vor.u32 1.1754944e-38, %v3422
        %v3424 = vsel %vm3421, %v3423, %v3419
        %v3425 = vmul.f32 %v3408, %v3424
        %3426 = vst [vmem:[%s635] sm:$0xff] %v3425
        %s3427 = sand.u32 %s357, 1
        %s3428 = scalar_lea.sflag [#allocation4], %s3427
        %s3429 = sand.u32 %s357, 1
        %s3430 = smul.addr %s3429, 8
        %s3431 = scalar_lea.vmem [#allocation3], %s3430
        // Predicated region
        $region119: #{convnet_forward.1} parent=113 // pred_check
          %p3432 = pneg %p367
        $region120: #{convnet_forward.1} parent=113 // pred_check_branch
          %3434 = sbr.rel (%p3432) target = $region122
        $region121: #{convnet_forward.1} parent=113 // pred_region
          %3436 = vsyncadd %s3428, 0
          %s3437 = smul.addr %s29, 8
          %s3438 = scalar_lea.hbm %s15, %s3437
          %s3440 = sshll.u32 %s3431, 4
          %s3441 = int_to_ptr.vmem [resolvable:$true] %s3440
          %s3442 = sshll.u32 %s3438, 4
          %s3443 = int_to_ptr.hbm [resolvable:$true] %s3442
          %3445 = dma.vmem_to_hbm [thread:$0]  %s3441, 128, %s3443, %s3428
        $region122: #{convnet_forward.1} parent=113 // pred_fallthru
          _
      $region114: #{convnet_forward.1} parent=5 // pred_fallthru
        _
      %p3446 = scmp.le.s32.totalorder 2, %s24
      // Predicated region
      $region123: #{convnet_forward.1} parent=5 // pred_check
        %p3447 = pneg %p3446
      $region124: #{convnet_forward.1} parent=5 // pred_check_branch
        %3449 = sbr.rel (%p3447) target = $region126
      $region125: #{convnet_forward.1} parent=5 // pred_region
        %s3450 = ssub.s32 %s24, 2
        // Predicated region
        $region127: #{convnet_forward.1} parent=125 // pred_check
          %p3451 = pneg %p373
        $region128: #{convnet_forward.1} parent=125 // pred_check_branch
          %3453 = sbr.rel (%p3451) target = $region130
        $region129: #{convnet_forward.1} parent=125 // pred_region
          %s3454 = sand.u32 %s358, 1
          %s3455 = scalar_lea.sflag [#allocation4], %s3454
          %s3456 = sand.u32 %s358, 1
          %s3457 = smul.addr %s3456, 8
          %s3458 = scalar_lea.vmem [#allocation3], %s3457
          %3460 = dma.done %s3455, 128
        $region130: #{convnet_forward.1} parent=125 // pred_fallthru
          _
      $region126: #{convnet_forward.1} parent=5 // pred_fallthru
        _
    $region6: #{convnet_forward.1} parent=1 // loop_footer
      %s28 = sadd.s32 1, %s24
    $region7: #{convnet_forward.1} parent=1 // loop_footer_branch
      %23 = sbr.rel target = $region3
    $region8: #{convnet_forward.1} parent=1 // loop_exit
      _
    %3461 = vsyncpa [#allocation4], 1
    %s3462 = scalar_lea.sflag [#allocation4], 1
    %3463 = vsyncpa %s3462, 1

</llo_original>
